<compile_context>
chip_gen: v5e
topology: v5e:2x2
jax: 0.10.0
libtpu: 0.0.40
codegen_flags: <defaults>
</compile_context>

<pallas_src>
import functools

import jax
import jax.numpy as jnp
from jax.experimental import pallas as pl
from jax.experimental.pallas import tpu as pltpu

# ----------------------------- model hyper-params ---------------------------
B = 2            # number of graphs (batch)
P = 16           # points per graph
INPUT_DIM = 3    # input feature dim
CIN_PAD = 8      # zero-padded input channel count (weights padded to match)
K = 4            # k nearest neighbours (includes self, like PyG knn)
NUM_POINTS = 16  # DGCNN(num_points=...)
OUT_DIM = 3      # fixed in the module
BN_EPS = 1e-5
BIG = 1e9        # "infinite" distance used to mask invalid / already-chosen


# ----------------------------- fused Pallas kernel ---------------------------
def dgcnn_fused_kernel(x_ref, mask0_ref, pool_ref,
                       w1_ref, b1_ref, w2_ref, b2_ref,
                       w3_ref, b3_ref, w4_ref, b4_ref,
                       hw1_ref, hb1_ref, hw2_ref, hb2_ref, hw3_ref, hb3_ref,
                       o_ref, *, k):
    """Whole DGCNN forward on VMEM-resident data.

    x_ref     : (N, CIN_PAD)   flattened, zero-padded node features (N = B*P)
    mask0_ref : (N, N)         +BIG on cross-graph entries AND on the diagonal
                               (self neighbour is handled analytically)
    pool_ref  : (B, N)         per-graph mean-pool matrix (1/P on own block)
    wX/bX     : EdgeConv combined weights (Cin, 2*Cout) = [Wt-Wb | Wb] with BN
                folded, and bias (1, Cout)
    hwX/hbX   : head Linear(+BN folded) weights/biases
    o_ref     : (B, NUM_POINTS*OUT_DIM)
    """
    n = x_ref.shape[0]
    # column-index matrix for argmin tie-breaking, generated in-kernel (no DMA)
    col_idx = jax.lax.broadcasted_iota(jnp.int32, (n, n), 1).astype(jnp.float32)
    mask0 = mask0_ref[...]                                        # (N, N)

    def knn_onehots(x):
        # Row-relative squared distances: within a row the constant ||x_i||^2
        # term does not change the argmin ordering, so it is dropped.
        sq_t = jnp.sum(x * x, axis=1, keepdims=True).T            # (1, N)
        d = sq_t - 2.0 * jnp.dot(x, x.T,
                                 preferred_element_type=jnp.float32)
        d = d + mask0                        # self + cross-graph -> +BIG
        chosen = jnp.zeros_like(d)
        ohs = []
        for _ in range(k - 1):               # self neighbour handled outside
            dm = d + chosen * BIG            # mask already-picked neighbours
            row_min = jnp.min(dm, axis=1, keepdims=True)          # (N, 1)
            cand = jnp.where(dm <= row_min, col_idx, float(n))    # ties -> lowest idx
            idx = jnp.min(cand, axis=1, keepdims=True)            # (N, 1)
            oh = (col_idx == idx).astype(jnp.float32)             # (N, N) one-hot
            ohs.append(oh)
            chosen = chosen + oh
        return ohs

    def edge_conv(x, w_ref, b_ref):
        cout = b_ref.shape[1]
        ohs = knn_onehots(x)
        # single matmul for the x_i path: x @ [Wt-Wb | Wb]
        xc = jnp.dot(x, w_ref[...], preferred_element_type=jnp.float32)
        base = xc[:, :cout] + b_ref[...]     # x_i @ (Wt - Wb) + b   (k-invariant)
        xb = xc[:, cout:]                    # x @ Wb
        # self neighbour (x_j = x_i) contributes exactly xb
        nmax = xb
        if k > 1:
            # neighbour gather: one stacked one-hot matmul (single RHS push)
            oh_stack = jnp.concatenate(ohs, axis=0)               # ((k-1)*N, N)
            g = jnp.dot(oh_stack, xb, preferred_element_type=jnp.float32)
            for t in range(k - 1):
                nmax = jnp.maximum(nmax, g[t * n:(t + 1) * n, :])
        # max-then-ReLU (valid: ReLU monotone, base independent of neighbour)
        return jnp.maximum(nmax + base, 0.0)

    h = edge_conv(x_ref[...], w1_ref, b1_ref)     # (N, 64)
    h = edge_conv(h, w2_ref, b2_ref)              # (N, 128)
    h = edge_conv(h, w3_ref, b3_ref)              # (N, 256)
    h = edge_conv(h, w4_ref, b4_ref)              # (N, 512)

    # global_mean_pool as a (B, N) @ (N, 512) matmul
    pooled = jnp.dot(pool_ref[...], h, preferred_element_type=jnp.float32)

    h1 = jnp.maximum(
        jnp.dot(pooled, hw1_ref[...], preferred_element_type=jnp.float32)
        + hb1_ref[...], 0.0)                                       # (B, 256)
    h2 = jnp.maximum(
        jnp.dot(h1, hw2_ref[...], preferred_element_type=jnp.float32)
        + hb2_ref[...], 0.0)                                       # (B, 128)
    o_ref[...] = (jnp.dot(h2, hw3_ref[...], preferred_element_type=jnp.float32)
                  + hb3_ref[...])                                  # (B, 48)


# ----------------------------- wrapper ---------------------------------------
def dgcnn_forward(x, params):
    b, p, cin = x.shape
    n = b * p

    # flatten batch into M dimension; zero-pad input channels to CIN_PAD
    x_flat = x.reshape(n, cin).astype(jnp.float32)
    x_pad = jnp.concatenate(
        [x_flat, jnp.zeros((n, CIN_PAD - cin), jnp.float32)], axis=1)

    # small constant helper matrices (constant-folded under jit)
    gid = jnp.arange(n, dtype=jnp.int32) // p
    same = gid[:, None] == gid[None, :]
    eye = jnp.eye(n, dtype=bool)
    # +BIG on cross-graph entries AND the diagonal (self handled analytically)
    mask0 = jnp.where(same & (~eye), 0.0, BIG).astype(jnp.float32)   # (N, N)
    pool = (gid[None, :] == jnp.arange(b, dtype=jnp.int32)[:, None]
            ).astype(jnp.float32) / float(p)                         # (B, N)

    hp = params["head"]
    inputs = [
        x_pad, mask0, pool,
        params["conv1"][0], params["conv1"][1],
        params["conv2"][0], params["conv2"][1],
        params["conv3"][0], params["conv3"][1],
        params["conv4"][0], params["conv4"][1],
        hp["w1"], hp["b1"], hp["w2"], hp["b2"], hp["w3"], hp["b3"],
    ]

    out = pl.pallas_call(
        functools.partial(dgcnn_fused_kernel, k=K),
        out_shape=jax.ShapeDtypeStruct((b, NUM_POINTS * OUT_DIM), jnp.float32),
        in_specs=[pl.BlockSpec(memory_space=pltpu.MemorySpace.VMEM)]
        * len(inputs),
        out_specs=pl.BlockSpec(memory_space=pltpu.MemorySpace.VMEM),
    )(*inputs)
    return out.reshape(-1, NUM_POINTS, OUT_DIM)                  # (B, 16, 3)


# ----------------------------- parameters ------------------------------------
def _fold_bn(scale_key, shift_key, cout):
    """Eval-mode BN with fresh running stats folded into scale/shift."""
    gamma = 1.0 + 0.1 * jax.random.normal(scale_key, (cout,), jnp.float32)
    beta = 0.1 * jax.random.normal(shift_key, (cout,), jnp.float32)
    running_mean = jnp.zeros((cout,), jnp.float32)
    running_var = jnp.ones((cout,), jnp.float32)
    scale = gamma / jnp.sqrt(running_var + BN_EPS)
    shift = beta - running_mean * scale
    return scale, shift


def make_edge_conv_params(key, cin, cout, cin_pad=None):
    """Linear(2*cin, cout) split into Wt/Wb, BN folded, packed as [Wt-Wb | Wb]."""
    k1, k2, k3, k4, k5 = jax.random.split(key, 5)
    wt = 0.1 * jax.random.normal(k1, (cin, cout), jnp.float32)
    wb = 0.1 * jax.random.normal(k2, (cin, cout), jnp.float32)
    bias = 0.1 * jax.random.normal(k3, (cout,), jnp.float32)
    scale, shift = _fold_bn(k4, k5, cout)
    w_comb = jnp.concatenate(
        [(wt - wb) * scale[None, :], wb * scale[None, :]], axis=1)  # (cin, 2*cout)
    if cin_pad is not None and cin_pad > cin:
        w_comb = jnp.concatenate(
            [w_comb, jnp.zeros((cin_pad - cin, 2 * cout), jnp.float32)], axis=0)
    b_fold = (bias * scale + shift).reshape(1, cout)
    return w_comb, b_fold


def make_head_params(key):
    ks = jax.random.split(key, 8)
    w1 = 0.05 * jax.random.normal(ks[0], (512, 256), jnp.float32)
    b1 = 0.1 * jax.random.normal(ks[1], (256,), jnp.float32)
    s1, sh1 = _fold_bn(ks[2], ks[3], 256)
    w2 = 0.05 * jax.random.normal(ks[4], (256, 128), jnp.float32)
    b2 = 0.1 * jax.random.normal(ks[5], (128,), jnp.float32)
    s2, sh2 = _fold_bn(ks[6], ks[7], 128)
    k3w, k3b = jax.random.split(jax.random.fold_in(key, 99))
    w3 = 0.05 * jax.random.normal(k3w, (128, NUM_POINTS * OUT_DIM), jnp.float32)
    b3 = 0.1 * jax.random.normal(k3b, (NUM_POINTS * OUT_DIM,), jnp.float32)
    return {
        "w1": w1 * s1[None, :], "b1": (b1 * s1 + sh1).reshape(1, 256),
        "w2": w2 * s2[None, :], "b2": (b2 * s2 + sh2).reshape(1, 128),
        "w3": w3, "b3": b3.reshape(1, NUM_POINTS * OUT_DIM),
    }


def make_params(key):
    k1, k2, k3, k4, k5 = jax.random.split(key, 5)
    return {
        "conv1": make_edge_conv_params(k1, INPUT_DIM, 64, cin_pad=CIN_PAD),
        "conv2": make_edge_conv_params(k2, 64, 128),
        "conv3": make_edge_conv_params(k3, 128, 256),
        "conv4": make_edge_conv_params(k4, 256, 512),
        "head": make_head_params(k5),
    }


# ----------------------------- main -------------------------------------------
if __name__ == "__main__":
    key = jax.random.PRNGKey(0)
    pkey, xkey = jax.random.split(key)
    params = make_params(pkey)
    x = jax.random.normal(xkey, (B, P, INPUT_DIM), jnp.float32)

    out = jax.jit(dgcnn_forward)(x, params)
    jax.block_until_ready(out)
    assert out.shape == (B, NUM_POINTS, OUT_DIM)
    assert out.dtype == jnp.float32
    assert bool(jnp.all(jnp.isfinite(out)))
    print("KERNEL_OK")
</pallas_src>

<mosaic_0001>
module attributes {stable_mosaic.version = 11 : i64} {
  func.func @dgcnn_fused_kernel(%arg0: memref<32x8xf32, #tpu.memory_space<vmem>>, %arg1: memref<32x32xf32, #tpu.memory_space<vmem>>, %arg2: memref<2x32xf32, #tpu.memory_space<vmem>>, %arg3: memref<8x128xf32, #tpu.memory_space<vmem>>, %arg4: memref<1x64xf32, #tpu.memory_space<vmem>>, %arg5: memref<64x256xf32, #tpu.memory_space<vmem>>, %arg6: memref<1x128xf32, #tpu.memory_space<vmem>>, %arg7: memref<128x512xf32, #tpu.memory_space<vmem>>, %arg8: memref<1x256xf32, #tpu.memory_space<vmem>>, %arg9: memref<256x1024xf32, #tpu.memory_space<vmem>>, %arg10: memref<1x512xf32, #tpu.memory_space<vmem>>, %arg11: memref<512x256xf32, #tpu.memory_space<vmem>>, %arg12: memref<1x256xf32, #tpu.memory_space<vmem>>, %arg13: memref<256x128xf32, #tpu.memory_space<vmem>>, %arg14: memref<1x128xf32, #tpu.memory_space<vmem>>, %arg15: memref<128x48xf32, #tpu.memory_space<vmem>>, %arg16: memref<1x48xf32, #tpu.memory_space<vmem>>, %arg17: memref<2x48xf32, #tpu.memory_space<vmem>>) attributes {dimension_semantics = [], scalar_prefetch = 0 : i64, scratch_operands = 0 : i64, tpu.core_type = #tpu.core_type<tc>} {
    %0 = tpu.iota {dimensions = array<i32: 1>} : vector<32x32xi32>
    %1 = arith.sitofp %0 : vector<32x32xi32> to vector<32x32xf32>
    %c0 = arith.constant 0 : index
    %c0_0 = arith.constant 0 : index
    %2 = vector.load %arg1[%c0, %c0_0] : memref<32x32xf32, #tpu.memory_space<vmem>>, vector<32x32xf32>
    %c0_1 = arith.constant 0 : index
    %c0_2 = arith.constant 0 : index
    %3 = vector.load %arg0[%c0_1, %c0_2] : memref<32x8xf32, #tpu.memory_space<vmem>>, vector<32x8xf32>
    %4 = arith.mulf %3, %3 : vector<32x8xf32>
    %cst = arith.constant dense<0.000000e+00> : vector<32xf32>
    %5 = vector.multi_reduction <add>, %4, %cst [1] : vector<32x8xf32> to vector<32xf32>
    %6 = vector.shape_cast %5 : vector<32xf32> to vector<32x1xf32>
    %7 = tpu.transpose %6, [1, 0] : vector<32x1xf32> -> vector<1x32xf32>
    %8 = tpu.transpose %3, [1, 0] : vector<32x8xf32> -> vector<8x32xf32>
    %cst_3 = arith.constant dense<0.000000e+00> : vector<32x32xf32>
    %9 = tpu.matmul %3, %8, %cst_3 {dimension_numbers = #tpu.dot_dimension_numbers<[1], [0], [0], [1], [0, 0, 1, 1], [], []>} : vector<32x8xf32>, vector<8x32xf32>, vector<32x32xf32> -> vector<32x32xf32>
    %cst_4 = arith.constant 2.000000e+00 : f32
    %10 = vector.broadcast %cst_4 : f32 to vector<32x32xf32>
    %11 = arith.mulf %10, %9 : vector<32x32xf32>
    %12 = vector.broadcast %7 : vector<1x32xf32> to vector<32x32xf32>
    %13 = arith.subf %12, %11 : vector<32x32xf32>
    %14 = arith.addf %13, %2 : vector<32x32xf32>
    %cst_5 = arith.constant 0.000000e+00 : f32
    %15 = vector.broadcast %cst_5 : f32 to vector<32x32xf32>
    %cst_6 = arith.constant 1.000000e+09 : f32
    %16 = vector.broadcast %cst_6 : f32 to vector<32x32xf32>
    %17 = arith.mulf %15, %16 : vector<32x32xf32>
    %18 = arith.addf %14, %17 : vector<32x32xf32>
    %cst_7 = arith.constant dense<0x7F800000> : vector<32xf32>
    %19 = vector.multi_reduction <minimumf>, %18, %cst_7 [1] : vector<32x32xf32> to vector<32xf32>
    %20 = vector.shape_cast %19 : vector<32xf32> to vector<32x1xf32>
    %21 = vector.broadcast %20 : vector<32x1xf32> to vector<32x32xf32>
    %22 = arith.cmpf ole, %18, %21 : vector<32x32xf32>
    %cst_8 = arith.constant 3.200000e+01 : f32
    %23 = vector.broadcast %cst_8 : f32 to vector<32x32xf32>
    %24 = arith.select %22, %1, %23 : vector<32x32xi1>, vector<32x32xf32>
    %cst_9 = arith.constant dense<0x7F800000> : vector<32xf32>
    %25 = vector.multi_reduction <minimumf>, %24, %cst_9 [1] : vector<32x32xf32> to vector<32xf32>
    %26 = vector.shape_cast %25 : vector<32xf32> to vector<32x1xf32>
    %27 = vector.broadcast %26 : vector<32x1xf32> to vector<32x32xf32>
    %28 = arith.cmpf oeq, %1, %27 : vector<32x32xf32>
    %29 = arith.extui %28 : vector<32x32xi1> to vector<32x32xi32>
    %30 = arith.sitofp %29 : vector<32x32xi32> to vector<32x32xf32>
    %31 = arith.addf %15, %30 : vector<32x32xf32>
    %cst_10 = arith.constant 1.000000e+09 : f32
    %32 = vector.broadcast %cst_10 : f32 to vector<32x32xf32>
    %33 = arith.mulf %31, %32 : vector<32x32xf32>
    %34 = arith.addf %14, %33 : vector<32x32xf32>
    %cst_11 = arith.constant dense<0x7F800000> : vector<32xf32>
    %35 = vector.multi_reduction <minimumf>, %34, %cst_11 [1] : vector<32x32xf32> to vector<32xf32>
    %36 = vector.shape_cast %35 : vector<32xf32> to vector<32x1xf32>
    %37 = vector.broadcast %36 : vector<32x1xf32> to vector<32x32xf32>
    %38 = arith.cmpf ole, %34, %37 : vector<32x32xf32>
    %cst_12 = arith.constant 3.200000e+01 : f32
    %39 = vector.broadcast %cst_12 : f32 to vector<32x32xf32>
    %40 = arith.select %38, %1, %39 : vector<32x32xi1>, vector<32x32xf32>
    %cst_13 = arith.constant dense<0x7F800000> : vector<32xf32>
    %41 = vector.multi_reduction <minimumf>, %40, %cst_13 [1] : vector<32x32xf32> to vector<32xf32>
    %42 = vector.shape_cast %41 : vector<32xf32> to vector<32x1xf32>
    %43 = vector.broadcast %42 : vector<32x1xf32> to vector<32x32xf32>
    %44 = arith.cmpf oeq, %1, %43 : vector<32x32xf32>
    %45 = arith.extui %44 : vector<32x32xi1> to vector<32x32xi32>
    %46 = arith.sitofp %45 : vector<32x32xi32> to vector<32x32xf32>
    %47 = arith.addf %31, %46 : vector<32x32xf32>
    %cst_14 = arith.constant 1.000000e+09 : f32
    %48 = vector.broadcast %cst_14 : f32 to vector<32x32xf32>
    %49 = arith.mulf %47, %48 : vector<32x32xf32>
    %50 = arith.addf %14, %49 : vector<32x32xf32>
    %cst_15 = arith.constant dense<0x7F800000> : vector<32xf32>
    %51 = vector.multi_reduction <minimumf>, %50, %cst_15 [1] : vector<32x32xf32> to vector<32xf32>
    %52 = vector.shape_cast %51 : vector<32xf32> to vector<32x1xf32>
    %53 = vector.broadcast %52 : vector<32x1xf32> to vector<32x32xf32>
    %54 = arith.cmpf ole, %50, %53 : vector<32x32xf32>
    %cst_16 = arith.constant 3.200000e+01 : f32
    %55 = vector.broadcast %cst_16 : f32 to vector<32x32xf32>
    %56 = arith.select %54, %1, %55 : vector<32x32xi1>, vector<32x32xf32>
    %cst_17 = arith.constant dense<0x7F800000> : vector<32xf32>
    %57 = vector.multi_reduction <minimumf>, %56, %cst_17 [1] : vector<32x32xf32> to vector<32xf32>
    %58 = vector.shape_cast %57 : vector<32xf32> to vector<32x1xf32>
    %59 = vector.broadcast %58 : vector<32x1xf32> to vector<32x32xf32>
    %60 = arith.cmpf oeq, %1, %59 : vector<32x32xf32>
    %61 = arith.extui %60 : vector<32x32xi1> to vector<32x32xi32>
    %62 = arith.sitofp %61 : vector<32x32xi32> to vector<32x32xf32>
    %c0_18 = arith.constant 0 : index
    %c0_19 = arith.constant 0 : index
    %63 = vector.load %arg3[%c0_18, %c0_19] : memref<8x128xf32, #tpu.memory_space<vmem>>, vector<8x128xf32>
    %cst_20 = arith.constant dense<0.000000e+00> : vector<32x128xf32>
    %64 = tpu.matmul %3, %63, %cst_20 {dimension_numbers = #tpu.dot_dimension_numbers<[1], [0], [0], [1], [0, 0, 1, 1], [], []>} : vector<32x8xf32>, vector<8x128xf32>, vector<32x128xf32> -> vector<32x128xf32>
    %65 = vector.extract_strided_slice %64 {offsets = [0, 0], sizes = [32, 64], strides = [1, 1]} : vector<32x128xf32> to vector<32x64xf32>
    %c0_21 = arith.constant 0 : index
    %c0_22 = arith.constant 0 : index
    %66 = vector.load %arg4[%c0_21, %c0_22] : memref<1x64xf32, #tpu.memory_space<vmem>>, vector<1x64xf32>
    %67 = vector.broadcast %66 : vector<1x64xf32> to vector<32x64xf32>
    %68 = arith.addf %65, %67 : vector<32x64xf32>
    %69 = vector.extract_strided_slice %64 {offsets = [0, 64], sizes = [32, 64], strides = [1, 1]} : vector<32x128xf32> to vector<32x64xf32>
    %70 = tpu.concatenate %30, %46, %62 in 0 : vector<32x32xf32>, vector<32x32xf32>, vector<32x32xf32> -> vector<96x32xf32>
    %cst_23 = arith.constant dense<0.000000e+00> : vector<96x64xf32>
    %71 = tpu.matmul %70, %69, %cst_23 {dimension_numbers = #tpu.dot_dimension_numbers<[1], [0], [0], [1], [0, 0, 1, 1], [], []>} : vector<96x32xf32>, vector<32x64xf32>, vector<96x64xf32> -> vector<96x64xf32>
    %72 = vector.extract_strided_slice %71 {offsets = [0, 0], sizes = [32, 64], strides = [1, 1]} : vector<96x64xf32> to vector<32x64xf32>
    %73 = arith.maximumf %69, %72 : vector<32x64xf32>
    %74 = vector.extract_strided_slice %71 {offsets = [32, 0], sizes = [32, 64], strides = [1, 1]} : vector<96x64xf32> to vector<32x64xf32>
    %75 = arith.maximumf %73, %74 : vector<32x64xf32>
    %76 = vector.extract_strided_slice %71 {offsets = [64, 0], sizes = [32, 64], strides = [1, 1]} : vector<96x64xf32> to vector<32x64xf32>
    %77 = arith.maximumf %75, %76 : vector<32x64xf32>
    %78 = arith.addf %77, %68 : vector<32x64xf32>
    %cst_24 = arith.constant 0.000000e+00 : f32
    %79 = vector.broadcast %cst_24 : f32 to vector<32x64xf32>
    %80 = arith.maximumf %78, %79 : vector<32x64xf32>
    %81 = arith.mulf %80, %80 : vector<32x64xf32>
    %cst_25 = arith.constant dense<0.000000e+00> : vector<32xf32>
    %82 = vector.multi_reduction <add>, %81, %cst_25 [1] : vector<32x64xf32> to vector<32xf32>
    %83 = vector.shape_cast %82 : vector<32xf32> to vector<32x1xf32>
    %84 = tpu.transpose %83, [1, 0] : vector<32x1xf32> -> vector<1x32xf32>
    %85 = tpu.transpose %80, [1, 0] : vector<32x64xf32> -> vector<64x32xf32>
    %cst_26 = arith.constant dense<0.000000e+00> : vector<32x32xf32>
    %86 = tpu.matmul %80, %85, %cst_26 {dimension_numbers = #tpu.dot_dimension_numbers<[1], [0], [0], [1], [0, 0, 1, 1], [], []>} : vector<32x64xf32>, vector<64x32xf32>, vector<32x32xf32> -> vector<32x32xf32>
    %cst_27 = arith.constant 2.000000e+00 : f32
    %87 = vector.broadcast %cst_27 : f32 to vector<32x32xf32>
    %88 = arith.mulf %87, %86 : vector<32x32xf32>
    %89 = vector.broadcast %84 : vector<1x32xf32> to vector<32x32xf32>
    %90 = arith.subf %89, %88 : vector<32x32xf32>
    %91 = arith.addf %90, %2 : vector<32x32xf32>
    %cst_28 = arith.constant 0.000000e+00 : f32
    %92 = vector.broadcast %cst_28 : f32 to vector<32x32xf32>
    %cst_29 = arith.constant 1.000000e+09 : f32
    %93 = vector.broadcast %cst_29 : f32 to vector<32x32xf32>
    %94 = arith.mulf %92, %93 : vector<32x32xf32>
    %95 = arith.addf %91, %94 : vector<32x32xf32>
    %cst_30 = arith.constant dense<0x7F800000> : vector<32xf32>
    %96 = vector.multi_reduction <minimumf>, %95, %cst_30 [1] : vector<32x32xf32> to vector<32xf32>
    %97 = vector.shape_cast %96 : vector<32xf32> to vector<32x1xf32>
    %98 = vector.broadcast %97 : vector<32x1xf32> to vector<32x32xf32>
    %99 = arith.cmpf ole, %95, %98 : vector<32x32xf32>
    %cst_31 = arith.constant 3.200000e+01 : f32
    %100 = vector.broadcast %cst_31 : f32 to vector<32x32xf32>
    %101 = arith.select %99, %1, %100 : vector<32x32xi1>, vector<32x32xf32>
    %cst_32 = arith.constant dense<0x7F800000> : vector<32xf32>
    %102 = vector.multi_reduction <minimumf>, %101, %cst_32 [1] : vector<32x32xf32> to vector<32xf32>
    %103 = vector.shape_cast %102 : vector<32xf32> to vector<32x1xf32>
    %104 = vector.broadcast %103 : vector<32x1xf32> to vector<32x32xf32>
    %105 = arith.cmpf oeq, %1, %104 : vector<32x32xf32>
    %106 = arith.extui %105 : vector<32x32xi1> to vector<32x32xi32>
    %107 = arith.sitofp %106 : vector<32x32xi32> to vector<32x32xf32>
    %108 = arith.addf %92, %107 : vector<32x32xf32>
    %cst_33 = arith.constant 1.000000e+09 : f32
    %109 = vector.broadcast %cst_33 : f32 to vector<32x32xf32>
    %110 = arith.mulf %108, %109 : vector<32x32xf32>
    %111 = arith.addf %91, %110 : vector<32x32xf32>
    %cst_34 = arith.constant dense<0x7F800000> : vector<32xf32>
    %112 = vector.multi_reduction <minimumf>, %111, %cst_34 [1] : vector<32x32xf32> to vector<32xf32>
    %113 = vector.shape_cast %112 : vector<32xf32> to vector<32x1xf32>
    %114 = vector.broadcast %113 : vector<32x1xf32> to vector<32x32xf32>
    %115 = arith.cmpf ole, %111, %114 : vector<32x32xf32>
    %cst_35 = arith.constant 3.200000e+01 : f32
    %116 = vector.broadcast %cst_35 : f32 to vector<32x32xf32>
    %117 = arith.select %115, %1, %116 : vector<32x32xi1>, vector<32x32xf32>
    %cst_36 = arith.constant dense<0x7F800000> : vector<32xf32>
    %118 = vector.multi_reduction <minimumf>, %117, %cst_36 [1] : vector<32x32xf32> to vector<32xf32>
    %119 = vector.shape_cast %118 : vector<32xf32> to vector<32x1xf32>
    %120 = vector.broadcast %119 : vector<32x1xf32> to vector<32x32xf32>
    %121 = arith.cmpf oeq, %1, %120 : vector<32x32xf32>
    %122 = arith.extui %121 : vector<32x32xi1> to vector<32x32xi32>
    %123 = arith.sitofp %122 : vector<32x32xi32> to vector<32x32xf32>
    %124 = arith.addf %108, %123 : vector<32x32xf32>
    %cst_37 = arith.constant 1.000000e+09 : f32
    %125 = vector.broadcast %cst_37 : f32 to vector<32x32xf32>
    %126 = arith.mulf %124, %125 : vector<32x32xf32>
    %127 = arith.addf %91, %126 : vector<32x32xf32>
    %cst_38 = arith.constant dense<0x7F800000> : vector<32xf32>
    %128 = vector.multi_reduction <minimumf>, %127, %cst_38 [1] : vector<32x32xf32> to vector<32xf32>
    %129 = vector.shape_cast %128 : vector<32xf32> to vector<32x1xf32>
    %130 = vector.broadcast %129 : vector<32x1xf32> to vector<32x32xf32>
    %131 = arith.cmpf ole, %127, %130 : vector<32x32xf32>
    %cst_39 = arith.constant 3.200000e+01 : f32
    %132 = vector.broadcast %cst_39 : f32 to vector<32x32xf32>
    %133 = arith.select %131, %1, %132 : vector<32x32xi1>, vector<32x32xf32>
    %cst_40 = arith.constant dense<0x7F800000> : vector<32xf32>
    %134 = vector.multi_reduction <minimumf>, %133, %cst_40 [1] : vector<32x32xf32> to vector<32xf32>
    %135 = vector.shape_cast %134 : vector<32xf32> to vector<32x1xf32>
    %136 = vector.broadcast %135 : vector<32x1xf32> to vector<32x32xf32>
    %137 = arith.cmpf oeq, %1, %136 : vector<32x32xf32>
    %138 = arith.extui %137 : vector<32x32xi1> to vector<32x32xi32>
    %139 = arith.sitofp %138 : vector<32x32xi32> to vector<32x32xf32>
    %c0_41 = arith.constant 0 : index
    %c0_42 = arith.constant 0 : index
    %140 = vector.load %arg5[%c0_41, %c0_42] : memref<64x256xf32, #tpu.memory_space<vmem>>, vector<64x256xf32>
    %cst_43 = arith.constant dense<0.000000e+00> : vector<32x256xf32>
    %141 = tpu.matmul %80, %140, %cst_43 {dimension_numbers = #tpu.dot_dimension_numbers<[1], [0], [0], [1], [0, 0, 1, 1], [], []>} : vector<32x64xf32>, vector<64x256xf32>, vector<32x256xf32> -> vector<32x256xf32>
    %142 = vector.extract_strided_slice %141 {offsets = [0, 0], sizes = [32, 128], strides = [1, 1]} : vector<32x256xf32> to vector<32x128xf32>
    %c0_44 = arith.constant 0 : index
    %c0_45 = arith.constant 0 : index
    %143 = vector.load %arg6[%c0_44, %c0_45] : memref<1x128xf32, #tpu.memory_space<vmem>>, vector<1x128xf32>
    %144 = vector.broadcast %143 : vector<1x128xf32> to vector<32x128xf32>
    %145 = arith.addf %142, %144 : vector<32x128xf32>
    %146 = vector.extract_strided_slice %141 {offsets = [0, 128], sizes = [32, 128], strides = [1, 1]} : vector<32x256xf32> to vector<32x128xf32>
    %147 = tpu.concatenate %107, %123, %139 in 0 : vector<32x32xf32>, vector<32x32xf32>, vector<32x32xf32> -> vector<96x32xf32>
    %cst_46 = arith.constant dense<0.000000e+00> : vector<96x128xf32>
    %148 = tpu.matmul %147, %146, %cst_46 {dimension_numbers = #tpu.dot_dimension_numbers<[1], [0], [0], [1], [0, 0, 1, 1], [], []>} : vector<96x32xf32>, vector<32x128xf32>, vector<96x128xf32> -> vector<96x128xf32>
    %149 = vector.extract_strided_slice %148 {offsets = [0, 0], sizes = [32, 128], strides = [1, 1]} : vector<96x128xf32> to vector<32x128xf32>
    %150 = arith.maximumf %146, %149 : vector<32x128xf32>
    %151 = vector.extract_strided_slice %148 {offsets = [32, 0], sizes = [32, 128], strides = [1, 1]} : vector<96x128xf32> to vector<32x128xf32>
    %152 = arith.maximumf %150, %151 : vector<32x128xf32>
    %153 = vector.extract_strided_slice %148 {offsets = [64, 0], sizes = [32, 128], strides = [1, 1]} : vector<96x128xf32> to vector<32x128xf32>
    %154 = arith.maximumf %152, %153 : vector<32x128xf32>
    %155 = arith.addf %154, %145 : vector<32x128xf32>
    %cst_47 = arith.constant 0.000000e+00 : f32
    %156 = vector.broadcast %cst_47 : f32 to vector<32x128xf32>
    %157 = arith.maximumf %155, %156 : vector<32x128xf32>
    %158 = arith.mulf %157, %157 : vector<32x128xf32>
    %cst_48 = arith.constant dense<0.000000e+00> : vector<32xf32>
    %159 = vector.multi_reduction <add>, %158, %cst_48 [1] : vector<32x128xf32> to vector<32xf32>
    %160 = vector.shape_cast %159 : vector<32xf32> to vector<32x1xf32>
    %161 = tpu.transpose %160, [1, 0] : vector<32x1xf32> -> vector<1x32xf32>
    %162 = tpu.transpose %157, [1, 0] : vector<32x128xf32> -> vector<128x32xf32>
    %cst_49 = arith.constant dense<0.000000e+00> : vector<32x32xf32>
    %163 = tpu.matmul %157, %162, %cst_49 {dimension_numbers = #tpu.dot_dimension_numbers<[1], [0], [0], [1], [0, 0, 1, 1], [], []>} : vector<32x128xf32>, vector<128x32xf32>, vector<32x32xf32> -> vector<32x32xf32>
    %cst_50 = arith.constant 2.000000e+00 : f32
    %164 = vector.broadcast %cst_50 : f32 to vector<32x32xf32>
    %165 = arith.mulf %164, %163 : vector<32x32xf32>
    %166 = vector.broadcast %161 : vector<1x32xf32> to vector<32x32xf32>
    %167 = arith.subf %166, %165 : vector<32x32xf32>
    %168 = arith.addf %167, %2 : vector<32x32xf32>
    %cst_51 = arith.constant 0.000000e+00 : f32
    %169 = vector.broadcast %cst_51 : f32 to vector<32x32xf32>
    %cst_52 = arith.constant 1.000000e+09 : f32
    %170 = vector.broadcast %cst_52 : f32 to vector<32x32xf32>
    %171 = arith.mulf %169, %170 : vector<32x32xf32>
    %172 = arith.addf %168, %171 : vector<32x32xf32>
    %cst_53 = arith.constant dense<0x7F800000> : vector<32xf32>
    %173 = vector.multi_reduction <minimumf>, %172, %cst_53 [1] : vector<32x32xf32> to vector<32xf32>
    %174 = vector.shape_cast %173 : vector<32xf32> to vector<32x1xf32>
    %175 = vector.broadcast %174 : vector<32x1xf32> to vector<32x32xf32>
    %176 = arith.cmpf ole, %172, %175 : vector<32x32xf32>
    %cst_54 = arith.constant 3.200000e+01 : f32
    %177 = vector.broadcast %cst_54 : f32 to vector<32x32xf32>
    %178 = arith.select %176, %1, %177 : vector<32x32xi1>, vector<32x32xf32>
    %cst_55 = arith.constant dense<0x7F800000> : vector<32xf32>
    %179 = vector.multi_reduction <minimumf>, %178, %cst_55 [1] : vector<32x32xf32> to vector<32xf32>
    %180 = vector.shape_cast %179 : vector<32xf32> to vector<32x1xf32>
    %181 = vector.broadcast %180 : vector<32x1xf32> to vector<32x32xf32>
    %182 = arith.cmpf oeq, %1, %181 : vector<32x32xf32>
    %183 = arith.extui %182 : vector<32x32xi1> to vector<32x32xi32>
    %184 = arith.sitofp %183 : vector<32x32xi32> to vector<32x32xf32>
    %185 = arith.addf %169, %184 : vector<32x32xf32>
    %cst_56 = arith.constant 1.000000e+09 : f32
    %186 = vector.broadcast %cst_56 : f32 to vector<32x32xf32>
    %187 = arith.mulf %185, %186 : vector<32x32xf32>
    %188 = arith.addf %168, %187 : vector<32x32xf32>
    %cst_57 = arith.constant dense<0x7F800000> : vector<32xf32>
    %189 = vector.multi_reduction <minimumf>, %188, %cst_57 [1] : vector<32x32xf32> to vector<32xf32>
    %190 = vector.shape_cast %189 : vector<32xf32> to vector<32x1xf32>
    %191 = vector.broadcast %190 : vector<32x1xf32> to vector<32x32xf32>
    %192 = arith.cmpf ole, %188, %191 : vector<32x32xf32>
    %cst_58 = arith.constant 3.200000e+01 : f32
    %193 = vector.broadcast %cst_58 : f32 to vector<32x32xf32>
    %194 = arith.select %192, %1, %193 : vector<32x32xi1>, vector<32x32xf32>
    %cst_59 = arith.constant dense<0x7F800000> : vector<32xf32>
    %195 = vector.multi_reduction <minimumf>, %194, %cst_59 [1] : vector<32x32xf32> to vector<32xf32>
    %196 = vector.shape_cast %195 : vector<32xf32> to vector<32x1xf32>
    %197 = vector.broadcast %196 : vector<32x1xf32> to vector<32x32xf32>
    %198 = arith.cmpf oeq, %1, %197 : vector<32x32xf32>
    %199 = arith.extui %198 : vector<32x32xi1> to vector<32x32xi32>
    %200 = arith.sitofp %199 : vector<32x32xi32> to vector<32x32xf32>
    %201 = arith.addf %185, %200 : vector<32x32xf32>
    %cst_60 = arith.constant 1.000000e+09 : f32
    %202 = vector.broadcast %cst_60 : f32 to vector<32x32xf32>
    %203 = arith.mulf %201, %202 : vector<32x32xf32>
    %204 = arith.addf %168, %203 : vector<32x32xf32>
    %cst_61 = arith.constant dense<0x7F800000> : vector<32xf32>
    %205 = vector.multi_reduction <minimumf>, %204, %cst_61 [1] : vector<32x32xf32> to vector<32xf32>
    %206 = vector.shape_cast %205 : vector<32xf32> to vector<32x1xf32>
    %207 = vector.broadcast %206 : vector<32x1xf32> to vector<32x32xf32>
    %208 = arith.cmpf ole, %204, %207 : vector<32x32xf32>
    %cst_62 = arith.constant 3.200000e+01 : f32
    %209 = vector.broadcast %cst_62 : f32 to vector<32x32xf32>
    %210 = arith.select %208, %1, %209 : vector<32x32xi1>, vector<32x32xf32>
    %cst_63 = arith.constant dense<0x7F800000> : vector<32xf32>
    %211 = vector.multi_reduction <minimumf>, %210, %cst_63 [1] : vector<32x32xf32> to vector<32xf32>
    %212 = vector.shape_cast %211 : vector<32xf32> to vector<32x1xf32>
    %213 = vector.broadcast %212 : vector<32x1xf32> to vector<32x32xf32>
    %214 = arith.cmpf oeq, %1, %213 : vector<32x32xf32>
    %215 = arith.extui %214 : vector<32x32xi1> to vector<32x32xi32>
    %216 = arith.sitofp %215 : vector<32x32xi32> to vector<32x32xf32>
    %c0_64 = arith.constant 0 : index
    %c0_65 = arith.constant 0 : index
    %217 = vector.load %arg7[%c0_64, %c0_65] : memref<128x512xf32, #tpu.memory_space<vmem>>, vector<128x512xf32>
    %cst_66 = arith.constant dense<0.000000e+00> : vector<32x512xf32>
    %218 = tpu.matmul %157, %217, %cst_66 {dimension_numbers = #tpu.dot_dimension_numbers<[1], [0], [0], [1], [0, 0, 1, 1], [], []>} : vector<32x128xf32>, vector<128x512xf32>, vector<32x512xf32> -> vector<32x512xf32>
    %219 = vector.extract_strided_slice %218 {offsets = [0, 0], sizes = [32, 256], strides = [1, 1]} : vector<32x512xf32> to vector<32x256xf32>
    %c0_67 = arith.constant 0 : index
    %c0_68 = arith.constant 0 : index
    %220 = vector.load %arg8[%c0_67, %c0_68] : memref<1x256xf32, #tpu.memory_space<vmem>>, vector<1x256xf32>
    %221 = vector.broadcast %220 : vector<1x256xf32> to vector<32x256xf32>
    %222 = arith.addf %219, %221 : vector<32x256xf32>
    %223 = vector.extract_strided_slice %218 {offsets = [0, 256], sizes = [32, 256], strides = [1, 1]} : vector<32x512xf32> to vector<32x256xf32>
    %224 = tpu.concatenate %184, %200, %216 in 0 : vector<32x32xf32>, vector<32x32xf32>, vector<32x32xf32> -> vector<96x32xf32>
    %cst_69 = arith.constant dense<0.000000e+00> : vector<96x256xf32>
    %225 = tpu.matmul %224, %223, %cst_69 {dimension_numbers = #tpu.dot_dimension_numbers<[1], [0], [0], [1], [0, 0, 1, 1], [], []>} : vector<96x32xf32>, vector<32x256xf32>, vector<96x256xf32> -> vector<96x256xf32>
    %226 = vector.extract_strided_slice %225 {offsets = [0, 0], sizes = [32, 256], strides = [1, 1]} : vector<96x256xf32> to vector<32x256xf32>
    %227 = arith.maximumf %223, %226 : vector<32x256xf32>
    %228 = vector.extract_strided_slice %225 {offsets = [32, 0], sizes = [32, 256], strides = [1, 1]} : vector<96x256xf32> to vector<32x256xf32>
    %229 = arith.maximumf %227, %228 : vector<32x256xf32>
    %230 = vector.extract_strided_slice %225 {offsets = [64, 0], sizes = [32, 256], strides = [1, 1]} : vector<96x256xf32> to vector<32x256xf32>
    %231 = arith.maximumf %229, %230 : vector<32x256xf32>
    %232 = arith.addf %231, %222 : vector<32x256xf32>
    %cst_70 = arith.constant 0.000000e+00 : f32
    %233 = vector.broadcast %cst_70 : f32 to vector<32x256xf32>
    %234 = arith.maximumf %232, %233 : vector<32x256xf32>
    %235 = arith.mulf %234, %234 : vector<32x256xf32>
    %cst_71 = arith.constant dense<0.000000e+00> : vector<32xf32>
    %236 = vector.multi_reduction <add>, %235, %cst_71 [1] : vector<32x256xf32> to vector<32xf32>
    %237 = vector.shape_cast %236 : vector<32xf32> to vector<32x1xf32>
    %238 = tpu.transpose %237, [1, 0] : vector<32x1xf32> -> vector<1x32xf32>
    %239 = tpu.transpose %234, [1, 0] : vector<32x256xf32> -> vector<256x32xf32>
    %cst_72 = arith.constant dense<0.000000e+00> : vector<32x32xf32>
    %240 = tpu.matmul %234, %239, %cst_72 {dimension_numbers = #tpu.dot_dimension_numbers<[1], [0], [0], [1], [0, 0, 1, 1], [], []>} : vector<32x256xf32>, vector<256x32xf32>, vector<32x32xf32> -> vector<32x32xf32>
    %cst_73 = arith.constant 2.000000e+00 : f32
    %241 = vector.broadcast %cst_73 : f32 to vector<32x32xf32>
    %242 = arith.mulf %241, %240 : vector<32x32xf32>
    %243 = vector.broadcast %238 : vector<1x32xf32> to vector<32x32xf32>
    %244 = arith.subf %243, %242 : vector<32x32xf32>
    %245 = arith.addf %244, %2 : vector<32x32xf32>
    %cst_74 = arith.constant 0.000000e+00 : f32
    %246 = vector.broadcast %cst_74 : f32 to vector<32x32xf32>
    %cst_75 = arith.constant 1.000000e+09 : f32
    %247 = vector.broadcast %cst_75 : f32 to vector<32x32xf32>
    %248 = arith.mulf %246, %247 : vector<32x32xf32>
    %249 = arith.addf %245, %248 : vector<32x32xf32>
    %cst_76 = arith.constant dense<0x7F800000> : vector<32xf32>
    %250 = vector.multi_reduction <minimumf>, %249, %cst_76 [1] : vector<32x32xf32> to vector<32xf32>
    %251 = vector.shape_cast %250 : vector<32xf32> to vector<32x1xf32>
    %252 = vector.broadcast %251 : vector<32x1xf32> to vector<32x32xf32>
    %253 = arith.cmpf ole, %249, %252 : vector<32x32xf32>
    %cst_77 = arith.constant 3.200000e+01 : f32
    %254 = vector.broadcast %cst_77 : f32 to vector<32x32xf32>
    %255 = arith.select %253, %1, %254 : vector<32x32xi1>, vector<32x32xf32>
    %cst_78 = arith.constant dense<0x7F800000> : vector<32xf32>
    %256 = vector.multi_reduction <minimumf>, %255, %cst_78 [1] : vector<32x32xf32> to vector<32xf32>
    %257 = vector.shape_cast %256 : vector<32xf32> to vector<32x1xf32>
    %258 = vector.broadcast %257 : vector<32x1xf32> to vector<32x32xf32>
    %259 = arith.cmpf oeq, %1, %258 : vector<32x32xf32>
    %260 = arith.extui %259 : vector<32x32xi1> to vector<32x32xi32>
    %261 = arith.sitofp %260 : vector<32x32xi32> to vector<32x32xf32>
    %262 = arith.addf %246, %261 : vector<32x32xf32>
    %cst_79 = arith.constant 1.000000e+09 : f32
    %263 = vector.broadcast %cst_79 : f32 to vector<32x32xf32>
    %264 = arith.mulf %262, %263 : vector<32x32xf32>
    %265 = arith.addf %245, %264 : vector<32x32xf32>
    %cst_80 = arith.constant dense<0x7F800000> : vector<32xf32>
    %266 = vector.multi_reduction <minimumf>, %265, %cst_80 [1] : vector<32x32xf32> to vector<32xf32>
    %267 = vector.shape_cast %266 : vector<32xf32> to vector<32x1xf32>
    %268 = vector.broadcast %267 : vector<32x1xf32> to vector<32x32xf32>
    %269 = arith.cmpf ole, %265, %268 : vector<32x32xf32>
    %cst_81 = arith.constant 3.200000e+01 : f32
    %270 = vector.broadcast %cst_81 : f32 to vector<32x32xf32>
    %271 = arith.select %269, %1, %270 : vector<32x32xi1>, vector<32x32xf32>
    %cst_82 = arith.constant dense<0x7F800000> : vector<32xf32>
    %272 = vector.multi_reduction <minimumf>, %271, %cst_82 [1] : vector<32x32xf32> to vector<32xf32>
    %273 = vector.shape_cast %272 : vector<32xf32> to vector<32x1xf32>
    %274 = vector.broadcast %273 : vector<32x1xf32> to vector<32x32xf32>
    %275 = arith.cmpf oeq, %1, %274 : vector<32x32xf32>
    %276 = arith.extui %275 : vector<32x32xi1> to vector<32x32xi32>
    %277 = arith.sitofp %276 : vector<32x32xi32> to vector<32x32xf32>
    %278 = arith.addf %262, %277 : vector<32x32xf32>
    %cst_83 = arith.constant 1.000000e+09 : f32
    %279 = vector.broadcast %cst_83 : f32 to vector<32x32xf32>
    %280 = arith.mulf %278, %279 : vector<32x32xf32>
    %281 = arith.addf %245, %280 : vector<32x32xf32>
    %cst_84 = arith.constant dense<0x7F800000> : vector<32xf32>
    %282 = vector.multi_reduction <minimumf>, %281, %cst_84 [1] : vector<32x32xf32> to vector<32xf32>
    %283 = vector.shape_cast %282 : vector<32xf32> to vector<32x1xf32>
    %284 = vector.broadcast %283 : vector<32x1xf32> to vector<32x32xf32>
    %285 = arith.cmpf ole, %281, %284 : vector<32x32xf32>
    %cst_85 = arith.constant 3.200000e+01 : f32
    %286 = vector.broadcast %cst_85 : f32 to vector<32x32xf32>
    %287 = arith.select %285, %1, %286 : vector<32x32xi1>, vector<32x32xf32>
    %cst_86 = arith.constant dense<0x7F800000> : vector<32xf32>
    %288 = vector.multi_reduction <minimumf>, %287, %cst_86 [1] : vector<32x32xf32> to vector<32xf32>
    %289 = vector.shape_cast %288 : vector<32xf32> to vector<32x1xf32>
    %290 = vector.broadcast %289 : vector<32x1xf32> to vector<32x32xf32>
    %291 = arith.cmpf oeq, %1, %290 : vector<32x32xf32>
    %292 = arith.extui %291 : vector<32x32xi1> to vector<32x32xi32>
    %293 = arith.sitofp %292 : vector<32x32xi32> to vector<32x32xf32>
    %c0_87 = arith.constant 0 : index
    %c0_88 = arith.constant 0 : index
    %294 = vector.load %arg9[%c0_87, %c0_88] : memref<256x1024xf32, #tpu.memory_space<vmem>>, vector<256x1024xf32>
    %cst_89 = arith.constant dense<0.000000e+00> : vector<32x1024xf32>
    %295 = tpu.matmul %234, %294, %cst_89 {dimension_numbers = #tpu.dot_dimension_numbers<[1], [0], [0], [1], [0, 0, 1, 1], [], []>} : vector<32x256xf32>, vector<256x1024xf32>, vector<32x1024xf32> -> vector<32x1024xf32>
    %296 = vector.extract_strided_slice %295 {offsets = [0, 0], sizes = [32, 512], strides = [1, 1]} : vector<32x1024xf32> to vector<32x512xf32>
    %c0_90 = arith.constant 0 : index
    %c0_91 = arith.constant 0 : index
    %297 = vector.load %arg10[%c0_90, %c0_91] : memref<1x512xf32, #tpu.memory_space<vmem>>, vector<1x512xf32>
    %298 = vector.broadcast %297 : vector<1x512xf32> to vector<32x512xf32>
    %299 = arith.addf %296, %298 : vector<32x512xf32>
    %300 = vector.extract_strided_slice %295 {offsets = [0, 512], sizes = [32, 512], strides = [1, 1]} : vector<32x1024xf32> to vector<32x512xf32>
    %301 = tpu.concatenate %261, %277, %293 in 0 : vector<32x32xf32>, vector<32x32xf32>, vector<32x32xf32> -> vector<96x32xf32>
    %cst_92 = arith.constant dense<0.000000e+00> : vector<96x512xf32>
    %302 = tpu.matmul %301, %300, %cst_92 {dimension_numbers = #tpu.dot_dimension_numbers<[1], [0], [0], [1], [0, 0, 1, 1], [], []>} : vector<96x32xf32>, vector<32x512xf32>, vector<96x512xf32> -> vector<96x512xf32>
    %303 = vector.extract_strided_slice %302 {offsets = [0, 0], sizes = [32, 512], strides = [1, 1]} : vector<96x512xf32> to vector<32x512xf32>
    %304 = arith.maximumf %300, %303 : vector<32x512xf32>
    %305 = vector.extract_strided_slice %302 {offsets = [32, 0], sizes = [32, 512], strides = [1, 1]} : vector<96x512xf32> to vector<32x512xf32>
    %306 = arith.maximumf %304, %305 : vector<32x512xf32>
    %307 = vector.extract_strided_slice %302 {offsets = [64, 0], sizes = [32, 512], strides = [1, 1]} : vector<96x512xf32> to vector<32x512xf32>
    %308 = arith.maximumf %306, %307 : vector<32x512xf32>
    %309 = arith.addf %308, %299 : vector<32x512xf32>
    %cst_93 = arith.constant 0.000000e+00 : f32
    %310 = vector.broadcast %cst_93 : f32 to vector<32x512xf32>
    %311 = arith.maximumf %309, %310 : vector<32x512xf32>
    %c0_94 = arith.constant 0 : index
    %c0_95 = arith.constant 0 : index
    %312 = vector.load %arg2[%c0_94, %c0_95] : memref<2x32xf32, #tpu.memory_space<vmem>>, vector<2x32xf32>
    %cst_96 = arith.constant dense<0.000000e+00> : vector<2x512xf32>
    %313 = tpu.matmul %312, %311, %cst_96 {dimension_numbers = #tpu.dot_dimension_numbers<[1], [0], [0], [1], [0, 0, 1, 1], [], []>} : vector<2x32xf32>, vector<32x512xf32>, vector<2x512xf32> -> vector<2x512xf32>
    %c0_97 = arith.constant 0 : index
    %c0_98 = arith.constant 0 : index
    %314 = vector.load %arg11[%c0_97, %c0_98] : memref<512x256xf32, #tpu.memory_space<vmem>>, vector<512x256xf32>
    %cst_99 = arith.constant dense<0.000000e+00> : vector<2x256xf32>
    %315 = tpu.matmul %313, %314, %cst_99 {dimension_numbers = #tpu.dot_dimension_numbers<[1], [0], [0], [1], [0, 0, 1, 1], [], []>} : vector<2x512xf32>, vector<512x256xf32>, vector<2x256xf32> -> vector<2x256xf32>
    %c0_100 = arith.constant 0 : index
    %c0_101 = arith.constant 0 : index
    %316 = vector.load %arg12[%c0_100, %c0_101] : memref<1x256xf32, #tpu.memory_space<vmem>>, vector<1x256xf32>
    %317 = vector.broadcast %316 : vector<1x256xf32> to vector<2x256xf32>
    %318 = arith.addf %315, %317 : vector<2x256xf32>
    %cst_102 = arith.constant 0.000000e+00 : f32
    %319 = vector.broadcast %cst_102 : f32 to vector<2x256xf32>
    %320 = arith.maximumf %318, %319 : vector<2x256xf32>
    %c0_103 = arith.constant 0 : index
    %c0_104 = arith.constant 0 : index
    %321 = vector.load %arg13[%c0_103, %c0_104] : memref<256x128xf32, #tpu.memory_space<vmem>>, vector<256x128xf32>
    %cst_105 = arith.constant dense<0.000000e+00> : vector<2x128xf32>
    %322 = tpu.matmul %320, %321, %cst_105 {dimension_numbers = #tpu.dot_dimension_numbers<[1], [0], [0], [1], [0, 0, 1, 1], [], []>} : vector<2x256xf32>, vector<256x128xf32>, vector<2x128xf32> -> vector<2x128xf32>
    %c0_106 = arith.constant 0 : index
    %c0_107 = arith.constant 0 : index
    %323 = vector.load %arg14[%c0_106, %c0_107] : memref<1x128xf32, #tpu.memory_space<vmem>>, vector<1x128xf32>
    %324 = vector.broadcast %323 : vector<1x128xf32> to vector<2x128xf32>
    %325 = arith.addf %322, %324 : vector<2x128xf32>
    %cst_108 = arith.constant 0.000000e+00 : f32
    %326 = vector.broadcast %cst_108 : f32 to vector<2x128xf32>
    %327 = arith.maximumf %325, %326 : vector<2x128xf32>
    %c0_109 = arith.constant 0 : index
    %c0_110 = arith.constant 0 : index
    %328 = vector.load %arg15[%c0_109, %c0_110] : memref<128x48xf32, #tpu.memory_space<vmem>>, vector<128x48xf32>
    %cst_111 = arith.constant dense<0.000000e+00> : vector<2x48xf32>
    %329 = tpu.matmul %327, %328, %cst_111 {dimension_numbers = #tpu.dot_dimension_numbers<[1], [0], [0], [1], [0, 0, 1, 1], [], []>} : vector<2x128xf32>, vector<128x48xf32>, vector<2x48xf32> -> vector<2x48xf32>
    %c0_112 = arith.constant 0 : index
    %c0_113 = arith.constant 0 : index
    %330 = vector.load %arg16[%c0_112, %c0_113] : memref<1x48xf32, #tpu.memory_space<vmem>>, vector<1x48xf32>
    %331 = vector.broadcast %330 : vector<1x48xf32> to vector<2x48xf32>
    %332 = arith.addf %329, %331 : vector<2x48xf32>
    %c0_114 = arith.constant 0 : index
    %c0_115 = arith.constant 0 : index
    %333 = vector.load %arg17[%c0_114, %c0_115] : memref<2x48xf32, #tpu.memory_space<vmem>>, vector<2x48xf32>
    tpu.vector_store %arg17[%c0_114, %c0_115], %332 {strides = array<i32>} : memref<2x48xf32, #tpu.memory_space<vmem>>, vector<2x48xf32>,
    return
  }
}

</mosaic_0001>

<llo_original>
// kernel: dgcnn_forward.1
$region0: #{dgcnn_forward.1}
  #allocation0 [shape = 'u32[]', space=smem, size = 0x4, offset = 0x4, fixed_abs, tag = 'smem constant byte address 0x4 - core index']
  #allocation1 [shape = 'u32[72,128]{1,0:T(1,128)}', space=vmem, size = 0x9000, scoped, tag = 'internal scratch']
  %s0 = inlined_call_operand.vmem [shape: f32[32,8], index: 0, kind: input, shape index: {}]
  %s1 = inlined_call_operand.vmem [shape: f32[32,32], index: 1, kind: input, shape index: {}]
  %s2 = inlined_call_operand.vmem [shape: f32[2,32], index: 2, kind: input, shape index: {}]
  %s3 = inlined_call_operand.vmem [shape: f32[8,128], index: 3, kind: input, shape index: {}]
  %s4 = inlined_call_operand.vmem [shape: f32[1,64], index: 4, kind: input, shape index: {}]
  %s5 = inlined_call_operand.vmem [shape: f32[64,256], index: 5, kind: input, shape index: {}]
  %s6 = inlined_call_operand.vmem [shape: f32[1,128], index: 6, kind: input, shape index: {}]
  %s7 = inlined_call_operand.hbm [shape: f32[128,512], index: 7, kind: input, shape index: {}]
  %s8 = inlined_call_operand.vmem [shape: f32[1,256], index: 8, kind: input, shape index: {}]
  %s9 = inlined_call_operand.hbm [shape: f32[256,1024], index: 9, kind: input, shape index: {}]
  %s10 = inlined_call_operand.vmem [shape: f32[1,512], index: 10, kind: input, shape index: {}]
  %s11 = inlined_call_operand.hbm [shape: f32[512,256], index: 11, kind: input, shape index: {}]
  %s12 = inlined_call_operand.vmem [shape: f32[1,256], index: 12, kind: input, shape index: {}]
  %s13 = inlined_call_operand.hbm [shape: f32[256,128], index: 13, kind: input, shape index: {}]
  %s14 = inlined_call_operand.vmem [shape: f32[1,128], index: 14, kind: input, shape index: {}]
  %s15 = inlined_call_operand.vmem [shape: f32[128,48], index: 15, kind: input, shape index: {}]
  %s16 = inlined_call_operand.vmem [shape: f32[1,48], index: 16, kind: input, shape index: {}]
  %s17 = inlined_call_operand.vmem [shape: f32[2,48], index: 17, kind: output, shape index: {}]
  %s18 = sld [smem:[#allocation0]]
  $region94: #{dgcnn_forward.1} parent=0
    _
  %s20 = ssub.s32 1, %s18
  %s21 = scalar_select 0, %s20, %s18
  $region1: #{dgcnn_forward.1} parent=0
    #allocation2 [shape = 'u8[262144]{0}', space=vmem, size = 0x40000, scoped, tag = 'input window, operand 7, single buffered']
    #allocation3 [shape = 's32[1]{0}', space=sflag, size = 0x4, scoped, tag = 'scoped memory for dgcnn_forward.1']
    #allocation4 [shape = 'u8[1048576]{0}', space=vmem, size = 0x100000, scoped, tag = 'input window, operand 9, single buffered']
    #allocation5 [shape = 's32[1]{0}', space=sflag, size = 0x4, scoped, tag = 'scoped memory for dgcnn_forward.1']
    #allocation6 [shape = 'u8[524288]{0}', space=vmem, size = 0x80000, scoped, tag = 'input window, operand 11, single buffered']
    #allocation7 [shape = 'u8[131072]{0}', space=vmem, size = 0x20000, scoped, tag = 'input window, operand 13, single buffered']
    #allocation8 [shape = 's32[1]{0}', space=sflag, size = 0x4, scoped, tag = 'scoped memory for dgcnn_forward.1']
    %22 = vsyncpa [#allocation3], 0
    %23 = vsyncpa [#allocation5], 0
    %24 = vsyncpa [#allocation8], 0
    // Predicated region
    $region2: #{dgcnn_forward.1} parent=1 // pred_check
      _
    $region3: #{dgcnn_forward.1} parent=1 // pred_check_branch
      %26 = sbr.rel (0) target = $region5
    $region4: #{dgcnn_forward.1} parent=1 // pred_region
      _
    $region5: #{dgcnn_forward.1} parent=1 // pred_fallthru
      _
    // Predicated region
    $region6: #{dgcnn_forward.1} parent=1 // pred_check
      _
    $region7: #{dgcnn_forward.1} parent=1 // pred_check_branch
      %28 = sbr.rel (0) target = $region9
    $region8: #{dgcnn_forward.1} parent=1 // pred_region
      _
    $region9: #{dgcnn_forward.1} parent=1 // pred_fallthru
      _
    // Predicated region
    $region10: #{dgcnn_forward.1} parent=1 // pred_check
      _
    $region11: #{dgcnn_forward.1} parent=1 // pred_check_branch
      %30 = sbr.rel (0) target = $region13
    $region12: #{dgcnn_forward.1} parent=1 // pred_region
      _
    $region13: #{dgcnn_forward.1} parent=1 // pred_fallthru
      _
    // Predicated region
    $region14: #{dgcnn_forward.1} parent=1 // pred_check
      _
    $region15: #{dgcnn_forward.1} parent=1 // pred_check_branch
      %32 = sbr.rel (0) target = $region17
    $region16: #{dgcnn_forward.1} parent=1 // pred_region
      _
    $region17: #{dgcnn_forward.1} parent=1 // pred_fallthru
      _
    // Predicated region
    $region18: #{dgcnn_forward.1} parent=1 // pred_check
      _
    $region19: #{dgcnn_forward.1} parent=1 // pred_check_branch
      %34 = sbr.rel (0) target = $region21
    $region20: #{dgcnn_forward.1} parent=1 // pred_region
      _
    $region21: #{dgcnn_forward.1} parent=1 // pred_fallthru
      _
    // Predicated region
    $region22: #{dgcnn_forward.1} parent=1 // pred_check
      _
    $region23: #{dgcnn_forward.1} parent=1 // pred_check_branch
      %36 = sbr.rel (0) target = $region25
    $region24: #{dgcnn_forward.1} parent=1 // pred_region
      _
    $region25: #{dgcnn_forward.1} parent=1 // pred_fallthru
      _
    // Predicated region
    $region26: #{dgcnn_forward.1} parent=1 // pred_check
      _
    $region27: #{dgcnn_forward.1} parent=1 // pred_check_branch
      %38 = sbr.rel (0) target = $region29
    $region28: #{dgcnn_forward.1} parent=1 // pred_region
      _
    $region29: #{dgcnn_forward.1} parent=1 // pred_fallthru
      _
    // Predicated region
    $region30: #{dgcnn_forward.1} parent=1 // pred_check
      _
    $region31: #{dgcnn_forward.1} parent=1 // pred_check_branch
      %40 = sbr.rel (0) target = $region33
    $region32: #{dgcnn_forward.1} parent=1 // pred_region
      %42 = vsyncadd [#allocation3], 0
      %s43 = sshll.u32 %s7, 4
      %s44 = int_to_ptr.hbm [resolvable:$true] %s43
      %s45 = sshll.u32 [#allocation2], 4
      %s46 = int_to_ptr.vmem [resolvable:$true] %s45
      %51 = dma.hbm_to_vmem [thread:$0]  %s44, 8192, %s46, [#allocation3], 512, 512, 32
    $region33: #{dgcnn_forward.1} parent=1 // pred_fallthru
      _
    // Predicated region
    $region34: #{dgcnn_forward.1} parent=1 // pred_check
      _
    $region35: #{dgcnn_forward.1} parent=1 // pred_check_branch
      %53 = sbr.rel (0) target = $region37
    $region36: #{dgcnn_forward.1} parent=1 // pred_region
      _
    $region37: #{dgcnn_forward.1} parent=1 // pred_fallthru
      _
    // Predicated region
    $region38: #{dgcnn_forward.1} parent=1 // pred_check
      _
    $region39: #{dgcnn_forward.1} parent=1 // pred_check_branch
      %55 = sbr.rel (0) target = $region41
    $region40: #{dgcnn_forward.1} parent=1 // pred_region
      %57 = vsyncadd [#allocation5], 0
      %s58 = sshll.u32 %s9, 4
      %s59 = int_to_ptr.hbm [resolvable:$true] %s58
      %s60 = sshll.u32 [#allocation4], 4
      %s61 = int_to_ptr.vmem [resolvable:$true] %s60
      %66 = dma.hbm_to_vmem [thread:$0]  %s59, 32768, %s61, [#allocation5], 1024, 1024, 64
    $region41: #{dgcnn_forward.1} parent=1 // pred_fallthru
      _
    // Predicated region
    $region42: #{dgcnn_forward.1} parent=1 // pred_check
      _
    $region43: #{dgcnn_forward.1} parent=1 // pred_check_branch
      %68 = sbr.rel (0) target = $region45
    $region44: #{dgcnn_forward.1} parent=1 // pred_region
      _
    $region45: #{dgcnn_forward.1} parent=1 // pred_fallthru
      _
    // Predicated region
    $region46: #{dgcnn_forward.1} parent=1 // pred_check
      _
    $region47: #{dgcnn_forward.1} parent=1 // pred_check_branch
      %70 = sbr.rel (0) target = $region49
    $region48: #{dgcnn_forward.1} parent=1 // pred_region
      %72 = vsyncadd [#allocation5], 0
      %s73 = sshll.u32 %s11, 4
      %s74 = int_to_ptr.hbm [resolvable:$true] %s73
      %s75 = sshll.u32 [#allocation6], 4
      %s76 = int_to_ptr.vmem [resolvable:$true] %s75
      %81 = dma.hbm_to_vmem [thread:$0]  %s74, 16384, %s76, [#allocation5], 256, 256, 16
    $region49: #{dgcnn_forward.1} parent=1 // pred_fallthru
      _
    // Predicated region
    $region50: #{dgcnn_forward.1} parent=1 // pred_check
      _
    $region51: #{dgcnn_forward.1} parent=1 // pred_check_branch
      %83 = sbr.rel (0) target = $region53
    $region52: #{dgcnn_forward.1} parent=1 // pred_region
      _
    $region53: #{dgcnn_forward.1} parent=1 // pred_fallthru
      _
    // Predicated region
    $region54: #{dgcnn_forward.1} parent=1 // pred_check
      _
    $region55: #{dgcnn_forward.1} parent=1 // pred_check_branch
      %85 = sbr.rel (0) target = $region57
    $region56: #{dgcnn_forward.1} parent=1 // pred_region
      %87 = vsyncadd [#allocation8], 0
      %s88 = sshll.u32 %s13, 4
      %s89 = int_to_ptr.hbm [resolvable:$true] %s88
      %s90 = sshll.u32 [#allocation7], 4
      %s91 = int_to_ptr.vmem [resolvable:$true] %s90
      %96 = dma.hbm_to_vmem [thread:$0]  %s89, 4096, %s91, [#allocation8], 128, 128, 8
    $region57: #{dgcnn_forward.1} parent=1 // pred_fallthru
      _
    // Predicated region
    $region58: #{dgcnn_forward.1} parent=1 // pred_check
      _
    $region59: #{dgcnn_forward.1} parent=1 // pred_check_branch
      %98 = sbr.rel (0) target = $region61
    $region60: #{dgcnn_forward.1} parent=1 // pred_region
      _
    $region61: #{dgcnn_forward.1} parent=1 // pred_fallthru
      _
    // Predicated region
    $region62: #{dgcnn_forward.1} parent=1 // pred_check
      _
    $region63: #{dgcnn_forward.1} parent=1 // pred_check_branch
      %100 = sbr.rel (0) target = $region65
    $region64: #{dgcnn_forward.1} parent=1 // pred_region
      _
    $region65: #{dgcnn_forward.1} parent=1 // pred_fallthru
      _
    // Predicated region
    $region66: #{dgcnn_forward.1} parent=1 // pred_check
      _
    $region67: #{dgcnn_forward.1} parent=1 // pred_check_branch
      %102 = sbr.rel (0) target = $region69
    $region68: #{dgcnn_forward.1} parent=1 // pred_region
      _
    $region69: #{dgcnn_forward.1} parent=1 // pred_fallthru
      _
    // Predicated region
    $region70: #{dgcnn_forward.1} parent=1 // pred_check
      _
    $region71: #{dgcnn_forward.1} parent=1 // pred_check_branch
      %104 = sbr.rel (0) target = $region73
    $region72: #{dgcnn_forward.1} parent=1 // pred_region
      %106 = dma.done [#allocation3], 8192
    $region73: #{dgcnn_forward.1} parent=1 // pred_fallthru
      _
    // Predicated region
    $region74: #{dgcnn_forward.1} parent=1 // pred_check
      _
    $region75: #{dgcnn_forward.1} parent=1 // pred_check_branch
      %108 = sbr.rel (0) target = $region77
    $region76: #{dgcnn_forward.1} parent=1 // pred_region
      %110 = dma.done [#allocation5], 32768
    $region77: #{dgcnn_forward.1} parent=1 // pred_fallthru
      _
    // Predicated region
    $region78: #{dgcnn_forward.1} parent=1 // pred_check
      _
    $region79: #{dgcnn_forward.1} parent=1 // pred_check_branch
      %112 = sbr.rel (0) target = $region81
    $region80: #{dgcnn_forward.1} parent=1 // pred_region
      %114 = dma.done [#allocation5], 16384
    $region81: #{dgcnn_forward.1} parent=1 // pred_fallthru
      _
    // Predicated region
    $region82: #{dgcnn_forward.1} parent=1 // pred_check
      _
    $region83: #{dgcnn_forward.1} parent=1 // pred_check_branch
      %116 = sbr.rel (0) target = $region85
    $region84: #{dgcnn_forward.1} parent=1 // pred_region
      %118 = dma.done [#allocation8], 4096
    $region85: #{dgcnn_forward.1} parent=1 // pred_fallthru
      _
    %v119 = vlaneseq
    %v120 = vand.u32 %v119, 127
    %v121 = vcvt.s32.f32 %v120
    %v122 = vld [vmem:[%s1] sm:$0xff]
    %v123 = vld [vmem:[%s1 + $0x8] sm:$0xff]
    %v124 = vld [vmem:[%s1 + $0x10] sm:$0xff]
    %v125 = vld [vmem:[%s1 + $0x18] sm:$0xff]
    %v126 = vld [vmem:[%s0] sm:$0xff]
    %v127 = vld [vmem:[%s0 + $0x8] sm:$0xff]
    %v128 = vld [vmem:[%s0 + $0x10] sm:$0xff]
    %v129 = vld [vmem:[%s0 + $0x18] sm:$0xff]
    %v130 = vmul.f32 %v126, %v126
    %v131 = vmul.f32 %v127, %v127
    %v132 = vmul.f32 %v128, %v128
    %v133 = vmul.f32 %v129, %v129
    %vm134 = vcmask 64512
    %v135 = vsel %vm134, %v130, 0.0
    %136 = vadd.xlane.f32.xlu0 %v135
    %v137 = vpop.xlane.xlu0 %136
    %v138 = vsel %vm134, %v131, 0.0
    %139 = vadd.xlane.f32.xlu0 %v138
    %v140 = vpop.xlane.xlu0 %139
    %v141 = vsel %vm134, %v132, 0.0
    %142 = vadd.xlane.f32.xlu0 %v141
    %v143 = vpop.xlane.xlu0 %142
    %v144 = vsel %vm134, %v133, 0.0
    %145 = vadd.xlane.f32.xlu0 %v144
    %v146 = vpop.xlane.xlu0 %145
    %147 = vxpose.xlu0.b32.start [1/16] %v137, 128
    %148 = vxpose.xlu0.b32.cont [2/16] %v140, 128
    %149 = vxpose.xlu0.b32.cont [3/16] %v143, 128
    %150 = vxpose.xlu0.b32.cont [4/16] %v146, 128
    %151 = vxpose.xlu0.b32.cont [5/16] 0.0, 128
    %152 = vxpose.xlu0.b32.cont [6/16] 0.0, 128
    %153 = vxpose.xlu0.b32.cont [7/16] 0.0, 128
    %154 = vxpose.xlu0.b32.cont [8/16] 0.0, 128
    %155 = vxpose.xlu0.b32.cont [9/16] 0.0, 128
    %156 = vxpose.xlu0.b32.cont [10/16] 0.0, 128
    %157 = vxpose.xlu0.b32.cont [11/16] 0.0, 128
    %158 = vxpose.xlu0.b32.cont [12/16] 0.0, 128
    %159 = vxpose.xlu0.b32.cont [13/16] 0.0, 128
    %160 = vxpose.xlu0.b32.cont [14/16] 0.0, 128
    %161 = vxpose.xlu0.b32.cont [15/16] 0.0, 128
    %162 = vxpose.xlu0.b32.end [16/16] 0.0, 128
    %v163 = vpop.trf.xlu0
    %v164 = vpop.trf.xlu0
    %v165 = vpop.trf.xlu0
    %v166 = vpop.trf.xlu0
    %v167 = vpop.trf.xlu0
    %v168 = vpop.trf.xlu0
    %v169 = vpop.trf.xlu0
    %v170 = vpop.trf.xlu0
    %v171 = vpop.trf.xlu0
    %v172 = vpop.trf.xlu0
    %v173 = vpop.trf.xlu0
    %v174 = vpop.trf.xlu0
    %v175 = vpop.trf.xlu0
    %v176 = vpop.trf.xlu0
    %v177 = vpop.trf.xlu0
    %v178 = vpop.trf.xlu0
    %v180 = vsel %vm134, %v126, 0
    %v183 = vsel %vm134, %v127, 0
    %v186 = vsel %vm134, %v128, 0
    %v189 = vsel %vm134, %v129, 0
    %191 = vmatpush.xpose.msra.mxu0 0.0
    %192 = vmatpush.xpose.msra.mxu0 0.0
    %193 = vmatpush.xpose.msra.mxu0 0.0
    %194 = vmatpush.xpose.msra.mxu0 0.0
    %195 = vmatpush.xpose.msra.mxu0 0.0
    %196 = vmatpush.xpose.msra.mxu0 0.0
    %197 = vmatpush.xpose.msra.mxu0 0.0
    %198 = vmatpush.xpose.msra.mxu0 0.0
    %199 = vmatpush.xpose.msra.mxu0 0.0
    %200 = vmatpush.xpose.msra.mxu0 0.0
    %201 = vmatpush.xpose.msra.mxu0 0.0
    %202 = vmatpush.xpose.msra.mxu0 0.0
    %203 = vmatpush.xpose.msra.mxu0 %v189
    %204 = vmatpush.xpose.msra.mxu0 %v186
    %205 = vmatpush.xpose.msra.mxu0 %v183
    %206 = vmatpush.xpose.msra.mxu0 %v180
    %207 = vmatmul.f32.gmra.mxu0 %v180
    %v208 = vpop.f32.mrf.mxu0
    %v209 = vadd.f32 0.0, %v208
    %210 = vmatmul.f32.gmra.mxu0 %v183
    %v211 = vpop.f32.mrf.mxu0
    %v212 = vadd.f32 0.0, %v211
    %213 = vmatmul.f32.gmra.mxu0 %v186
    %v214 = vpop.f32.mrf.mxu0
    %v215 = vadd.f32 0.0, %v214
    %216 = vmatmul.f32.gmra.mxu0 %v189
    %v217 = vpop.f32.mrf.mxu0
    %v218 = vadd.f32 0.0, %v217
    %219 = vdwg.mxu0
    %v220 = vmul.f32 %v209, 2.0
    %v221 = vmul.f32 %v212, 2.0
    %v222 = vmul.f32 %v215, 2.0
    %v223 = vmul.f32 %v218, 2.0
    %v224 = vperm.slane %v163, 0
    %v225 = vsub.f32 %v224, %v220
    %v226 = vsub.f32 %v224, %v221
    %v227 = vsub.f32 %v224, %v222
    %v228 = vsub.f32 %v224, %v223
    %v229 = vadd.f32 %v225, %v122
    %v230 = vadd.f32 %v226, %v123
    %v231 = vadd.f32 %v227, %v124
    %v232 = vadd.f32 %v228, %v125
    %v233 = vadd.f32 %v229, 0.0
    %v234 = vadd.f32 %v230, 0.0
    %v235 = vadd.f32 %v231, 0.0
    %v236 = vadd.f32 %v232, 0.0
    %vm237 = vcmask 261120
    %v238 = vsel %vm237, %v233, inf
    %239 = vmin.xlane.f32.xlu0 %v238
    %v240 = vpop.xlane.xlu0 %239
    %v241 = vsel %vm237, %v234, inf
    %242 = vmin.xlane.f32.xlu0 %v241
    %v243 = vpop.xlane.xlu0 %242
    %v244 = vsel %vm237, %v235, inf
    %245 = vmin.xlane.f32.xlu0 %v244
    %v246 = vpop.xlane.xlu0 %245
    %v247 = vsel %vm237, %v236, inf
    %248 = vmin.xlane.f32.xlu0 %v247
    %v249 = vpop.xlane.xlu0 %248
    %vm250 = vcmp.le.f32.partialorder %v233, %v240
    %vm251 = vcmp.le.f32.partialorder %v234, %v243
    %vm252 = vcmp.le.f32.partialorder %v235, %v246
    %vm253 = vcmp.le.f32.partialorder %v236, %v249
    %v254 = vsel %vm250, %v121, 32.0
    %v255 = vsel %vm251, %v121, 32.0
    %v256 = vsel %vm252, %v121, 32.0
    %v257 = vsel %vm253, %v121, 32.0
    %v258 = vsel %vm237, %v254, inf
    %259 = vmin.xlane.f32.xlu0 %v258
    %v260 = vpop.xlane.xlu0 %259
    %v261 = vsel %vm237, %v255, inf
    %262 = vmin.xlane.f32.xlu0 %v261
    %v263 = vpop.xlane.xlu0 %262
    %v264 = vsel %vm237, %v256, inf
    %265 = vmin.xlane.f32.xlu0 %v264
    %v266 = vpop.xlane.xlu0 %265
    %v267 = vsel %vm237, %v257, inf
    %268 = vmin.xlane.f32.xlu0 %v267
    %v269 = vpop.xlane.xlu0 %268
    %vm270 = vcmp.eq.f32.partialorder %v121, %v260
    %vm271 = vcmp.eq.f32.partialorder %v121, %v263
    %vm272 = vcmp.eq.f32.partialorder %v121, %v266
    %vm273 = vcmp.eq.f32.partialorder %v121, %v269
    %v274 = vsel %vm270, 1, 0
    %v275 = vsel %vm271, 1, 0
    %v276 = vsel %vm272, 1, 0
    %v277 = vsel %vm273, 1, 0
    %v278 = vcvt.s32.f32 %v274
    %v279 = vcvt.s32.f32 %v275
    %v280 = vcvt.s32.f32 %v276
    %v281 = vcvt.s32.f32 %v277
    %v282 = vadd.f32 %v278, 0.0
    %v283 = vadd.f32 %v279, 0.0
    %v284 = vadd.f32 %v280, 0.0
    %v285 = vadd.f32 %v281, 0.0
    %v286 = vmul.f32 %v282, 1e+09
    %v287 = vmul.f32 %v283, 1e+09
    %v288 = vmul.f32 %v284, 1e+09
    %v289 = vmul.f32 %v285, 1e+09
    %v290 = vadd.f32 %v229, %v286
    %v291 = vadd.f32 %v230, %v287
    %v292 = vadd.f32 %v231, %v288
    %v293 = vadd.f32 %v232, %v289
    %v294 = vsel %vm237, %v290, inf
    %295 = vmin.xlane.f32.xlu0 %v294
    %v296 = vpop.xlane.xlu0 %295
    %v297 = vsel %vm237, %v291, inf
    %298 = vmin.xlane.f32.xlu0 %v297
    %v299 = vpop.xlane.xlu0 %298
    %v300 = vsel %vm237, %v292, inf
    %301 = vmin.xlane.f32.xlu0 %v300
    %v302 = vpop.xlane.xlu0 %301
    %v303 = vsel %vm237, %v293, inf
    %304 = vmin.xlane.f32.xlu0 %v303
    %v305 = vpop.xlane.xlu0 %304
    %vm306 = vcmp.le.f32.partialorder %v290, %v296
    %vm307 = vcmp.le.f32.partialorder %v291, %v299
    %vm308 = vcmp.le.f32.partialorder %v292, %v302
    %vm309 = vcmp.le.f32.partialorder %v293, %v305
    %v310 = vsel %vm306, %v121, 32.0
    %v311 = vsel %vm307, %v121, 32.0
    %v312 = vsel %vm308, %v121, 32.0
    %v313 = vsel %vm309, %v121, 32.0
    %v314 = vsel %vm237, %v310, inf
    %315 = vmin.xlane.f32.xlu0 %v314
    %v316 = vpop.xlane.xlu0 %315
    %v317 = vsel %vm237, %v311, inf
    %318 = vmin.xlane.f32.xlu0 %v317
    %v319 = vpop.xlane.xlu0 %318
    %v320 = vsel %vm237, %v312, inf
    %321 = vmin.xlane.f32.xlu0 %v320
    %v322 = vpop.xlane.xlu0 %321
    %v323 = vsel %vm237, %v313, inf
    %324 = vmin.xlane.f32.xlu0 %v323
    %v325 = vpop.xlane.xlu0 %324
    %vm326 = vcmp.eq.f32.partialorder %v121, %v316
    %vm327 = vcmp.eq.f32.partialorder %v121, %v319
    %vm328 = vcmp.eq.f32.partialorder %v121, %v322
    %vm329 = vcmp.eq.f32.partialorder %v121, %v325
    %v330 = vsel %vm326, 1, 0
    %v331 = vsel %vm327, 1, 0
    %v332 = vsel %vm328, 1, 0
    %v333 = vsel %vm329, 1, 0
    %v334 = vcvt.s32.f32 %v330
    %v335 = vcvt.s32.f32 %v331
    %v336 = vcvt.s32.f32 %v332
    %v337 = vcvt.s32.f32 %v333
    %v338 = vadd.f32 %v282, %v334
    %v339 = vadd.f32 %v283, %v335
    %v340 = vadd.f32 %v284, %v336
    %v341 = vadd.f32 %v285, %v337
    %v342 = vmul.f32 %v338, 1e+09
    %v343 = vmul.f32 %v339, 1e+09
    %v344 = vmul.f32 %v340, 1e+09
    %v345 = vmul.f32 %v341, 1e+09
    %v346 = vadd.f32 %v229, %v342
    %v347 = vadd.f32 %v230, %v343
    %v348 = vadd.f32 %v231, %v344
    %v349 = vadd.f32 %v232, %v345
    %v350 = vsel %vm237, %v346, inf
    %351 = vmin.xlane.f32.xlu0 %v350
    %v352 = vpop.xlane.xlu0 %351
    %v353 = vsel %vm237, %v347, inf
    %354 = vmin.xlane.f32.xlu0 %v353
    %v355 = vpop.xlane.xlu0 %354
    %v356 = vsel %vm237, %v348, inf
    %357 = vmin.xlane.f32.xlu0 %v356
    %v358 = vpop.xlane.xlu0 %357
    %v359 = vsel %vm237, %v349, inf
    %360 = vmin.xlane.f32.xlu0 %v359
    %v361 = vpop.xlane.xlu0 %360
    %vm362 = vcmp.le.f32.partialorder %v346, %v352
    %vm363 = vcmp.le.f32.partialorder %v347, %v355
    %vm364 = vcmp.le.f32.partialorder %v348, %v358
    %vm365 = vcmp.le.f32.partialorder %v349, %v361
    %v366 = vsel %vm362, %v121, 32.0
    %v367 = vsel %vm363, %v121, 32.0
    %v368 = vsel %vm364, %v121, 32.0
    %v369 = vsel %vm365, %v121, 32.0
    %v370 = vsel %vm237, %v366, inf
    %371 = vmin.xlane.f32.xlu0 %v370
    %v372 = vpop.xlane.xlu0 %371
    %v373 = vsel %vm237, %v367, inf
    %374 = vmin.xlane.f32.xlu0 %v373
    %v375 = vpop.xlane.xlu0 %374
    %v376 = vsel %vm237, %v368, inf
    %377 = vmin.xlane.f32.xlu0 %v376
    %v378 = vpop.xlane.xlu0 %377
    %v379 = vsel %vm237, %v369, inf
    %380 = vmin.xlane.f32.xlu0 %v379
    %v381 = vpop.xlane.xlu0 %380
    %vm382 = vcmp.eq.f32.partialorder %v121, %v372
    %vm383 = vcmp.eq.f32.partialorder %v121, %v375
    %vm384 = vcmp.eq.f32.partialorder %v121, %v378
    %vm385 = vcmp.eq.f32.partialorder %v121, %v381
    %v386 = vsel %vm382, 1, 0
    %v387 = vsel %vm383, 1, 0
    %v388 = vsel %vm384, 1, 0
    %v389 = vsel %vm385, 1, 0
    %v390 = vcvt.s32.f32 %v386
    %v391 = vcvt.s32.f32 %v387
    %v392 = vcvt.s32.f32 %v388
    %v393 = vcvt.s32.f32 %v389
    %v394 = vld [vmem:[%s3] sm:$0xff]
    %395 = vmatpush.msra.mxu0 0.0
    %396 = vmatpush.msra.mxu0 0.0
    %397 = vmatpush.msra.mxu0 0.0
    %398 = vmatpush.msra.mxu0 0.0
    %399 = vmatpush.msra.mxu0 0.0
    %400 = vmatpush.msra.mxu0 0.0
    %401 = vmatpush.msra.mxu0 0.0
    %402 = vmatpush.msra.mxu0 0.0
    %403 = vmatpush.msra.mxu0 0.0
    %404 = vmatpush.msra.mxu0 0.0
    %405 = vmatpush.msra.mxu0 0.0
    %406 = vmatpush.msra.mxu0 0.0
    %407 = vmatpush.msra.mxu0 0.0
    %408 = vmatpush.msra.mxu0 0.0
    %409 = vmatpush.msra.mxu0 0.0
    %410 = vmatpush.msra.mxu0 %v394
    %411 = vmatmul.f32.gmra.mxu0 %v180
    %v412 = vpop.f32.mrf.mxu0
    %v413 = vadd.f32 0.0, %v412
    %414 = vmatmul.f32.gmra.mxu0 %v183
    %v415 = vpop.f32.mrf.mxu0
    %v416 = vadd.f32 0.0, %v415
    %417 = vmatmul.f32.gmra.mxu0 %v186
    %v418 = vpop.f32.mrf.mxu0
    %v419 = vadd.f32 0.0, %v418
    %420 = vmatmul.f32.gmra.mxu0 %v189
    %v421 = vpop.f32.mrf.mxu0
    %v422 = vadd.f32 0.0, %v421
    %423 = vdwg.mxu0
    %v424 = vld [vmem:[%s4] sm:$0x1]
    %v426 = vperm.slane %v424, 0
    %v428 = vadd.f32 %v413, %v426
    %v429 = vadd.f32 %v416, %v426
    %v430 = vadd.f32 %v419, %v426
    %v431 = vadd.f32 %v422, %v426
    %436 = vrot.lane.b32.xlu0 %v413, 64
    %v437 = vpop.permute.xlu0 %436
    %438 = vrot.lane.b32.xlu0 %v416, 64
    %v439 = vpop.permute.xlu0 %438
    %440 = vrot.lane.b32.xlu0 %v419, 64
    %v441 = vpop.permute.xlu0 %440
    %442 = vrot.lane.b32.xlu0 %v422, 64
    %v443 = vpop.permute.xlu0 %442
    %v449 = vsel %vm237, %v278, 0
    %v452 = vsel %vm237, %v279, 0
    %v455 = vsel %vm237, %v280, 0
    %v458 = vsel %vm237, %v281, 0
    %v461 = vsel %vm237, %v334, 0
    %v464 = vsel %vm237, %v335, 0
    %v467 = vsel %vm237, %v336, 0
    %v470 = vsel %vm237, %v337, 0
    %v473 = vsel %vm237, %v390, 0
    %v476 = vsel %vm237, %v391, 0
    %v479 = vsel %vm237, %v392, 0
    %v482 = vsel %vm237, %v393, 0
    %484 = vmatpush.msra.mxu0 0.0
    %485 = vmatpush.msra.mxu0 0.0
    %486 = vmatpush.msra.mxu0 0.0
    %487 = vmatpush.msra.mxu0 0.0
    %488 = vmatpush.msra.mxu0 0.0
    %489 = vmatpush.msra.mxu0 0.0
    %490 = vmatpush.msra.mxu0 0.0
    %491 = vmatpush.msra.mxu0 0.0
    %492 = vmatpush.msra.mxu0 0.0
    %493 = vmatpush.msra.mxu0 0.0
    %494 = vmatpush.msra.mxu0 0.0
    %495 = vmatpush.msra.mxu0 0.0
    %496 = vmatpush.msra.mxu0 %v443
    %497 = vmatpush.msra.mxu0 %v441
    %498 = vmatpush.msra.mxu0 %v439
    %499 = vmatpush.msra.mxu0 %v437
    %500 = vmatmul.f32.gmra.mxu0 %v449
    %v501 = vpop.f32.mrf.mxu0
    %v502 = vadd.f32 0.0, %v501
    %503 = vmatmul.f32.gmra.mxu0 %v452
    %v504 = vpop.f32.mrf.mxu0
    %v505 = vadd.f32 0.0, %v504
    %506 = vmatmul.f32.gmra.mxu0 %v455
    %v507 = vpop.f32.mrf.mxu0
    %v508 = vadd.f32 0.0, %v507
    %509 = vmatmul.f32.gmra.mxu0 %v458
    %v510 = vpop.f32.mrf.mxu0
    %v511 = vadd.f32 0.0, %v510
    %512 = vmatmul.f32.gmra.mxu0 %v461
    %v513 = vpop.f32.mrf.mxu0
    %v514 = vadd.f32 0.0, %v513
    %515 = vmatmul.f32.gmra.mxu0 %v464
    %v516 = vpop.f32.mrf.mxu0
    %v517 = vadd.f32 0.0, %v516
    %518 = vmatmul.f32.gmra.mxu0 %v467
    %v519 = vpop.f32.mrf.mxu0
    %v520 = vadd.f32 0.0, %v519
    %521 = vmatmul.f32.gmra.mxu0 %v470
    %v522 = vpop.f32.mrf.mxu0
    %v523 = vadd.f32 0.0, %v522
    %524 = vmatmul.f32.gmra.mxu0 %v473
    %v525 = vpop.f32.mrf.mxu0
    %v526 = vadd.f32 0.0, %v525
    %527 = vmatmul.f32.gmra.mxu0 %v476
    %v528 = vpop.f32.mrf.mxu0
    %v529 = vadd.f32 0.0, %v528
    %530 = vmatmul.f32.gmra.mxu0 %v479
    %v531 = vpop.f32.mrf.mxu0
    %v532 = vadd.f32 0.0, %v531
    %533 = vmatmul.f32.gmra.mxu0 %v482
    %v534 = vpop.f32.mrf.mxu0
    %v535 = vadd.f32 0.0, %v534
    %536 = vdwg.mxu0
    %541 = vrot.lane.b32.xlu0 %v502, 64
    %v542 = vpop.permute.xlu0 %541
    %543 = vrot.lane.b32.xlu0 %v505, 64
    %v544 = vpop.permute.xlu0 %543
    %545 = vrot.lane.b32.xlu0 %v508, 64
    %v546 = vpop.permute.xlu0 %545
    %547 = vrot.lane.b32.xlu0 %v511, 64
    %v548 = vpop.permute.xlu0 %547
    %v553 = vmax.f32 %v413, %v542
    %v554 = vmax.f32 %v416, %v544
    %v555 = vmax.f32 %v419, %v546
    %v556 = vmax.f32 %v422, %v548
    %561 = vrot.lane.b32.xlu0 %v514, 64
    %v562 = vpop.permute.xlu0 %561
    %563 = vrot.lane.b32.xlu0 %v517, 64
    %v564 = vpop.permute.xlu0 %563
    %565 = vrot.lane.b32.xlu0 %v520, 64
    %v566 = vpop.permute.xlu0 %565
    %567 = vrot.lane.b32.xlu0 %v523, 64
    %v568 = vpop.permute.xlu0 %567
    %v573 = vmax.f32 %v553, %v562
    %v574 = vmax.f32 %v554, %v564
    %v575 = vmax.f32 %v555, %v566
    %v576 = vmax.f32 %v556, %v568
    %581 = vrot.lane.b32.xlu0 %v526, 64
    %v582 = vpop.permute.xlu0 %581
    %583 = vrot.lane.b32.xlu0 %v529, 64
    %v584 = vpop.permute.xlu0 %583
    %585 = vrot.lane.b32.xlu0 %v532, 64
    %v586 = vpop.permute.xlu0 %585
    %587 = vrot.lane.b32.xlu0 %v535, 64
    %v588 = vpop.permute.xlu0 %587
    %v593 = vmax.f32 %v573, %v582
    %v594 = vmax.f32 %v574, %v584
    %v595 = vmax.f32 %v575, %v586
    %v596 = vmax.f32 %v576, %v588
    %601 = vrot.lane.b32.xlu0 %v428, 64
    %v602 = vpop.permute.xlu0 %601
    %603 = vrot.lane.b32.xlu0 %v429, 64
    %v604 = vpop.permute.xlu0 %603
    %605 = vrot.lane.b32.xlu0 %v430, 64
    %v606 = vpop.permute.xlu0 %605
    %607 = vrot.lane.b32.xlu0 %v431, 64
    %v608 = vpop.permute.xlu0 %607
    %v613 = vadd.f32 %v593, %v602
    %v614 = vadd.f32 %v594, %v604
    %v615 = vadd.f32 %v595, %v606
    %v616 = vadd.f32 %v596, %v608
    %v617 = vmax.f32 %v613, 0.0
    %v618 = vmax.f32 %v614, 0.0
    %v619 = vmax.f32 %v615, 0.0
    %v620 = vmax.f32 %v616, 0.0
    %v621 = vmul.f32 %v617, %v617
    %v622 = vmul.f32 %v618, %v618
    %v623 = vmul.f32 %v619, %v619
    %v624 = vmul.f32 %v620, %v620
    %629 = vrot.lane.b32.xlu0 %v621, 64
    %v630 = vpop.permute.xlu0 %629
    %631 = vrot.lane.b32.xlu0 %v622, 64
    %v632 = vpop.permute.xlu0 %631
    %633 = vrot.lane.b32.xlu0 %v623, 64
    %v634 = vpop.permute.xlu0 %633
    %635 = vrot.lane.b32.xlu0 %v624, 64
    %v636 = vpop.permute.xlu0 %635
    %vm641 = vcmask 523264
    %v642 = vsel %vm641, %v630, 0.0
    %643 = vadd.xlane.f32.xlu0 %v642
    %v644 = vpop.xlane.xlu0 %643
    %v645 = vsel %vm641, %v632, 0.0
    %646 = vadd.xlane.f32.xlu0 %v645
    %v647 = vpop.xlane.xlu0 %646
    %v648 = vsel %vm641, %v634, 0.0
    %649 = vadd.xlane.f32.xlu0 %v648
    %v650 = vpop.xlane.xlu0 %649
    %v651 = vsel %vm641, %v636, 0.0
    %652 = vadd.xlane.f32.xlu0 %v651
    %v653 = vpop.xlane.xlu0 %652
    %654 = vxpose.xlu0.b32.start [1/16] %v644, 128
    %655 = vxpose.xlu0.b32.cont [2/16] %v647, 128
    %656 = vxpose.xlu0.b32.cont [3/16] %v650, 128
    %657 = vxpose.xlu0.b32.cont [4/16] %v653, 128
    %658 = vxpose.xlu0.b32.cont [5/16] 0.0, 128
    %659 = vxpose.xlu0.b32.cont [6/16] 0.0, 128
    %660 = vxpose.xlu0.b32.cont [7/16] 0.0, 128
    %661 = vxpose.xlu0.b32.cont [8/16] 0.0, 128
    %662 = vxpose.xlu0.b32.cont [9/16] 0.0, 128
    %663 = vxpose.xlu0.b32.cont [10/16] 0.0, 128
    %664 = vxpose.xlu0.b32.cont [11/16] 0.0, 128
    %665 = vxpose.xlu0.b32.cont [12/16] 0.0, 128
    %666 = vxpose.xlu0.b32.cont [13/16] 0.0, 128
    %667 = vxpose.xlu0.b32.cont [14/16] 0.0, 128
    %668 = vxpose.xlu0.b32.cont [15/16] 0.0, 128
    %669 = vxpose.xlu0.b32.end [16/16] 0.0, 128
    %v670 = vpop.trf.xlu0
    %v671 = vpop.trf.xlu0
    %v672 = vpop.trf.xlu0
    %v673 = vpop.trf.xlu0
    %v674 = vpop.trf.xlu0
    %v675 = vpop.trf.xlu0
    %v676 = vpop.trf.xlu0
    %v677 = vpop.trf.xlu0
    %v678 = vpop.trf.xlu0
    %v679 = vpop.trf.xlu0
    %v680 = vpop.trf.xlu0
    %v681 = vpop.trf.xlu0
    %v682 = vpop.trf.xlu0
    %v683 = vpop.trf.xlu0
    %v684 = vpop.trf.xlu0
    %v685 = vpop.trf.xlu0
    %690 = vrot.lane.b32.xlu0 %v617, 64
    %v691 = vpop.permute.xlu0 %690
    %692 = vrot.lane.b32.xlu0 %v618, 64
    %v693 = vpop.permute.xlu0 %692
    %694 = vrot.lane.b32.xlu0 %v619, 64
    %v695 = vpop.permute.xlu0 %694
    %696 = vrot.lane.b32.xlu0 %v620, 64
    %v697 = vpop.permute.xlu0 %696
    %v698 = vsel %vm641, %v691, 0
    %v700 = vsel %vm641, %v693, 0
    %v702 = vsel %vm641, %v695, 0
    %v704 = vsel %vm641, %v697, 0
    %706 = vmatpush.xpose.msra.mxu0 0.0
    %707 = vmatpush.xpose.msra.mxu0 0.0
    %708 = vmatpush.xpose.msra.mxu0 0.0
    %709 = vmatpush.xpose.msra.mxu0 0.0
    %710 = vmatpush.xpose.msra.mxu0 0.0
    %711 = vmatpush.xpose.msra.mxu0 0.0
    %712 = vmatpush.xpose.msra.mxu0 0.0
    %713 = vmatpush.xpose.msra.mxu0 0.0
    %714 = vmatpush.xpose.msra.mxu0 0.0
    %715 = vmatpush.xpose.msra.mxu0 0.0
    %716 = vmatpush.xpose.msra.mxu0 0.0
    %717 = vmatpush.xpose.msra.mxu0 0.0
    %718 = vmatpush.xpose.msra.mxu0 %v704
    %719 = vmatpush.xpose.msra.mxu0 %v702
    %720 = vmatpush.xpose.msra.mxu0 %v700
    %721 = vmatpush.xpose.msra.mxu0 %v698
    %722 = vmatmul.f32.gmra.mxu0 %v698
    %v723 = vpop.f32.mrf.mxu0
    %v724 = vadd.f32 0.0, %v723
    %725 = vmatmul.f32.gmra.mxu0 %v700
    %v726 = vpop.f32.mrf.mxu0
    %v727 = vadd.f32 0.0, %v726
    %728 = vmatmul.f32.gmra.mxu0 %v702
    %v729 = vpop.f32.mrf.mxu0
    %v730 = vadd.f32 0.0, %v729
    %731 = vmatmul.f32.gmra.mxu0 %v704
    %v732 = vpop.f32.mrf.mxu0
    %v733 = vadd.f32 0.0, %v732
    %734 = vdwg.mxu0
    %v735 = vmul.f32 %v724, 2.0
    %v736 = vmul.f32 %v727, 2.0
    %v737 = vmul.f32 %v730, 2.0
    %v738 = vmul.f32 %v733, 2.0
    %v739 = vperm.slane %v670, 0
    %v740 = vsub.f32 %v739, %v735
    %v741 = vsub.f32 %v739, %v736
    %v742 = vsub.f32 %v739, %v737
    %v743 = vsub.f32 %v739, %v738
    %v744 = vadd.f32 %v740, %v122
    %v745 = vadd.f32 %v741, %v123
    %v746 = vadd.f32 %v742, %v124
    %v747 = vadd.f32 %v743, %v125
    %v748 = vadd.f32 %v744, 0.0
    %v749 = vadd.f32 %v745, 0.0
    %v750 = vadd.f32 %v746, 0.0
    %v751 = vadd.f32 %v747, 0.0
    %v752 = vsel %vm237, %v748, inf
    %753 = vmin.xlane.f32.xlu0 %v752
    %v754 = vpop.xlane.xlu0 %753
    %v755 = vsel %vm237, %v749, inf
    %756 = vmin.xlane.f32.xlu0 %v755
    %v757 = vpop.xlane.xlu0 %756
    %v758 = vsel %vm237, %v750, inf
    %759 = vmin.xlane.f32.xlu0 %v758
    %v760 = vpop.xlane.xlu0 %759
    %v761 = vsel %vm237, %v751, inf
    %762 = vmin.xlane.f32.xlu0 %v761
    %v763 = vpop.xlane.xlu0 %762
    %vm764 = vcmp.le.f32.partialorder %v748, %v754
    %vm765 = vcmp.le.f32.partialorder %v749, %v757
    %vm766 = vcmp.le.f32.partialorder %v750, %v760
    %vm767 = vcmp.le.f32.partialorder %v751, %v763
    %v768 = vsel %vm764, %v121, 32.0
    %v769 = vsel %vm765, %v121, 32.0
    %v770 = vsel %vm766, %v121, 32.0
    %v771 = vsel %vm767, %v121, 32.0
    %v772 = vsel %vm237, %v768, inf
    %773 = vmin.xlane.f32.xlu0 %v772
    %v774 = vpop.xlane.xlu0 %773
    %v775 = vsel %vm237, %v769, inf
    %776 = vmin.xlane.f32.xlu0 %v775
    %v777 = vpop.xlane.xlu0 %776
    %v778 = vsel %vm237, %v770, inf
    %779 = vmin.xlane.f32.xlu0 %v778
    %v780 = vpop.xlane.xlu0 %779
    %v781 = vsel %vm237, %v771, inf
    %782 = vmin.xlane.f32.xlu0 %v781
    %v783 = vpop.xlane.xlu0 %782
    %vm784 = vcmp.eq.f32.partialorder %v121, %v774
    %vm785 = vcmp.eq.f32.partialorder %v121, %v777
    %vm786 = vcmp.eq.f32.partialorder %v121, %v780
    %vm787 = vcmp.eq.f32.partialorder %v121, %v783
    %v788 = vsel %vm784, 1, 0
    %v789 = vsel %vm785, 1, 0
    %v790 = vsel %vm786, 1, 0
    %v791 = vsel %vm787, 1, 0
    %v792 = vcvt.s32.f32 %v788
    %v793 = vcvt.s32.f32 %v789
    %v794 = vcvt.s32.f32 %v790
    %v795 = vcvt.s32.f32 %v791
    %v796 = vadd.f32 %v792, 0.0
    %v797 = vadd.f32 %v793, 0.0
    %v798 = vadd.f32 %v794, 0.0
    %v799 = vadd.f32 %v795, 0.0
    %v800 = vmul.f32 %v796, 1e+09
    %v801 = vmul.f32 %v797, 1e+09
    %v802 = vmul.f32 %v798, 1e+09
    %v803 = vmul.f32 %v799, 1e+09
    %v804 = vadd.f32 %v744, %v800
    %v805 = vadd.f32 %v745, %v801
    %v806 = vadd.f32 %v746, %v802
    %v807 = vadd.f32 %v747, %v803
    %v808 = vsel %vm237, %v804, inf
    %809 = vmin.xlane.f32.xlu0 %v808
    %v810 = vpop.xlane.xlu0 %809
    %v811 = vsel %vm237, %v805, inf
    %812 = vmin.xlane.f32.xlu0 %v811
    %v813 = vpop.xlane.xlu0 %812
    %v814 = vsel %vm237, %v806, inf
    %815 = vmin.xlane.f32.xlu0 %v814
    %v816 = vpop.xlane.xlu0 %815
    %v817 = vsel %vm237, %v807, inf
    %818 = vmin.xlane.f32.xlu0 %v817
    %v819 = vpop.xlane.xlu0 %818
    %vm820 = vcmp.le.f32.partialorder %v804, %v810
    %vm821 = vcmp.le.f32.partialorder %v805, %v813
    %vm822 = vcmp.le.f32.partialorder %v806, %v816
    %vm823 = vcmp.le.f32.partialorder %v807, %v819
    %v824 = vsel %vm820, %v121, 32.0
    %v825 = vsel %vm821, %v121, 32.0
    %v826 = vsel %vm822, %v121, 32.0
    %v827 = vsel %vm823, %v121, 32.0
    %v828 = vsel %vm237, %v824, inf
    %829 = vmin.xlane.f32.xlu0 %v828
    %v830 = vpop.xlane.xlu0 %829
    %v831 = vsel %vm237, %v825, inf
    %832 = vmin.xlane.f32.xlu0 %v831
    %v833 = vpop.xlane.xlu0 %832
    %v834 = vsel %vm237, %v826, inf
    %835 = vmin.xlane.f32.xlu0 %v834
    %v836 = vpop.xlane.xlu0 %835
    %v837 = vsel %vm237, %v827, inf
    %838 = vmin.xlane.f32.xlu0 %v837
    %v839 = vpop.xlane.xlu0 %838
    %vm840 = vcmp.eq.f32.partialorder %v121, %v830
    %vm841 = vcmp.eq.f32.partialorder %v121, %v833
    %vm842 = vcmp.eq.f32.partialorder %v121, %v836
    %vm843 = vcmp.eq.f32.partialorder %v121, %v839
    %v844 = vsel %vm840, 1, 0
    %v845 = vsel %vm841, 1, 0
    %v846 = vsel %vm842, 1, 0
    %v847 = vsel %vm843, 1, 0
    %v848 = vcvt.s32.f32 %v844
    %v849 = vcvt.s32.f32 %v845
    %v850 = vcvt.s32.f32 %v846
    %v851 = vcvt.s32.f32 %v847
    %v852 = vadd.f32 %v796, %v848
    %v853 = vadd.f32 %v797, %v849
    %v854 = vadd.f32 %v798, %v850
    %v855 = vadd.f32 %v799, %v851
    %v856 = vmul.f32 %v852, 1e+09
    %v857 = vmul.f32 %v853, 1e+09
    %v858 = vmul.f32 %v854, 1e+09
    %v859 = vmul.f32 %v855, 1e+09
    %v860 = vadd.f32 %v744, %v856
    %v861 = vadd.f32 %v745, %v857
    %v862 = vadd.f32 %v746, %v858
    %v863 = vadd.f32 %v747, %v859
    %v864 = vsel %vm237, %v860, inf
    %865 = vmin.xlane.f32.xlu0 %v864
    %v866 = vpop.xlane.xlu0 %865
    %v867 = vsel %vm237, %v861, inf
    %868 = vmin.xlane.f32.xlu0 %v867
    %v869 = vpop.xlane.xlu0 %868
    %v870 = vsel %vm237, %v862, inf
    %871 = vmin.xlane.f32.xlu0 %v870
    %v872 = vpop.xlane.xlu0 %871
    %v873 = vsel %vm237, %v863, inf
    %874 = vmin.xlane.f32.xlu0 %v873
    %v875 = vpop.xlane.xlu0 %874
    %vm876 = vcmp.le.f32.partialorder %v860, %v866
    %vm877 = vcmp.le.f32.partialorder %v861, %v869
    %vm878 = vcmp.le.f32.partialorder %v862, %v872
    %vm879 = vcmp.le.f32.partialorder %v863, %v875
    %v880 = vsel %vm876, %v121, 32.0
    %v881 = vsel %vm877, %v121, 32.0
    %v882 = vsel %vm878, %v121, 32.0
    %v883 = vsel %vm879, %v121, 32.0
    %v884 = vsel %vm237, %v880, inf
    %885 = vmin.xlane.f32.xlu0 %v884
    %v886 = vpop.xlane.xlu0 %885
    %v887 = vsel %vm237, %v881, inf
    %888 = vmin.xlane.f32.xlu0 %v887
    %v889 = vpop.xlane.xlu0 %888
    %v890 = vsel %vm237, %v882, inf
    %891 = vmin.xlane.f32.xlu0 %v890
    %v892 = vpop.xlane.xlu0 %891
    %v893 = vsel %vm237, %v883, inf
    %894 = vmin.xlane.f32.xlu0 %v893
    %v895 = vpop.xlane.xlu0 %894
    %vm896 = vcmp.eq.f32.partialorder %v121, %v886
    %vm897 = vcmp.eq.f32.partialorder %v121, %v889
    %vm898 = vcmp.eq.f32.partialorder %v121, %v892
    %vm899 = vcmp.eq.f32.partialorder %v121, %v895
    %v900 = vsel %vm896, 1, 0
    %v901 = vsel %vm897, 1, 0
    %v902 = vsel %vm898, 1, 0
    %v903 = vsel %vm899, 1, 0
    %v904 = vcvt.s32.f32 %v900
    %v905 = vcvt.s32.f32 %v901
    %v906 = vcvt.s32.f32 %v902
    %v907 = vcvt.s32.f32 %v903
    %v908 = vld [vmem:[%s5] sm:$0xff]
    %v909 = vld [vmem:[%s5 + $0x8] sm:$0xff]
    %v910 = vld [vmem:[%s5 + $0x10] sm:$0xff]
    %v911 = vld [vmem:[%s5 + $0x18] sm:$0xff]
    %v912 = vld [vmem:[%s5 + $0x20] sm:$0xff]
    %v913 = vld [vmem:[%s5 + $0x28] sm:$0xff]
    %v914 = vld [vmem:[%s5 + $0x30] sm:$0xff]
    %v915 = vld [vmem:[%s5 + $0x38] sm:$0xff]
    %v916 = vld [vmem:[%s5 + $0x40] sm:$0xff]
    %v917 = vld [vmem:[%s5 + $0x48] sm:$0xff]
    %v918 = vld [vmem:[%s5 + $0x50] sm:$0xff]
    %v919 = vld [vmem:[%s5 + $0x58] sm:$0xff]
    %v920 = vld [vmem:[%s5 + $0x60] sm:$0xff]
    %v921 = vld [vmem:[%s5 + $0x68] sm:$0xff]
    %v922 = vld [vmem:[%s5 + $0x70] sm:$0xff]
    %v923 = vld [vmem:[%s5 + $0x78] sm:$0xff]
    %924 = vmatpush.msra.mxu0 0.0
    %925 = vmatpush.msra.mxu0 0.0
    %926 = vmatpush.msra.mxu0 0.0
    %927 = vmatpush.msra.mxu0 0.0
    %928 = vmatpush.msra.mxu0 0.0
    %929 = vmatpush.msra.mxu0 0.0
    %930 = vmatpush.msra.mxu0 0.0
    %931 = vmatpush.msra.mxu0 0.0
    %932 = vmatpush.msra.mxu0 %v922
    %933 = vmatpush.msra.mxu0 %v920
    %934 = vmatpush.msra.mxu0 %v918
    %935 = vmatpush.msra.mxu0 %v916
    %936 = vmatpush.msra.mxu0 %v914
    %937 = vmatpush.msra.mxu0 %v912
    %938 = vmatpush.msra.mxu0 %v910
    %939 = vmatpush.msra.mxu0 %v908
    %940 = vmatmul.f32.gmra.mxu0 %v698
    %v941 = vpop.f32.mrf.mxu0
    %v942 = vadd.f32 0.0, %v941
    %943 = vmatmul.f32.gmra.mxu0 %v700
    %v944 = vpop.f32.mrf.mxu0
    %v945 = vadd.f32 0.0, %v944
    %946 = vmatmul.f32.gmra.mxu0 %v702
    %v947 = vpop.f32.mrf.mxu0
    %v948 = vadd.f32 0.0, %v947
    %949 = vmatmul.f32.gmra.mxu0 %v704
    %v950 = vpop.f32.mrf.mxu0
    %v951 = vadd.f32 0.0, %v950
    %952 = vdwg.mxu0
    %953 = vmatpush.msra.mxu0 0.0
    %954 = vmatpush.msra.mxu0 0.0
    %955 = vmatpush.msra.mxu0 0.0
    %956 = vmatpush.msra.mxu0 0.0
    %957 = vmatpush.msra.mxu0 0.0
    %958 = vmatpush.msra.mxu0 0.0
    %959 = vmatpush.msra.mxu0 0.0
    %960 = vmatpush.msra.mxu0 0.0
    %961 = vmatpush.msra.mxu0 %v923
    %962 = vmatpush.msra.mxu0 %v921
    %963 = vmatpush.msra.mxu0 %v919
    %964 = vmatpush.msra.mxu0 %v917
    %965 = vmatpush.msra.mxu0 %v915
    %966 = vmatpush.msra.mxu0 %v913
    %967 = vmatpush.msra.mxu0 %v911
    %968 = vmatpush.msra.mxu0 %v909
    %969 = vmatmul.f32.gmra.mxu0 %v698
    %v970 = vpop.f32.mrf.mxu0
    %v971 = vadd.f32 0.0, %v970
    %972 = vmatmul.f32.gmra.mxu0 %v700
    %v973 = vpop.f32.mrf.mxu0
    %v974 = vadd.f32 0.0, %v973
    %975 = vmatmul.f32.gmra.mxu0 %v702
    %v976 = vpop.f32.mrf.mxu0
    %v977 = vadd.f32 0.0, %v976
    %978 = vmatmul.f32.gmra.mxu0 %v704
    %v979 = vpop.f32.mrf.mxu0
    %v980 = vadd.f32 0.0, %v979
    %981 = vdwg.mxu0
    %v982 = vld [vmem:[%s6] sm:$0x1]
    %v984 = vperm.slane %v982, 0
    %v986 = vadd.f32 %v942, %v984
    %v987 = vadd.f32 %v945, %v984
    %v988 = vadd.f32 %v948, %v984
    %v989 = vadd.f32 %v951, %v984
    %v991 = vsel %vm237, %v792, 0
    %v994 = vsel %vm237, %v793, 0
    %v997 = vsel %vm237, %v794, 0
    %v1000 = vsel %vm237, %v795, 0
    %v1003 = vsel %vm237, %v848, 0
    %v1006 = vsel %vm237, %v849, 0
    %v1009 = vsel %vm237, %v850, 0
    %v1012 = vsel %vm237, %v851, 0
    %v1015 = vsel %vm237, %v904, 0
    %v1018 = vsel %vm237, %v905, 0
    %v1021 = vsel %vm237, %v906, 0
    %v1024 = vsel %vm237, %v907, 0
    %1026 = vmatpush.msra.mxu0 0.0
    %1027 = vmatpush.msra.mxu0 0.0
    %1028 = vmatpush.msra.mxu0 0.0
    %1029 = vmatpush.msra.mxu0 0.0
    %1030 = vmatpush.msra.mxu0 0.0
    %1031 = vmatpush.msra.mxu0 0.0
    %1032 = vmatpush.msra.mxu0 0.0
    %1033 = vmatpush.msra.mxu0 0.0
    %1034 = vmatpush.msra.mxu0 0.0
    %1035 = vmatpush.msra.mxu0 0.0
    %1036 = vmatpush.msra.mxu0 0.0
    %1037 = vmatpush.msra.mxu0 0.0
    %1038 = vmatpush.msra.mxu0 %v980
    %1039 = vmatpush.msra.mxu0 %v977
    %1040 = vmatpush.msra.mxu0 %v974
    %1041 = vmatpush.msra.mxu0 %v971
    %1042 = vmatmul.f32.gmra.mxu0 %v991
    %v1043 = vpop.f32.mrf.mxu0
    %v1044 = vadd.f32 0.0, %v1043
    %1045 = vmatmul.f32.gmra.mxu0 %v994
    %v1046 = vpop.f32.mrf.mxu0
    %v1047 = vadd.f32 0.0, %v1046
    %1048 = vmatmul.f32.gmra.mxu0 %v997
    %v1049 = vpop.f32.mrf.mxu0
    %v1050 = vadd.f32 0.0, %v1049
    %1051 = vmatmul.f32.gmra.mxu0 %v1000
    %v1052 = vpop.f32.mrf.mxu0
    %v1053 = vadd.f32 0.0, %v1052
    %1054 = vmatmul.f32.gmra.mxu0 %v1003
    %v1055 = vpop.f32.mrf.mxu0
    %v1056 = vadd.f32 0.0, %v1055
    %1057 = vmatmul.f32.gmra.mxu0 %v1006
    %v1058 = vpop.f32.mrf.mxu0
    %v1059 = vadd.f32 0.0, %v1058
    %1060 = vmatmul.f32.gmra.mxu0 %v1009
    %v1061 = vpop.f32.mrf.mxu0
    %v1062 = vadd.f32 0.0, %v1061
    %1063 = vmatmul.f32.gmra.mxu0 %v1012
    %v1064 = vpop.f32.mrf.mxu0
    %v1065 = vadd.f32 0.0, %v1064
    %1066 = vmatmul.f32.gmra.mxu0 %v1015
    %v1067 = vpop.f32.mrf.mxu0
    %v1068 = vadd.f32 0.0, %v1067
    %1069 = vmatmul.f32.gmra.mxu0 %v1018
    %v1070 = vpop.f32.mrf.mxu0
    %v1071 = vadd.f32 0.0, %v1070
    %1072 = vmatmul.f32.gmra.mxu0 %v1021
    %v1073 = vpop.f32.mrf.mxu0
    %v1074 = vadd.f32 0.0, %v1073
    %1075 = vmatmul.f32.gmra.mxu0 %v1024
    %v1076 = vpop.f32.mrf.mxu0
    %v1077 = vadd.f32 0.0, %v1076
    %1078 = vdwg.mxu0
    %v1079 = vmax.f32 %v971, %v1044
    %v1080 = vmax.f32 %v974, %v1047
    %v1081 = vmax.f32 %v977, %v1050
    %v1082 = vmax.f32 %v980, %v1053
    %v1083 = vmax.f32 %v1079, %v1056
    %v1084 = vmax.f32 %v1080, %v1059
    %v1085 = vmax.f32 %v1081, %v1062
    %v1086 = vmax.f32 %v1082, %v1065
    %v1087 = vmax.f32 %v1083, %v1068
    %v1088 = vmax.f32 %v1084, %v1071
    %v1089 = vmax.f32 %v1085, %v1074
    %v1090 = vmax.f32 %v1086, %v1077
    %v1091 = vadd.f32 %v1087, %v986
    %v1092 = vadd.f32 %v1088, %v987
    %v1093 = vadd.f32 %v1089, %v988
    %v1094 = vadd.f32 %v1090, %v989
    %v1095 = vmax.f32 %v1091, 0.0
    %v1096 = vmax.f32 %v1092, 0.0
    %v1097 = vmax.f32 %v1093, 0.0
    %v1098 = vmax.f32 %v1094, 0.0
    %v1099 = vmul.f32 %v1095, %v1095
    %v1100 = vmul.f32 %v1096, %v1096
    %v1101 = vmul.f32 %v1097, %v1097
    %v1102 = vmul.f32 %v1098, %v1098
    %1103 = vadd.xlane.f32.xlu0 %v1099
    %v1104 = vpop.xlane.xlu0 %1103
    %1105 = vadd.xlane.f32.xlu0 %v1100
    %v1106 = vpop.xlane.xlu0 %1105
    %1107 = vadd.xlane.f32.xlu0 %v1101
    %v1108 = vpop.xlane.xlu0 %1107
    %1109 = vadd.xlane.f32.xlu0 %v1102
    %v1110 = vpop.xlane.xlu0 %1109
    %1111 = vxpose.xlu0.b32.start [1/16] %v1104, 128
    %1112 = vxpose.xlu0.b32.cont [2/16] %v1106, 128
    %1113 = vxpose.xlu0.b32.cont [3/16] %v1108, 128
    %1114 = vxpose.xlu0.b32.cont [4/16] %v1110, 128
    %1115 = vxpose.xlu0.b32.cont [5/16] 0.0, 128
    %1116 = vxpose.xlu0.b32.cont [6/16] 0.0, 128
    %1117 = vxpose.xlu0.b32.cont [7/16] 0.0, 128
    %1118 = vxpose.xlu0.b32.cont [8/16] 0.0, 128
    %1119 = vxpose.xlu0.b32.cont [9/16] 0.0, 128
    %1120 = vxpose.xlu0.b32.cont [10/16] 0.0, 128
    %1121 = vxpose.xlu0.b32.cont [11/16] 0.0, 128
    %1122 = vxpose.xlu0.b32.cont [12/16] 0.0, 128
    %1123 = vxpose.xlu0.b32.cont [13/16] 0.0, 128
    %1124 = vxpose.xlu0.b32.cont [14/16] 0.0, 128
    %1125 = vxpose.xlu0.b32.cont [15/16] 0.0, 128
    %1126 = vxpose.xlu0.b32.end [16/16] 0.0, 128
    %v1127 = vpop.trf.xlu0
    %v1128 = vpop.trf.xlu0
    %v1129 = vpop.trf.xlu0
    %v1130 = vpop.trf.xlu0
    %v1131 = vpop.trf.xlu0
    %v1132 = vpop.trf.xlu0
    %v1133 = vpop.trf.xlu0
    %v1134 = vpop.trf.xlu0
    %v1135 = vpop.trf.xlu0
    %v1136 = vpop.trf.xlu0
    %v1137 = vpop.trf.xlu0
    %v1138 = vpop.trf.xlu0
    %v1139 = vpop.trf.xlu0
    %v1140 = vpop.trf.xlu0
    %v1141 = vpop.trf.xlu0
    %v1142 = vpop.trf.xlu0
    %1143 = vmatpush.xpose.msra.mxu0 0.0
    %1144 = vmatpush.xpose.msra.mxu0 0.0
    %1145 = vmatpush.xpose.msra.mxu0 0.0
    %1146 = vmatpush.xpose.msra.mxu0 0.0
    %1147 = vmatpush.xpose.msra.mxu0 0.0
    %1148 = vmatpush.xpose.msra.mxu0 0.0
    %1149 = vmatpush.xpose.msra.mxu0 0.0
    %1150 = vmatpush.xpose.msra.mxu0 0.0
    %1151 = vmatpush.xpose.msra.mxu0 0.0
    %1152 = vmatpush.xpose.msra.mxu0 0.0
    %1153 = vmatpush.xpose.msra.mxu0 0.0
    %1154 = vmatpush.xpose.msra.mxu0 0.0
    %1155 = vmatpush.xpose.msra.mxu0 %v1098
    %1156 = vmatpush.xpose.msra.mxu0 %v1097
    %1157 = vmatpush.xpose.msra.mxu0 %v1096
    %1158 = vmatpush.xpose.msra.mxu0 %v1095
    %1159 = vmatmul.f32.gmra.mxu0 %v1095
    %v1160 = vpop.f32.mrf.mxu0
    %v1161 = vadd.f32 0.0, %v1160
    %1162 = vmatmul.f32.gmra.mxu0 %v1096
    %v1163 = vpop.f32.mrf.mxu0
    %v1164 = vadd.f32 0.0, %v1163
    %1165 = vmatmul.f32.gmra.mxu0 %v1097
    %v1166 = vpop.f32.mrf.mxu0
    %v1167 = vadd.f32 0.0, %v1166
    %1168 = vmatmul.f32.gmra.mxu0 %v1098
    %v1169 = vpop.f32.mrf.mxu0
    %v1170 = vadd.f32 0.0, %v1169
    %1171 = vdwg.mxu0
    %v1172 = vmul.f32 %v1161, 2.0
    %v1173 = vmul.f32 %v1164, 2.0
    %v1174 = vmul.f32 %v1167, 2.0
    %v1175 = vmul.f32 %v1170, 2.0
    %v1176 = vperm.slane %v1127, 0
    %v1177 = vsub.f32 %v1176, %v1172
    %v1178 = vsub.f32 %v1176, %v1173
    %v1179 = vsub.f32 %v1176, %v1174
    %v1180 = vsub.f32 %v1176, %v1175
    %v1181 = vadd.f32 %v1177, %v122
    %v1182 = vadd.f32 %v1178, %v123
    %v1183 = vadd.f32 %v1179, %v124
    %v1184 = vadd.f32 %v1180, %v125
    %v1185 = vadd.f32 %v1181, 0.0
    %v1186 = vadd.f32 %v1182, 0.0
    %v1187 = vadd.f32 %v1183, 0.0
    %v1188 = vadd.f32 %v1184, 0.0
    %v1189 = vsel %vm237, %v1185, inf
    %1190 = vmin.xlane.f32.xlu0 %v1189
    %v1191 = vpop.xlane.xlu0 %1190
    %v1192 = vsel %vm237, %v1186, inf
    %1193 = vmin.xlane.f32.xlu0 %v1192
    %v1194 = vpop.xlane.xlu0 %1193
    %v1195 = vsel %vm237, %v1187, inf
    %1196 = vmin.xlane.f32.xlu0 %v1195
    %v1197 = vpop.xlane.xlu0 %1196
    %v1198 = vsel %vm237, %v1188, inf
    %1199 = vmin.xlane.f32.xlu0 %v1198
    %v1200 = vpop.xlane.xlu0 %1199
    %vm1201 = vcmp.le.f32.partialorder %v1185, %v1191
    %vm1202 = vcmp.le.f32.partialorder %v1186, %v1194
    %vm1203 = vcmp.le.f32.partialorder %v1187, %v1197
    %vm1204 = vcmp.le.f32.partialorder %v1188, %v1200
    %v1205 = vsel %vm1201, %v121, 32.0
    %v1206 = vsel %vm1202, %v121, 32.0
    %v1207 = vsel %vm1203, %v121, 32.0
    %v1208 = vsel %vm1204, %v121, 32.0
    %v1209 = vsel %vm237, %v1205, inf
    %1210 = vmin.xlane.f32.xlu0 %v1209
    %v1211 = vpop.xlane.xlu0 %1210
    %v1212 = vsel %vm237, %v1206, inf
    %1213 = vmin.xlane.f32.xlu0 %v1212
    %v1214 = vpop.xlane.xlu0 %1213
    %v1215 = vsel %vm237, %v1207, inf
    %1216 = vmin.xlane.f32.xlu0 %v1215
    %v1217 = vpop.xlane.xlu0 %1216
    %v1218 = vsel %vm237, %v1208, inf
    %1219 = vmin.xlane.f32.xlu0 %v1218
    %v1220 = vpop.xlane.xlu0 %1219
    %vm1221 = vcmp.eq.f32.partialorder %v121, %v1211
    %vm1222 = vcmp.eq.f32.partialorder %v121, %v1214
    %vm1223 = vcmp.eq.f32.partialorder %v121, %v1217
    %vm1224 = vcmp.eq.f32.partialorder %v121, %v1220
    %v1225 = vsel %vm1221, 1, 0
    %v1226 = vsel %vm1222, 1, 0
    %v1227 = vsel %vm1223, 1, 0
    %v1228 = vsel %vm1224, 1, 0
    %v1229 = vcvt.s32.f32 %v1225
    %v1230 = vcvt.s32.f32 %v1226
    %v1231 = vcvt.s32.f32 %v1227
    %v1232 = vcvt.s32.f32 %v1228
    %v1233 = vadd.f32 %v1229, 0.0
    %v1234 = vadd.f32 %v1230, 0.0
    %v1235 = vadd.f32 %v1231, 0.0
    %v1236 = vadd.f32 %v1232, 0.0
    %v1237 = vmul.f32 %v1233, 1e+09
    %v1238 = vmul.f32 %v1234, 1e+09
    %v1239 = vmul.f32 %v1235, 1e+09
    %v1240 = vmul.f32 %v1236, 1e+09
    %v1241 = vadd.f32 %v1181, %v1237
    %v1242 = vadd.f32 %v1182, %v1238
    %v1243 = vadd.f32 %v1183, %v1239
    %v1244 = vadd.f32 %v1184, %v1240
    %v1245 = vsel %vm237, %v1241, inf
    %1246 = vmin.xlane.f32.xlu0 %v1245
    %v1247 = vpop.xlane.xlu0 %1246
    %v1248 = vsel %vm237, %v1242, inf
    %1249 = vmin.xlane.f32.xlu0 %v1248
    %v1250 = vpop.xlane.xlu0 %1249
    %v1251 = vsel %vm237, %v1243, inf
    %1252 = vmin.xlane.f32.xlu0 %v1251
    %v1253 = vpop.xlane.xlu0 %1252
    %v1254 = vsel %vm237, %v1244, inf
    %1255 = vmin.xlane.f32.xlu0 %v1254
    %v1256 = vpop.xlane.xlu0 %1255
    %vm1257 = vcmp.le.f32.partialorder %v1241, %v1247
    %vm1258 = vcmp.le.f32.partialorder %v1242, %v1250
    %vm1259 = vcmp.le.f32.partialorder %v1243, %v1253
    %vm1260 = vcmp.le.f32.partialorder %v1244, %v1256
    %v1261 = vsel %vm1257, %v121, 32.0
    %v1262 = vsel %vm1258, %v121, 32.0
    %v1263 = vsel %vm1259, %v121, 32.0
    %v1264 = vsel %vm1260, %v121, 32.0
    %v1265 = vsel %vm237, %v1261, inf
    %1266 = vmin.xlane.f32.xlu0 %v1265
    %v1267 = vpop.xlane.xlu0 %1266
    %v1268 = vsel %vm237, %v1262, inf
    %1269 = vmin.xlane.f32.xlu0 %v1268
    %v1270 = vpop.xlane.xlu0 %1269
    %v1271 = vsel %vm237, %v1263, inf
    %1272 = vmin.xlane.f32.xlu0 %v1271
    %v1273 = vpop.xlane.xlu0 %1272
    %v1274 = vsel %vm237, %v1264, inf
    %1275 = vmin.xlane.f32.xlu0 %v1274
    %v1276 = vpop.xlane.xlu0 %1275
    %vm1277 = vcmp.eq.f32.partialorder %v121, %v1267
    %vm1278 = vcmp.eq.f32.partialorder %v121, %v1270
    %vm1279 = vcmp.eq.f32.partialorder %v121, %v1273
    %vm1280 = vcmp.eq.f32.partialorder %v121, %v1276
    %v1281 = vsel %vm1277, 1, 0
    %v1282 = vsel %vm1278, 1, 0
    %v1283 = vsel %vm1279, 1, 0
    %v1284 = vsel %vm1280, 1, 0
    %v1285 = vcvt.s32.f32 %v1281
    %v1286 = vcvt.s32.f32 %v1282
    %v1287 = vcvt.s32.f32 %v1283
    %v1288 = vcvt.s32.f32 %v1284
    %v1289 = vadd.f32 %v1233, %v1285
    %v1290 = vadd.f32 %v1234, %v1286
    %v1291 = vadd.f32 %v1235, %v1287
    %v1292 = vadd.f32 %v1236, %v1288
    %v1293 = vmul.f32 %v1289, 1e+09
    %v1294 = vmul.f32 %v1290, 1e+09
    %v1295 = vmul.f32 %v1291, 1e+09
    %v1296 = vmul.f32 %v1292, 1e+09
    %v1297 = vadd.f32 %v1181, %v1293
    %v1298 = vadd.f32 %v1182, %v1294
    %v1299 = vadd.f32 %v1183, %v1295
    %v1300 = vadd.f32 %v1184, %v1296
    %v1301 = vsel %vm237, %v1297, inf
    %1302 = vmin.xlane.f32.xlu0 %v1301
    %v1303 = vpop.xlane.xlu0 %1302
    %v1304 = vsel %vm237, %v1298, inf
    %1305 = vmin.xlane.f32.xlu0 %v1304
    %v1306 = vpop.xlane.xlu0 %1305
    %v1307 = vsel %vm237, %v1299, inf
    %1308 = vmin.xlane.f32.xlu0 %v1307
    %v1309 = vpop.xlane.xlu0 %1308
    %v1310 = vsel %vm237, %v1300, inf
    %1311 = vmin.xlane.f32.xlu0 %v1310
    %v1312 = vpop.xlane.xlu0 %1311
    %vm1313 = vcmp.le.f32.partialorder %v1297, %v1303
    %vm1314 = vcmp.le.f32.partialorder %v1298, %v1306
    %vm1315 = vcmp.le.f32.partialorder %v1299, %v1309
    %vm1316 = vcmp.le.f32.partialorder %v1300, %v1312
    %v1317 = vsel %vm1313, %v121, 32.0
    %v1318 = vsel %vm1314, %v121, 32.0
    %v1319 = vsel %vm1315, %v121, 32.0
    %v1320 = vsel %vm1316, %v121, 32.0
    %v1321 = vsel %vm237, %v1317, inf
    %1322 = vmin.xlane.f32.xlu0 %v1321
    %v1323 = vpop.xlane.xlu0 %1322
    %v1324 = vsel %vm237, %v1318, inf
    %1325 = vmin.xlane.f32.xlu0 %v1324
    %v1326 = vpop.xlane.xlu0 %1325
    %v1327 = vsel %vm237, %v1319, inf
    %1328 = vmin.xlane.f32.xlu0 %v1327
    %v1329 = vpop.xlane.xlu0 %1328
    %v1330 = vsel %vm237, %v1320, inf
    %1331 = vmin.xlane.f32.xlu0 %v1330
    %v1332 = vpop.xlane.xlu0 %1331
    %vm1333 = vcmp.eq.f32.partialorder %v121, %v1323
    %vm1334 = vcmp.eq.f32.partialorder %v121, %v1326
    %vm1335 = vcmp.eq.f32.partialorder %v121, %v1329
    %vm1336 = vcmp.eq.f32.partialorder %v121, %v1332
    %v1337 = vsel %vm1333, 1, 0
    %v1338 = vsel %vm1334, 1, 0
    %v1339 = vsel %vm1335, 1, 0
    %v1340 = vsel %vm1336, 1, 0
    %v1341 = vcvt.s32.f32 %v1337
    %v1342 = vcvt.s32.f32 %v1338
    %v1343 = vcvt.s32.f32 %v1339
    %v1344 = vcvt.s32.f32 %v1340
    %v1345 = vld [vmem:[#allocation2] sm:$0xff]
    %v1346 = vld [vmem:[#allocation2 + $0x8] sm:$0xff]
    %v1347 = vld [vmem:[#allocation2 + $0x10] sm:$0xff]
    %v1348 = vld [vmem:[#allocation2 + $0x18] sm:$0xff]
    %v1349 = vld [vmem:[#allocation2 + $0x20] sm:$0xff]
    %v1350 = vld [vmem:[#allocation2 + $0x28] sm:$0xff]
    %v1351 = vld [vmem:[#allocation2 + $0x30] sm:$0xff]
    %v1352 = vld [vmem:[#allocation2 + $0x38] sm:$0xff]
    %v1353 = vld [vmem:[#allocation2 + $0x40] sm:$0xff]
    %v1354 = vld [vmem:[#allocation2 + $0x48] sm:$0xff]
    %v1355 = vld [vmem:[#allocation2 + $0x50] sm:$0xff]
    %v1356 = vld [vmem:[#allocation2 + $0x58] sm:$0xff]
    %v1357 = vld [vmem:[#allocation2 + $0x60] sm:$0xff]
    %v1358 = vld [vmem:[#allocation2 + $0x68] sm:$0xff]
    %v1359 = vld [vmem:[#allocation2 + $0x70] sm:$0xff]
    %v1360 = vld [vmem:[#allocation2 + $0x78] sm:$0xff]
    %v1361 = vld [vmem:[#allocation2 + $0x80] sm:$0xff]
    %v1362 = vld [vmem:[#allocation2 + $0x88] sm:$0xff]
    %v1363 = vld [vmem:[#allocation2 + $0x90] sm:$0xff]
    %v1364 = vld [vmem:[#allocation2 + $0x98] sm:$0xff]
    %v1365 = vld [vmem:[#allocation2 + $0xa0] sm:$0xff]
    %v1366 = vld [vmem:[#allocation2 + $0xa8] sm:$0xff]
    %v1367 = vld [vmem:[#allocation2 + $0xb0] sm:$0xff]
    %v1368 = vld [vmem:[#allocation2 + $0xb8] sm:$0xff]
    %v1369 = vld [vmem:[#allocation2 + $0xc0] sm:$0xff]
    %v1370 = vld [vmem:[#allocation2 + $0xc8] sm:$0xff]
    %v1371 = vld [vmem:[#allocation2 + $0xd0] sm:$0xff]
    %v1372 = vld [vmem:[#allocation2 + $0xd8] sm:$0xff]
    %v1373 = vld [vmem:[#allocation2 + $0xe0] sm:$0xff]
    %v1374 = vld [vmem:[#allocation2 + $0xe8] sm:$0xff]
    %v1375 = vld [vmem:[#allocation2 + $0xf0] sm:$0xff]
    %v1376 = vld [vmem:[#allocation2 + $0xf8] sm:$0xff]
    %v1377 = vld [vmem:[#allocation2 + $0x100] sm:$0xff]
    %v1378 = vld [vmem:[#allocation2 + $0x108] sm:$0xff]
    %v1379 = vld [vmem:[#allocation2 + $0x110] sm:$0xff]
    %v1380 = vld [vmem:[#allocation2 + $0x118] sm:$0xff]
    %v1381 = vld [vmem:[#allocation2 + $0x120] sm:$0xff]
    %v1382 = vld [vmem:[#allocation2 + $0x128] sm:$0xff]
    %v1383 = vld [vmem:[#allocation2 + $0x130] sm:$0xff]
    %v1384 = vld [vmem:[#allocation2 + $0x138] sm:$0xff]
    %v1385 = vld [vmem:[#allocation2 + $0x140] sm:$0xff]
    %v1386 = vld [vmem:[#allocation2 + $0x148] sm:$0xff]
    %v1387 = vld [vmem:[#allocation2 + $0x150] sm:$0xff]
    %v1388 = vld [vmem:[#allocation2 + $0x158] sm:$0xff]
    %v1389 = vld [vmem:[#allocation2 + $0x160] sm:$0xff]
    %v1390 = vld [vmem:[#allocation2 + $0x168] sm:$0xff]
    %v1391 = vld [vmem:[#allocation2 + $0x170] sm:$0xff]
    %v1392 = vld [vmem:[#allocation2 + $0x178] sm:$0xff]
    %v1393 = vld [vmem:[#allocation2 + $0x180] sm:$0xff]
    %v1394 = vld [vmem:[#allocation2 + $0x188] sm:$0xff]
    %v1395 = vld [vmem:[#allocation2 + $0x190] sm:$0xff]
    %v1396 = vld [vmem:[#allocation2 + $0x198] sm:$0xff]
    %v1397 = vld [vmem:[#allocation2 + $0x1a0] sm:$0xff]
    %v1398 = vld [vmem:[#allocation2 + $0x1a8] sm:$0xff]
    %v1399 = vld [vmem:[#allocation2 + $0x1b0] sm:$0xff]
    %v1400 = vld [vmem:[#allocation2 + $0x1b8] sm:$0xff]
    %v1401 = vld [vmem:[#allocation2 + $0x1c0] sm:$0xff]
    %v1402 = vld [vmem:[#allocation2 + $0x1c8] sm:$0xff]
    %v1403 = vld [vmem:[#allocation2 + $0x1d0] sm:$0xff]
    %v1404 = vld [vmem:[#allocation2 + $0x1d8] sm:$0xff]
    %v1405 = vld [vmem:[#allocation2 + $0x1e0] sm:$0xff]
    %v1406 = vld [vmem:[#allocation2 + $0x1e8] sm:$0xff]
    %v1407 = vld [vmem:[#allocation2 + $0x1f0] sm:$0xff]
    %v1408 = vld [vmem:[#allocation2 + $0x1f8] sm:$0xff]
    %1409 = vmatpush.msra.mxu0 %v1405
    %1410 = vmatpush.msra.mxu0 %v1401
    %1411 = vmatpush.msra.mxu0 %v1397
    %1412 = vmatpush.msra.mxu0 %v1393
    %1413 = vmatpush.msra.mxu0 %v1389
    %1414 = vmatpush.msra.mxu0 %v1385
    %1415 = vmatpush.msra.mxu0 %v1381
    %1416 = vmatpush.msra.mxu0 %v1377
    %1417 = vmatpush.msra.mxu0 %v1373
    %1418 = vmatpush.msra.mxu0 %v1369
    %1419 = vmatpush.msra.mxu0 %v1365
    %1420 = vmatpush.msra.mxu0 %v1361
    %1421 = vmatpush.msra.mxu0 %v1357
    %1422 = vmatpush.msra.mxu0 %v1353
    %1423 = vmatpush.msra.mxu0 %v1349
    %1424 = vmatpush.msra.mxu0 %v1345
    %1425 = vmatmul.f32.gmra.mxu0 %v1095
    %v1426 = vpop.f32.mrf.mxu0
    %v1427 = vadd.f32 0.0, %v1426
    %1428 = vmatmul.f32.gmra.mxu0 %v1096
    %v1429 = vpop.f32.mrf.mxu0
    %v1430 = vadd.f32 0.0, %v1429
    %1431 = vmatmul.f32.gmra.mxu0 %v1097
    %v1432 = vpop.f32.mrf.mxu0
    %v1433 = vadd.f32 0.0, %v1432
    %1434 = vmatmul.f32.gmra.mxu0 %v1098
    %v1435 = vpop.f32.mrf.mxu0
    %v1436 = vadd.f32 0.0, %v1435
    %1437 = vdwg.mxu0
    %1438 = vmatpush.msra.mxu0 %v1406
    %1439 = vmatpush.msra.mxu0 %v1402
    %1440 = vmatpush.msra.mxu0 %v1398
    %1441 = vmatpush.msra.mxu0 %v1394
    %1442 = vmatpush.msra.mxu0 %v1390
    %1443 = vmatpush.msra.mxu0 %v1386
    %1444 = vmatpush.msra.mxu0 %v1382
    %1445 = vmatpush.msra.mxu0 %v1378
    %1446 = vmatpush.msra.mxu0 %v1374
    %1447 = vmatpush.msra.mxu0 %v1370
    %1448 = vmatpush.msra.mxu0 %v1366
    %1449 = vmatpush.msra.mxu0 %v1362
    %1450 = vmatpush.msra.mxu0 %v1358
    %1451 = vmatpush.msra.mxu0 %v1354
    %1452 = vmatpush.msra.mxu0 %v1350
    %1453 = vmatpush.msra.mxu0 %v1346
    %1454 = vmatmul.f32.gmra.mxu0 %v1095
    %v1455 = vpop.f32.mrf.mxu0
    %v1456 = vadd.f32 0.0, %v1455
    %1457 = vmatmul.f32.gmra.mxu0 %v1096
    %v1458 = vpop.f32.mrf.mxu0
    %v1459 = vadd.f32 0.0, %v1458
    %1460 = vmatmul.f32.gmra.mxu0 %v1097
    %v1461 = vpop.f32.mrf.mxu0
    %v1462 = vadd.f32 0.0, %v1461
    %1463 = vmatmul.f32.gmra.mxu0 %v1098
    %v1464 = vpop.f32.mrf.mxu0
    %v1465 = vadd.f32 0.0, %v1464
    %1466 = vdwg.mxu0
    %1467 = vmatpush.msra.mxu0 %v1407
    %1468 = vmatpush.msra.mxu0 %v1403
    %1469 = vmatpush.msra.mxu0 %v1399
    %1470 = vmatpush.msra.mxu0 %v1395
    %1471 = vmatpush.msra.mxu0 %v1391
    %1472 = vmatpush.msra.mxu0 %v1387
    %1473 = vmatpush.msra.mxu0 %v1383
    %1474 = vmatpush.msra.mxu0 %v1379
    %1475 = vmatpush.msra.mxu0 %v1375
    %1476 = vmatpush.msra.mxu0 %v1371
    %1477 = vmatpush.msra.mxu0 %v1367
    %1478 = vmatpush.msra.mxu0 %v1363
    %1479 = vmatpush.msra.mxu0 %v1359
    %1480 = vmatpush.msra.mxu0 %v1355
    %1481 = vmatpush.msra.mxu0 %v1351
    %1482 = vmatpush.msra.mxu0 %v1347
    %1483 = vmatmul.f32.gmra.mxu0 %v1095
    %v1484 = vpop.f32.mrf.mxu0
    %v1485 = vadd.f32 0.0, %v1484
    %1486 = vmatmul.f32.gmra.mxu0 %v1096
    %v1487 = vpop.f32.mrf.mxu0
    %v1488 = vadd.f32 0.0, %v1487
    %1489 = vmatmul.f32.gmra.mxu0 %v1097
    %v1490 = vpop.f32.mrf.mxu0
    %v1491 = vadd.f32 0.0, %v1490
    %1492 = vmatmul.f32.gmra.mxu0 %v1098
    %v1493 = vpop.f32.mrf.mxu0
    %v1494 = vadd.f32 0.0, %v1493
    %1495 = vdwg.mxu0
    %1496 = vmatpush.msra.mxu0 %v1408
    %1497 = vmatpush.msra.mxu0 %v1404
    %1498 = vmatpush.msra.mxu0 %v1400
    %1499 = vmatpush.msra.mxu0 %v1396
    %1500 = vmatpush.msra.mxu0 %v1392
    %1501 = vmatpush.msra.mxu0 %v1388
    %1502 = vmatpush.msra.mxu0 %v1384
    %1503 = vmatpush.msra.mxu0 %v1380
    %1504 = vmatpush.msra.mxu0 %v1376
    %1505 = vmatpush.msra.mxu0 %v1372
    %1506 = vmatpush.msra.mxu0 %v1368
    %1507 = vmatpush.msra.mxu0 %v1364
    %1508 = vmatpush.msra.mxu0 %v1360
    %1509 = vmatpush.msra.mxu0 %v1356
    %1510 = vmatpush.msra.mxu0 %v1352
    %1511 = vmatpush.msra.mxu0 %v1348
    %1512 = vmatmul.f32.gmra.mxu0 %v1095
    %v1513 = vpop.f32.mrf.mxu0
    %v1514 = vadd.f32 0.0, %v1513
    %1515 = vmatmul.f32.gmra.mxu0 %v1096
    %v1516 = vpop.f32.mrf.mxu0
    %v1517 = vadd.f32 0.0, %v1516
    %1518 = vmatmul.f32.gmra.mxu0 %v1097
    %v1519 = vpop.f32.mrf.mxu0
    %v1520 = vadd.f32 0.0, %v1519
    %1521 = vmatmul.f32.gmra.mxu0 %v1098
    %v1522 = vpop.f32.mrf.mxu0
    %v1523 = vadd.f32 0.0, %v1522
    %1524 = vdwg.mxu0
    %v1525 = vld [vmem:[%s8] sm:$0x3]
    %v1527 = vperm.slane %v1525, 0
    %v1528 = vperm.slane %v1525, 1
    %v1531 = vadd.f32 %v1427, %v1527
    %v1532 = vadd.f32 %v1456, %v1528
    %v1533 = vadd.f32 %v1430, %v1527
    %v1534 = vadd.f32 %v1459, %v1528
    %v1535 = vadd.f32 %v1433, %v1527
    %v1536 = vadd.f32 %v1462, %v1528
    %v1537 = vadd.f32 %v1436, %v1527
    %v1538 = vadd.f32 %v1465, %v1528
    %v1540 = vsel %vm237, %v1229, 0
    %v1543 = vsel %vm237, %v1230, 0
    %v1546 = vsel %vm237, %v1231, 0
    %v1549 = vsel %vm237, %v1232, 0
    %v1552 = vsel %vm237, %v1285, 0
    %v1555 = vsel %vm237, %v1286, 0
    %v1558 = vsel %vm237, %v1287, 0
    %v1561 = vsel %vm237, %v1288, 0
    %v1564 = vsel %vm237, %v1341, 0
    %v1567 = vsel %vm237, %v1342, 0
    %v1570 = vsel %vm237, %v1343, 0
    %v1573 = vsel %vm237, %v1344, 0
    %1575 = vmatpush.msra.mxu0 0.0
    %1576 = vmatpush.msra.mxu0 0.0
    %1577 = vmatpush.msra.mxu0 0.0
    %1578 = vmatpush.msra.mxu0 0.0
    %1579 = vmatpush.msra.mxu0 0.0
    %1580 = vmatpush.msra.mxu0 0.0
    %1581 = vmatpush.msra.mxu0 0.0
    %1582 = vmatpush.msra.mxu0 0.0
    %1583 = vmatpush.msra.mxu0 0.0
    %1584 = vmatpush.msra.mxu0 0.0
    %1585 = vmatpush.msra.mxu0 0.0
    %1586 = vmatpush.msra.mxu0 0.0
    %1587 = vmatpush.msra.mxu0 %v1494
    %1588 = vmatpush.msra.mxu0 %v1491
    %1589 = vmatpush.msra.mxu0 %v1488
    %1590 = vmatpush.msra.mxu0 %v1485
    %1591 = vmatmul.f32.gmra.mxu0 %v1540
    %v1592 = vpop.f32.mrf.mxu0
    %v1593 = vadd.f32 0.0, %v1592
    %1594 = vmatmul.f32.gmra.mxu0 %v1543
    %v1595 = vpop.f32.mrf.mxu0
    %v1596 = vadd.f32 0.0, %v1595
    %1597 = vmatmul.f32.gmra.mxu0 %v1546
    %v1598 = vpop.f32.mrf.mxu0
    %v1599 = vadd.f32 0.0, %v1598
    %1600 = vmatmul.f32.gmra.mxu0 %v1549
    %v1601 = vpop.f32.mrf.mxu0
    %v1602 = vadd.f32 0.0, %v1601
    %1603 = vmatmul.f32.gmra.mxu0 %v1552
    %v1604 = vpop.f32.mrf.mxu0
    %v1605 = vadd.f32 0.0, %v1604
    %1606 = vmatmul.f32.gmra.mxu0 %v1555
    %v1607 = vpop.f32.mrf.mxu0
    %v1608 = vadd.f32 0.0, %v1607
    %1609 = vmatmul.f32.gmra.mxu0 %v1558
    %v1610 = vpop.f32.mrf.mxu0
    %v1611 = vadd.f32 0.0, %v1610
    %1612 = vmatmul.f32.gmra.mxu0 %v1561
    %v1613 = vpop.f32.mrf.mxu0
    %v1614 = vadd.f32 0.0, %v1613
    %1615 = vmatmul.f32.gmra.mxu0 %v1564
    %v1616 = vpop.f32.mrf.mxu0
    %v1617 = vadd.f32 0.0, %v1616
    %1618 = vmatmul.f32.gmra.mxu0 %v1567
    %v1619 = vpop.f32.mrf.mxu0
    %v1620 = vadd.f32 0.0, %v1619
    %1621 = vmatmul.f32.gmra.mxu0 %v1570
    %v1622 = vpop.f32.mrf.mxu0
    %v1623 = vadd.f32 0.0, %v1622
    %1624 = vmatmul.f32.gmra.mxu0 %v1573
    %v1625 = vpop.f32.mrf.mxu0
    %v1626 = vadd.f32 0.0, %v1625
    %1627 = vdwg.mxu0
    %1628 = vmatpush.msra.mxu0 0.0
    %1629 = vmatpush.msra.mxu0 0.0
    %1630 = vmatpush.msra.mxu0 0.0
    %1631 = vmatpush.msra.mxu0 0.0
    %1632 = vmatpush.msra.mxu0 0.0
    %1633 = vmatpush.msra.mxu0 0.0
    %1634 = vmatpush.msra.mxu0 0.0
    %1635 = vmatpush.msra.mxu0 0.0
    %1636 = vmatpush.msra.mxu0 0.0
    %1637 = vmatpush.msra.mxu0 0.0
    %1638 = vmatpush.msra.mxu0 0.0
    %1639 = vmatpush.msra.mxu0 0.0
    %1640 = vmatpush.msra.mxu0 %v1523
    %1641 = vmatpush.msra.mxu0 %v1520
    %1642 = vmatpush.msra.mxu0 %v1517
    %1643 = vmatpush.msra.mxu0 %v1514
    %1644 = vmatmul.f32.gmra.mxu0 %v1540
    %v1645 = vpop.f32.mrf.mxu0
    %v1646 = vadd.f32 0.0, %v1645
    %1647 = vmatmul.f32.gmra.mxu0 %v1543
    %v1648 = vpop.f32.mrf.mxu0
    %v1649 = vadd.f32 0.0, %v1648
    %1650 = vmatmul.f32.gmra.mxu0 %v1546
    %v1651 = vpop.f32.mrf.mxu0
    %v1652 = vadd.f32 0.0, %v1651
    %1653 = vmatmul.f32.gmra.mxu0 %v1549
    %v1654 = vpop.f32.mrf.mxu0
    %v1655 = vadd.f32 0.0, %v1654
    %1656 = vmatmul.f32.gmra.mxu0 %v1552
    %v1657 = vpop.f32.mrf.mxu0
    %v1658 = vadd.f32 0.0, %v1657
    %1659 = vmatmul.f32.gmra.mxu0 %v1555
    %v1660 = vpop.f32.mrf.mxu0
    %v1661 = vadd.f32 0.0, %v1660
    %1662 = vmatmul.f32.gmra.mxu0 %v1558
    %v1663 = vpop.f32.mrf.mxu0
    %v1664 = vadd.f32 0.0, %v1663
    %1665 = vmatmul.f32.gmra.mxu0 %v1561
    %v1666 = vpop.f32.mrf.mxu0
    %v1667 = vadd.f32 0.0, %v1666
    %1668 = vmatmul.f32.gmra.mxu0 %v1564
    %v1669 = vpop.f32.mrf.mxu0
    %v1670 = vadd.f32 0.0, %v1669
    %1671 = vmatmul.f32.gmra.mxu0 %v1567
    %v1672 = vpop.f32.mrf.mxu0
    %v1673 = vadd.f32 0.0, %v1672
    %1674 = vmatmul.f32.gmra.mxu0 %v1570
    %v1675 = vpop.f32.mrf.mxu0
    %v1676 = vadd.f32 0.0, %v1675
    %1677 = vmatmul.f32.gmra.mxu0 %v1573
    %v1678 = vpop.f32.mrf.mxu0
    %v1679 = vadd.f32 0.0, %v1678
    %1680 = vdwg.mxu0
    %v1681 = vmax.f32 %v1485, %v1593
    %v1682 = vmax.f32 %v1514, %v1646
    %v1683 = vmax.f32 %v1488, %v1596
    %v1684 = vmax.f32 %v1517, %v1649
    %v1685 = vmax.f32 %v1491, %v1599
    %v1686 = vmax.f32 %v1520, %v1652
    %v1687 = vmax.f32 %v1494, %v1602
    %v1688 = vmax.f32 %v1523, %v1655
    %v1689 = vmax.f32 %v1681, %v1605
    %v1690 = vmax.f32 %v1682, %v1658
    %v1691 = vmax.f32 %v1683, %v1608
    %v1692 = vmax.f32 %v1684, %v1661
    %v1693 = vmax.f32 %v1685, %v1611
    %v1694 = vmax.f32 %v1686, %v1664
    %v1695 = vmax.f32 %v1687, %v1614
    %v1696 = vmax.f32 %v1688, %v1667
    %v1697 = vmax.f32 %v1689, %v1617
    %v1698 = vmax.f32 %v1690, %v1670
    %v1699 = vmax.f32 %v1691, %v1620
    %v1700 = vmax.f32 %v1692, %v1673
    %v1701 = vmax.f32 %v1693, %v1623
    %v1702 = vmax.f32 %v1694, %v1676
    %v1703 = vmax.f32 %v1695, %v1626
    %v1704 = vmax.f32 %v1696, %v1679
    %v1705 = vadd.f32 %v1697, %v1531
    %v1706 = vadd.f32 %v1698, %v1532
    %v1707 = vadd.f32 %v1699, %v1533
    %v1708 = vadd.f32 %v1700, %v1534
    %v1709 = vadd.f32 %v1701, %v1535
    %v1710 = vadd.f32 %v1702, %v1536
    %v1711 = vadd.f32 %v1703, %v1537
    %v1712 = vadd.f32 %v1704, %v1538
    %v1713 = vmax.f32 %v1705, 0.0
    %v1714 = vmax.f32 %v1706, 0.0
    %v1715 = vmax.f32 %v1707, 0.0
    %v1716 = vmax.f32 %v1708, 0.0
    %v1717 = vmax.f32 %v1709, 0.0
    %v1718 = vmax.f32 %v1710, 0.0
    %v1719 = vmax.f32 %v1711, 0.0
    %v1720 = vmax.f32 %v1712, 0.0
    %v1721 = vmul.f32 %v1713, %v1713
    %v1722 = vmul.f32 %v1714, %v1714
    %v1723 = vmul.f32 %v1715, %v1715
    %v1724 = vmul.f32 %v1716, %v1716
    %v1725 = vmul.f32 %v1717, %v1717
    %v1726 = vmul.f32 %v1718, %v1718
    %v1727 = vmul.f32 %v1719, %v1719
    %v1728 = vmul.f32 %v1720, %v1720
    %v1729 = vadd.f32 %v1721, %v1722
    %1730 = vadd.xlane.f32.xlu0 %v1729
    %v1731 = vpop.xlane.xlu0 %1730
    %v1732 = vadd.f32 %v1723, %v1724
    %1733 = vadd.xlane.f32.xlu0 %v1732
    %v1734 = vpop.xlane.xlu0 %1733
    %v1735 = vadd.f32 %v1725, %v1726
    %1736 = vadd.xlane.f32.xlu0 %v1735
    %v1737 = vpop.xlane.xlu0 %1736
    %v1738 = vadd.f32 %v1727, %v1728
    %1739 = vadd.xlane.f32.xlu0 %v1738
    %v1740 = vpop.xlane.xlu0 %1739
    %1741 = vxpose.xlu0.b32.start [1/16] %v1731, 128
    %1742 = vxpose.xlu0.b32.cont [2/16] %v1734, 128
    %1743 = vxpose.xlu0.b32.cont [3/16] %v1737, 128
    %1744 = vxpose.xlu0.b32.cont [4/16] %v1740, 128
    %1745 = vxpose.xlu0.b32.cont [5/16] 0.0, 128
    %1746 = vxpose.xlu0.b32.cont [6/16] 0.0, 128
    %1747 = vxpose.xlu0.b32.cont [7/16] 0.0, 128
    %1748 = vxpose.xlu0.b32.cont [8/16] 0.0, 128
    %1749 = vxpose.xlu0.b32.cont [9/16] 0.0, 128
    %1750 = vxpose.xlu0.b32.cont [10/16] 0.0, 128
    %1751 = vxpose.xlu0.b32.cont [11/16] 0.0, 128
    %1752 = vxpose.xlu0.b32.cont [12/16] 0.0, 128
    %1753 = vxpose.xlu0.b32.cont [13/16] 0.0, 128
    %1754 = vxpose.xlu0.b32.cont [14/16] 0.0, 128
    %1755 = vxpose.xlu0.b32.cont [15/16] 0.0, 128
    %1756 = vxpose.xlu0.b32.end [16/16] 0.0, 128
    %v1757 = vpop.trf.xlu0
    %v1758 = vpop.trf.xlu0
    %v1759 = vpop.trf.xlu0
    %v1760 = vpop.trf.xlu0
    %v1761 = vpop.trf.xlu0
    %v1762 = vpop.trf.xlu0
    %v1763 = vpop.trf.xlu0
    %v1764 = vpop.trf.xlu0
    %v1765 = vpop.trf.xlu0
    %v1766 = vpop.trf.xlu0
    %v1767 = vpop.trf.xlu0
    %v1768 = vpop.trf.xlu0
    %v1769 = vpop.trf.xlu0
    %v1770 = vpop.trf.xlu0
    %v1771 = vpop.trf.xlu0
    %v1772 = vpop.trf.xlu0
    %1773 = vmatpush.xpose.msra.mxu0 0.0
    %1774 = vmatpush.xpose.msra.mxu0 0.0
    %1775 = vmatpush.xpose.msra.mxu0 0.0
    %1776 = vmatpush.xpose.msra.mxu0 0.0
    %1777 = vmatpush.xpose.msra.mxu0 0.0
    %1778 = vmatpush.xpose.msra.mxu0 0.0
    %1779 = vmatpush.xpose.msra.mxu0 0.0
    %1780 = vmatpush.xpose.msra.mxu0 0.0
    %1781 = vmatpush.xpose.msra.mxu0 0.0
    %1782 = vmatpush.xpose.msra.mxu0 0.0
    %1783 = vmatpush.xpose.msra.mxu0 0.0
    %1784 = vmatpush.xpose.msra.mxu0 0.0
    %1785 = vmatpush.xpose.msra.mxu0 %v1719
    %1786 = vmatpush.xpose.msra.mxu0 %v1717
    %1787 = vmatpush.xpose.msra.mxu0 %v1715
    %1788 = vmatpush.xpose.msra.mxu0 %v1713
    %1789 = vmatmul.f32.gmra.mxu0 %v1713
    %v1790 = vpop.f32.mrf.mxu0
    %v1791 = vadd.f32 0.0, %v1790
    %1792 = vmatmul.f32.gmra.mxu0 %v1715
    %v1793 = vpop.f32.mrf.mxu0
    %v1794 = vadd.f32 0.0, %v1793
    %1795 = vmatmul.f32.gmra.mxu0 %v1717
    %v1796 = vpop.f32.mrf.mxu0
    %v1797 = vadd.f32 0.0, %v1796
    %1798 = vmatmul.f32.gmra.mxu0 %v1719
    %v1799 = vpop.f32.mrf.mxu0
    %v1800 = vadd.f32 0.0, %v1799
    %1801 = vdwg.mxu0
    %1802 = vmatpush.xpose.msra.mxu0 0.0
    %1803 = vmatpush.xpose.msra.mxu0 0.0
    %1804 = vmatpush.xpose.msra.mxu0 0.0
    %1805 = vmatpush.xpose.msra.mxu0 0.0
    %1806 = vmatpush.xpose.msra.mxu0 0.0
    %1807 = vmatpush.xpose.msra.mxu0 0.0
    %1808 = vmatpush.xpose.msra.mxu0 0.0
    %1809 = vmatpush.xpose.msra.mxu0 0.0
    %1810 = vmatpush.xpose.msra.mxu0 0.0
    %1811 = vmatpush.xpose.msra.mxu0 0.0
    %1812 = vmatpush.xpose.msra.mxu0 0.0
    %1813 = vmatpush.xpose.msra.mxu0 0.0
    %1814 = vmatpush.xpose.msra.mxu0 %v1720
    %1815 = vmatpush.xpose.msra.mxu0 %v1718
    %1816 = vmatpush.xpose.msra.mxu0 %v1716
    %1817 = vmatpush.xpose.msra.mxu0 %v1714
    %1818 = vmatmul.f32.gmra.mxu0 %v1714
    %v1819 = vpop.f32.mrf.mxu0
    %v1820 = vadd.f32 %v1791, %v1819
    %1821 = vmatmul.f32.gmra.mxu0 %v1716
    %v1822 = vpop.f32.mrf.mxu0
    %v1823 = vadd.f32 %v1794, %v1822
    %1824 = vmatmul.f32.gmra.mxu0 %v1718
    %v1825 = vpop.f32.mrf.mxu0
    %v1826 = vadd.f32 %v1797, %v1825
    %1827 = vmatmul.f32.gmra.mxu0 %v1720
    %v1828 = vpop.f32.mrf.mxu0
    %v1829 = vadd.f32 %v1800, %v1828
    %1830 = vdwg.mxu0
    %v1831 = vmul.f32 %v1820, 2.0
    %v1832 = vmul.f32 %v1823, 2.0
    %v1833 = vmul.f32 %v1826, 2.0
    %v1834 = vmul.f32 %v1829, 2.0
    %v1835 = vperm.slane %v1757, 0
    %v1836 = vsub.f32 %v1835, %v1831
    %v1837 = vsub.f32 %v1835, %v1832
    %v1838 = vsub.f32 %v1835, %v1833
    %v1839 = vsub.f32 %v1835, %v1834
    %v1840 = vadd.f32 %v1836, %v122
    %v1841 = vadd.f32 %v1837, %v123
    %v1842 = vadd.f32 %v1838, %v124
    %v1843 = vadd.f32 %v1839, %v125
    %v1844 = vadd.f32 %v1840, 0.0
    %v1845 = vadd.f32 %v1841, 0.0
    %v1846 = vadd.f32 %v1842, 0.0
    %v1847 = vadd.f32 %v1843, 0.0
    %v1848 = vsel %vm237, %v1844, inf
    %1849 = vmin.xlane.f32.xlu0 %v1848
    %v1850 = vpop.xlane.xlu0 %1849
    %v1851 = vsel %vm237, %v1845, inf
    %1852 = vmin.xlane.f32.xlu0 %v1851
    %v1853 = vpop.xlane.xlu0 %1852
    %v1854 = vsel %vm237, %v1846, inf
    %1855 = vmin.xlane.f32.xlu0 %v1854
    %v1856 = vpop.xlane.xlu0 %1855
    %v1857 = vsel %vm237, %v1847, inf
    %1858 = vmin.xlane.f32.xlu0 %v1857
    %v1859 = vpop.xlane.xlu0 %1858
    %vm1860 = vcmp.le.f32.partialorder %v1844, %v1850
    %vm1861 = vcmp.le.f32.partialorder %v1845, %v1853
    %vm1862 = vcmp.le.f32.partialorder %v1846, %v1856
    %vm1863 = vcmp.le.f32.partialorder %v1847, %v1859
    %v1864 = vsel %vm1860, %v121, 32.0
    %v1865 = vsel %vm1861, %v121, 32.0
    %v1866 = vsel %vm1862, %v121, 32.0
    %v1867 = vsel %vm1863, %v121, 32.0
    %v1868 = vsel %vm237, %v1864, inf
    %1869 = vmin.xlane.f32.xlu0 %v1868
    %v1870 = vpop.xlane.xlu0 %1869
    %v1871 = vsel %vm237, %v1865, inf
    %1872 = vmin.xlane.f32.xlu0 %v1871
    %v1873 = vpop.xlane.xlu0 %1872
    %v1874 = vsel %vm237, %v1866, inf
    %1875 = vmin.xlane.f32.xlu0 %v1874
    %v1876 = vpop.xlane.xlu0 %1875
    %v1877 = vsel %vm237, %v1867, inf
    %1878 = vmin.xlane.f32.xlu0 %v1877
    %v1879 = vpop.xlane.xlu0 %1878
    %vm1880 = vcmp.eq.f32.partialorder %v121, %v1870
    %vm1881 = vcmp.eq.f32.partialorder %v121, %v1873
    %vm1882 = vcmp.eq.f32.partialorder %v121, %v1876
    %vm1883 = vcmp.eq.f32.partialorder %v121, %v1879
    %v1884 = vsel %vm1880, 1, 0
    %v1885 = vsel %vm1881, 1, 0
    %v1886 = vsel %vm1882, 1, 0
    %v1887 = vsel %vm1883, 1, 0
    %v1888 = vcvt.s32.f32 %v1884
    %v1889 = vcvt.s32.f32 %v1885
    %v1890 = vcvt.s32.f32 %v1886
    %v1891 = vcvt.s32.f32 %v1887
    %v1892 = vadd.f32 %v1888, 0.0
    %v1893 = vadd.f32 %v1889, 0.0
    %v1894 = vadd.f32 %v1890, 0.0
    %v1895 = vadd.f32 %v1891, 0.0
    %v1896 = vmul.f32 %v1892, 1e+09
    %v1897 = vmul.f32 %v1893, 1e+09
    %v1898 = vmul.f32 %v1894, 1e+09
    %v1899 = vmul.f32 %v1895, 1e+09
    %v1900 = vadd.f32 %v1840, %v1896
    %v1901 = vadd.f32 %v1841, %v1897
    %v1902 = vadd.f32 %v1842, %v1898
    %v1903 = vadd.f32 %v1843, %v1899
    %v1904 = vsel %vm237, %v1900, inf
    %1905 = vmin.xlane.f32.xlu0 %v1904
    %v1906 = vpop.xlane.xlu0 %1905
    %v1907 = vsel %vm237, %v1901, inf
    %1908 = vmin.xlane.f32.xlu0 %v1907
    %v1909 = vpop.xlane.xlu0 %1908
    %v1910 = vsel %vm237, %v1902, inf
    %1911 = vmin.xlane.f32.xlu0 %v1910
    %v1912 = vpop.xlane.xlu0 %1911
    %v1913 = vsel %vm237, %v1903, inf
    %1914 = vmin.xlane.f32.xlu0 %v1913
    %v1915 = vpop.xlane.xlu0 %1914
    %vm1916 = vcmp.le.f32.partialorder %v1900, %v1906
    %vm1917 = vcmp.le.f32.partialorder %v1901, %v1909
    %vm1918 = vcmp.le.f32.partialorder %v1902, %v1912
    %vm1919 = vcmp.le.f32.partialorder %v1903, %v1915
    %v1920 = vsel %vm1916, %v121, 32.0
    %v1921 = vsel %vm1917, %v121, 32.0
    %v1922 = vsel %vm1918, %v121, 32.0
    %v1923 = vsel %vm1919, %v121, 32.0
    %v1924 = vsel %vm237, %v1920, inf
    %1925 = vmin.xlane.f32.xlu0 %v1924
    %v1926 = vpop.xlane.xlu0 %1925
    %v1927 = vsel %vm237, %v1921, inf
    %1928 = vmin.xlane.f32.xlu0 %v1927
    %v1929 = vpop.xlane.xlu0 %1928
    %v1930 = vsel %vm237, %v1922, inf
    %1931 = vmin.xlane.f32.xlu0 %v1930
    %v1932 = vpop.xlane.xlu0 %1931
    %v1933 = vsel %vm237, %v1923, inf
    %1934 = vmin.xlane.f32.xlu0 %v1933
    %v1935 = vpop.xlane.xlu0 %1934
    %vm1936 = vcmp.eq.f32.partialorder %v121, %v1926
    %vm1937 = vcmp.eq.f32.partialorder %v121, %v1929
    %vm1938 = vcmp.eq.f32.partialorder %v121, %v1932
    %vm1939 = vcmp.eq.f32.partialorder %v121, %v1935
    %v1940 = vsel %vm1936, 1, 0
    %v1941 = vsel %vm1937, 1, 0
    %v1942 = vsel %vm1938, 1, 0
    %v1943 = vsel %vm1939, 1, 0
    %v1944 = vcvt.s32.f32 %v1940
    %v1945 = vcvt.s32.f32 %v1941
    %v1946 = vcvt.s32.f32 %v1942
    %v1947 = vcvt.s32.f32 %v1943
    %v1948 = vadd.f32 %v1892, %v1944
    %v1949 = vadd.f32 %v1893, %v1945
    %v1950 = vadd.f32 %v1894, %v1946
    %v1951 = vadd.f32 %v1895, %v1947
    %v1952 = vmul.f32 %v1948, 1e+09
    %v1953 = vmul.f32 %v1949, 1e+09
    %v1954 = vmul.f32 %v1950, 1e+09
    %v1955 = vmul.f32 %v1951, 1e+09
    %v1956 = vadd.f32 %v1840, %v1952
    %v1957 = vadd.f32 %v1841, %v1953
    %v1958 = vadd.f32 %v1842, %v1954
    %v1959 = vadd.f32 %v1843, %v1955
    %v1960 = vsel %vm237, %v1956, inf
    %1961 = vmin.xlane.f32.xlu0 %v1960
    %v1962 = vpop.xlane.xlu0 %1961
    %v1963 = vsel %vm237, %v1957, inf
    %1964 = vmin.xlane.f32.xlu0 %v1963
    %v1965 = vpop.xlane.xlu0 %1964
    %v1966 = vsel %vm237, %v1958, inf
    %1967 = vmin.xlane.f32.xlu0 %v1966
    %v1968 = vpop.xlane.xlu0 %1967
    %v1969 = vsel %vm237, %v1959, inf
    %1970 = vmin.xlane.f32.xlu0 %v1969
    %v1971 = vpop.xlane.xlu0 %1970
    %vm1972 = vcmp.le.f32.partialorder %v1956, %v1962
    %vm1973 = vcmp.le.f32.partialorder %v1957, %v1965
    %vm1974 = vcmp.le.f32.partialorder %v1958, %v1968
    %vm1975 = vcmp.le.f32.partialorder %v1959, %v1971
    %v1976 = vsel %vm1972, %v121, 32.0
    %v1977 = vsel %vm1973, %v121, 32.0
    %v1978 = vsel %vm1974, %v121, 32.0
    %v1979 = vsel %vm1975, %v121, 32.0
    %v1980 = vsel %vm237, %v1976, inf
    %1981 = vmin.xlane.f32.xlu0 %v1980
    %v1982 = vpop.xlane.xlu0 %1981
    %v1983 = vsel %vm237, %v1977, inf
    %1984 = vmin.xlane.f32.xlu0 %v1983
    %v1985 = vpop.xlane.xlu0 %1984
    %v1986 = vsel %vm237, %v1978, inf
    %1987 = vmin.xlane.f32.xlu0 %v1986
    %v1988 = vpop.xlane.xlu0 %1987
    %v1989 = vsel %vm237, %v1979, inf
    %1990 = vmin.xlane.f32.xlu0 %v1989
    %v1991 = vpop.xlane.xlu0 %1990
    %vm1992 = vcmp.eq.f32.partialorder %v121, %v1982
    %vm1993 = vcmp.eq.f32.partialorder %v121, %v1985
    %vm1994 = vcmp.eq.f32.partialorder %v121, %v1988
    %vm1995 = vcmp.eq.f32.partialorder %v121, %v1991
    %v1996 = vsel %vm1992, 1, 0
    %v1997 = vsel %vm1993, 1, 0
    %v1998 = vsel %vm1994, 1, 0
    %v1999 = vsel %vm1995, 1, 0
    %v2000 = vcvt.s32.f32 %v1996
    %v2001 = vcvt.s32.f32 %v1997
    %v2002 = vcvt.s32.f32 %v1998
    %v2003 = vcvt.s32.f32 %v1999
    %v2004 = vld [vmem:[#allocation4] sm:$0xff]
    %v2005 = vld [vmem:[#allocation4 + $0x8] sm:$0xff]
    %v2006 = vld [vmem:[#allocation4 + $0x10] sm:$0xff]
    %v2007 = vld [vmem:[#allocation4 + $0x18] sm:$0xff]
    %v2008 = vld [vmem:[#allocation4 + $0x20] sm:$0xff]
    %v2009 = vld [vmem:[#allocation4 + $0x28] sm:$0xff]
    %v2010 = vld [vmem:[#allocation4 + $0x30] sm:$0xff]
    %v2011 = vld [vmem:[#allocation4 + $0x38] sm:$0xff]
    %v2012 = vld [vmem:[#allocation4 + $0x40] sm:$0xff]
    %v2013 = vld [vmem:[#allocation4 + $0x48] sm:$0xff]
    %v2014 = vld [vmem:[#allocation4 + $0x50] sm:$0xff]
    %v2015 = vld [vmem:[#allocation4 + $0x58] sm:$0xff]
    %v2016 = vld [vmem:[#allocation4 + $0x60] sm:$0xff]
    %v2017 = vld [vmem:[#allocation4 + $0x68] sm:$0xff]
    %v2018 = vld [vmem:[#allocation4 + $0x70] sm:$0xff]
    %v2019 = vld [vmem:[#allocation4 + $0x78] sm:$0xff]
    %v2020 = vld [vmem:[#allocation4 + $0x80] sm:$0xff]
    %v2021 = vld [vmem:[#allocation4 + $0x88] sm:$0xff]
    %v2022 = vld [vmem:[#allocation4 + $0x90] sm:$0xff]
    %v2023 = vld [vmem:[#allocation4 + $0x98] sm:$0xff]
    %v2024 = vld [vmem:[#allocation4 + $0xa0] sm:$0xff]
    %v2025 = vld [vmem:[#allocation4 + $0xa8] sm:$0xff]
    %v2026 = vld [vmem:[#allocation4 + $0xb0] sm:$0xff]
    %v2027 = vld [vmem:[#allocation4 + $0xb8] sm:$0xff]
    %v2028 = vld [vmem:[#allocation4 + $0xc0] sm:$0xff]
    %v2029 = vld [vmem:[#allocation4 + $0xc8] sm:$0xff]
    %v2030 = vld [vmem:[#allocation4 + $0xd0] sm:$0xff]
    %v2031 = vld [vmem:[#allocation4 + $0xd8] sm:$0xff]
    %v2032 = vld [vmem:[#allocation4 + $0xe0] sm:$0xff]
    %v2033 = vld [vmem:[#allocation4 + $0xe8] sm:$0xff]
    %v2034 = vld [vmem:[#allocation4 + $0xf0] sm:$0xff]
    %v2035 = vld [vmem:[#allocation4 + $0xf8] sm:$0xff]
    %v2036 = vld [vmem:[#allocation4 + $0x100] sm:$0xff]
    %v2037 = vld [vmem:[#allocation4 + $0x108] sm:$0xff]
    %v2038 = vld [vmem:[#allocation4 + $0x110] sm:$0xff]
    %v2039 = vld [vmem:[#allocation4 + $0x118] sm:$0xff]
    %v2040 = vld [vmem:[#allocation4 + $0x120] sm:$0xff]
    %v2041 = vld [vmem:[#allocation4 + $0x128] sm:$0xff]
    %v2042 = vld [vmem:[#allocation4 + $0x130] sm:$0xff]
    %v2043 = vld [vmem:[#allocation4 + $0x138] sm:$0xff]
    %v2044 = vld [vmem:[#allocation4 + $0x140] sm:$0xff]
    %v2045 = vld [vmem:[#allocation4 + $0x148] sm:$0xff]
    %v2046 = vld [vmem:[#allocation4 + $0x150] sm:$0xff]
    %v2047 = vld [vmem:[#allocation4 + $0x158] sm:$0xff]
    %v2048 = vld [vmem:[#allocation4 + $0x160] sm:$0xff]
    %v2049 = vld [vmem:[#allocation4 + $0x168] sm:$0xff]
    %v2050 = vld [vmem:[#allocation4 + $0x170] sm:$0xff]
    %v2051 = vld [vmem:[#allocation4 + $0x178] sm:$0xff]
    %v2052 = vld [vmem:[#allocation4 + $0x180] sm:$0xff]
    %v2053 = vld [vmem:[#allocation4 + $0x188] sm:$0xff]
    %v2054 = vld [vmem:[#allocation4 + $0x190] sm:$0xff]
    %v2055 = vld [vmem:[#allocation4 + $0x198] sm:$0xff]
    %v2056 = vld [vmem:[#allocation4 + $0x1a0] sm:$0xff]
    %v2057 = vld [vmem:[#allocation4 + $0x1a8] sm:$0xff]
    %v2058 = vld [vmem:[#allocation4 + $0x1b0] sm:$0xff]
    %v2059 = vld [vmem:[#allocation4 + $0x1b8] sm:$0xff]
    %v2060 = vld [vmem:[#allocation4 + $0x1c0] sm:$0xff]
    %v2061 = vld [vmem:[#allocation4 + $0x1c8] sm:$0xff]
    %v2062 = vld [vmem:[#allocation4 + $0x1d0] sm:$0xff]
    %v2063 = vld [vmem:[#allocation4 + $0x1d8] sm:$0xff]
    %v2064 = vld [vmem:[#allocation4 + $0x1e0] sm:$0xff]
    %v2065 = vld [vmem:[#allocation4 + $0x1e8] sm:$0xff]
    %v2066 = vld [vmem:[#allocation4 + $0x1f0] sm:$0xff]
    %v2067 = vld [vmem:[#allocation4 + $0x1f8] sm:$0xff]
    %v2068 = vld [vmem:[#allocation4 + $0x200] sm:$0xff]
    %v2069 = vld [vmem:[#allocation4 + $0x208] sm:$0xff]
    %v2070 = vld [vmem:[#allocation4 + $0x210] sm:$0xff]
    %v2071 = vld [vmem:[#allocation4 + $0x218] sm:$0xff]
    %v2072 = vld [vmem:[#allocation4 + $0x220] sm:$0xff]
    %v2073 = vld [vmem:[#allocation4 + $0x228] sm:$0xff]
    %v2074 = vld [vmem:[#allocation4 + $0x230] sm:$0xff]
    %v2075 = vld [vmem:[#allocation4 + $0x238] sm:$0xff]
    %v2076 = vld [vmem:[#allocation4 + $0x240] sm:$0xff]
    %v2077 = vld [vmem:[#allocation4 + $0x248] sm:$0xff]
    %v2078 = vld [vmem:[#allocation4 + $0x250] sm:$0xff]
    %v2079 = vld [vmem:[#allocation4 + $0x258] sm:$0xff]
    %v2080 = vld [vmem:[#allocation4 + $0x260] sm:$0xff]
    %v2081 = vld [vmem:[#allocation4 + $0x268] sm:$0xff]
    %v2082 = vld [vmem:[#allocation4 + $0x270] sm:$0xff]
    %v2083 = vld [vmem:[#allocation4 + $0x278] sm:$0xff]
    %v2084 = vld [vmem:[#allocation4 + $0x280] sm:$0xff]
    %v2085 = vld [vmem:[#allocation4 + $0x288] sm:$0xff]
    %v2086 = vld [vmem:[#allocation4 + $0x290] sm:$0xff]
    %v2087 = vld [vmem:[#allocation4 + $0x298] sm:$0xff]
    %v2088 = vld [vmem:[#allocation4 + $0x2a0] sm:$0xff]
    %v2089 = vld [vmem:[#allocation4 + $0x2a8] sm:$0xff]
    %v2090 = vld [vmem:[#allocation4 + $0x2b0] sm:$0xff]
    %v2091 = vld [vmem:[#allocation4 + $0x2b8] sm:$0xff]
    %v2092 = vld [vmem:[#allocation4 + $0x2c0] sm:$0xff]
    %v2093 = vld [vmem:[#allocation4 + $0x2c8] sm:$0xff]
    %v2094 = vld [vmem:[#allocation4 + $0x2d0] sm:$0xff]
    %v2095 = vld [vmem:[#allocation4 + $0x2d8] sm:$0xff]
    %v2096 = vld [vmem:[#allocation4 + $0x2e0] sm:$0xff]
    %v2097 = vld [vmem:[#allocation4 + $0x2e8] sm:$0xff]
    %v2098 = vld [vmem:[#allocation4 + $0x2f0] sm:$0xff]
    %v2099 = vld [vmem:[#allocation4 + $0x2f8] sm:$0xff]
    %v2100 = vld [vmem:[#allocation4 + $0x300] sm:$0xff]
    %v2101 = vld [vmem:[#allocation4 + $0x308] sm:$0xff]
    %v2102 = vld [vmem:[#allocation4 + $0x310] sm:$0xff]
    %v2103 = vld [vmem:[#allocation4 + $0x318] sm:$0xff]
    %v2104 = vld [vmem:[#allocation4 + $0x320] sm:$0xff]
    %v2105 = vld [vmem:[#allocation4 + $0x328] sm:$0xff]
    %v2106 = vld [vmem:[#allocation4 + $0x330] sm:$0xff]
    %v2107 = vld [vmem:[#allocation4 + $0x338] sm:$0xff]
    %v2108 = vld [vmem:[#allocation4 + $0x340] sm:$0xff]
    %v2109 = vld [vmem:[#allocation4 + $0x348] sm:$0xff]
    %v2110 = vld [vmem:[#allocation4 + $0x350] sm:$0xff]
    %v2111 = vld [vmem:[#allocation4 + $0x358] sm:$0xff]
    %v2112 = vld [vmem:[#allocation4 + $0x360] sm:$0xff]
    %v2113 = vld [vmem:[#allocation4 + $0x368] sm:$0xff]
    %v2114 = vld [vmem:[#allocation4 + $0x370] sm:$0xff]
    %v2115 = vld [vmem:[#allocation4 + $0x378] sm:$0xff]
    %v2116 = vld [vmem:[#allocation4 + $0x380] sm:$0xff]
    %v2117 = vld [vmem:[#allocation4 + $0x388] sm:$0xff]
    %v2118 = vld [vmem:[#allocation4 + $0x390] sm:$0xff]
    %v2119 = vld [vmem:[#allocation4 + $0x398] sm:$0xff]
    %v2120 = vld [vmem:[#allocation4 + $0x3a0] sm:$0xff]
    %v2121 = vld [vmem:[#allocation4 + $0x3a8] sm:$0xff]
    %v2122 = vld [vmem:[#allocation4 + $0x3b0] sm:$0xff]
    %v2123 = vld [vmem:[#allocation4 + $0x3b8] sm:$0xff]
    %v2124 = vld [vmem:[#allocation4 + $0x3c0] sm:$0xff]
    %v2125 = vld [vmem:[#allocation4 + $0x3c8] sm:$0xff]
    %v2126 = vld [vmem:[#allocation4 + $0x3d0] sm:$0xff]
    %v2127 = vld [vmem:[#allocation4 + $0x3d8] sm:$0xff]
    %v2128 = vld [vmem:[#allocation4 + $0x3e0] sm:$0xff]
    %v2129 = vld [vmem:[#allocation4 + $0x3e8] sm:$0xff]
    %v2130 = vld [vmem:[#allocation4 + $0x3f0] sm:$0xff]
    %v2131 = vld [vmem:[#allocation4 + $0x3f8] sm:$0xff]
    %v2132 = vld [vmem:[#allocation4 + $0x400] sm:$0xff]
    %v2133 = vld [vmem:[#allocation4 + $0x408] sm:$0xff]
    %v2134 = vld [vmem:[#allocation4 + $0x410] sm:$0xff]
    %v2135 = vld [vmem:[#allocation4 + $0x418] sm:$0xff]
    %v2136 = vld [vmem:[#allocation4 + $0x420] sm:$0xff]
    %v2137 = vld [vmem:[#allocation4 + $0x428] sm:$0xff]
    %v2138 = vld [vmem:[#allocation4 + $0x430] sm:$0xff]
    %v2139 = vld [vmem:[#allocation4 + $0x438] sm:$0xff]
    %v2140 = vld [vmem:[#allocation4 + $0x440] sm:$0xff]
    %v2141 = vld [vmem:[#allocation4 + $0x448] sm:$0xff]
    %v2142 = vld [vmem:[#allocation4 + $0x450] sm:$0xff]
    %v2143 = vld [vmem:[#allocation4 + $0x458] sm:$0xff]
    %v2144 = vld [vmem:[#allocation4 + $0x460] sm:$0xff]
    %v2145 = vld [vmem:[#allocation4 + $0x468] sm:$0xff]
    %v2146 = vld [vmem:[#allocation4 + $0x470] sm:$0xff]
    %v2147 = vld [vmem:[#allocation4 + $0x478] sm:$0xff]
    %v2148 = vld [vmem:[#allocation4 + $0x480] sm:$0xff]
    %v2149 = vld [vmem:[#allocation4 + $0x488] sm:$0xff]
    %v2150 = vld [vmem:[#allocation4 + $0x490] sm:$0xff]
    %v2151 = vld [vmem:[#allocation4 + $0x498] sm:$0xff]
    %v2152 = vld [vmem:[#allocation4 + $0x4a0] sm:$0xff]
    %v2153 = vld [vmem:[#allocation4 + $0x4a8] sm:$0xff]
    %v2154 = vld [vmem:[#allocation4 + $0x4b0] sm:$0xff]
    %v2155 = vld [vmem:[#allocation4 + $0x4b8] sm:$0xff]
    %v2156 = vld [vmem:[#allocation4 + $0x4c0] sm:$0xff]
    %v2157 = vld [vmem:[#allocation4 + $0x4c8] sm:$0xff]
    %v2158 = vld [vmem:[#allocation4 + $0x4d0] sm:$0xff]
    %v2159 = vld [vmem:[#allocation4 + $0x4d8] sm:$0xff]
    %v2160 = vld [vmem:[#allocation4 + $0x4e0] sm:$0xff]
    %v2161 = vld [vmem:[#allocation4 + $0x4e8] sm:$0xff]
    %v2162 = vld [vmem:[#allocation4 + $0x4f0] sm:$0xff]
    %v2163 = vld [vmem:[#allocation4 + $0x4f8] sm:$0xff]
    %v2164 = vld [vmem:[#allocation4 + $0x500] sm:$0xff]
    %v2165 = vld [vmem:[#allocation4 + $0x508] sm:$0xff]
    %v2166 = vld [vmem:[#allocation4 + $0x510] sm:$0xff]
    %v2167 = vld [vmem:[#allocation4 + $0x518] sm:$0xff]
    %v2168 = vld [vmem:[#allocation4 + $0x520] sm:$0xff]
    %v2169 = vld [vmem:[#allocation4 + $0x528] sm:$0xff]
    %v2170 = vld [vmem:[#allocation4 + $0x530] sm:$0xff]
    %v2171 = vld [vmem:[#allocation4 + $0x538] sm:$0xff]
    %v2172 = vld [vmem:[#allocation4 + $0x540] sm:$0xff]
    %v2173 = vld [vmem:[#allocation4 + $0x548] sm:$0xff]
    %v2174 = vld [vmem:[#allocation4 + $0x550] sm:$0xff]
    %v2175 = vld [vmem:[#allocation4 + $0x558] sm:$0xff]
    %v2176 = vld [vmem:[#allocation4 + $0x560] sm:$0xff]
    %v2177 = vld [vmem:[#allocation4 + $0x568] sm:$0xff]
    %v2178 = vld [vmem:[#allocation4 + $0x570] sm:$0xff]
    %v2179 = vld [vmem:[#allocation4 + $0x578] sm:$0xff]
    %v2180 = vld [vmem:[#allocation4 + $0x580] sm:$0xff]
    %v2181 = vld [vmem:[#allocation4 + $0x588] sm:$0xff]
    %v2182 = vld [vmem:[#allocation4 + $0x590] sm:$0xff]
    %v2183 = vld [vmem:[#allocation4 + $0x598] sm:$0xff]
    %v2184 = vld [vmem:[#allocation4 + $0x5a0] sm:$0xff]
    %v2185 = vld [vmem:[#allocation4 + $0x5a8] sm:$0xff]
    %v2186 = vld [vmem:[#allocation4 + $0x5b0] sm:$0xff]
    %v2187 = vld [vmem:[#allocation4 + $0x5b8] sm:$0xff]
    %v2188 = vld [vmem:[#allocation4 + $0x5c0] sm:$0xff]
    %v2189 = vld [vmem:[#allocation4 + $0x5c8] sm:$0xff]
    %v2190 = vld [vmem:[#allocation4 + $0x5d0] sm:$0xff]
    %v2191 = vld [vmem:[#allocation4 + $0x5d8] sm:$0xff]
    %v2192 = vld [vmem:[#allocation4 + $0x5e0] sm:$0xff]
    %v2193 = vld [vmem:[#allocation4 + $0x5e8] sm:$0xff]
    %v2194 = vld [vmem:[#allocation4 + $0x5f0] sm:$0xff]
    %v2195 = vld [vmem:[#allocation4 + $0x5f8] sm:$0xff]
    %v2196 = vld [vmem:[#allocation4 + $0x600] sm:$0xff]
    %v2197 = vld [vmem:[#allocation4 + $0x608] sm:$0xff]
    %v2198 = vld [vmem:[#allocation4 + $0x610] sm:$0xff]
    %v2199 = vld [vmem:[#allocation4 + $0x618] sm:$0xff]
    %v2200 = vld [vmem:[#allocation4 + $0x620] sm:$0xff]
    %v2201 = vld [vmem:[#allocation4 + $0x628] sm:$0xff]
    %v2202 = vld [vmem:[#allocation4 + $0x630] sm:$0xff]
    %v2203 = vld [vmem:[#allocation4 + $0x638] sm:$0xff]
    %v2204 = vld [vmem:[#allocation4 + $0x640] sm:$0xff]
    %v2205 = vld [vmem:[#allocation4 + $0x648] sm:$0xff]
    %v2206 = vld [vmem:[#allocation4 + $0x650] sm:$0xff]
    %v2207 = vld [vmem:[#allocation4 + $0x658] sm:$0xff]
    %v2208 = vld [vmem:[#allocation4 + $0x660] sm:$0xff]
    %v2209 = vld [vmem:[#allocation4 + $0x668] sm:$0xff]
    %v2210 = vld [vmem:[#allocation4 + $0x670] sm:$0xff]
    %v2211 = vld [vmem:[#allocation4 + $0x678] sm:$0xff]
    %v2212 = vld [vmem:[#allocation4 + $0x680] sm:$0xff]
    %v2213 = vld [vmem:[#allocation4 + $0x688] sm:$0xff]
    %v2214 = vld [vmem:[#allocation4 + $0x690] sm:$0xff]
    %v2215 = vld [vmem:[#allocation4 + $0x698] sm:$0xff]
    %v2216 = vld [vmem:[#allocation4 + $0x6a0] sm:$0xff]
    %v2217 = vld [vmem:[#allocation4 + $0x6a8] sm:$0xff]
    %v2218 = vld [vmem:[#allocation4 + $0x6b0] sm:$0xff]
    %v2219 = vld [vmem:[#allocation4 + $0x6b8] sm:$0xff]
    %v2220 = vld [vmem:[#allocation4 + $0x6c0] sm:$0xff]
    %v2221 = vld [vmem:[#allocation4 + $0x6c8] sm:$0xff]
    %v2222 = vld [vmem:[#allocation4 + $0x6d0] sm:$0xff]
    %v2223 = vld [vmem:[#allocation4 + $0x6d8] sm:$0xff]
    %v2224 = vld [vmem:[#allocation4 + $0x6e0] sm:$0xff]
    %v2225 = vld [vmem:[#allocation4 + $0x6e8] sm:$0xff]
    %v2226 = vld [vmem:[#allocation4 + $0x6f0] sm:$0xff]
    %v2227 = vld [vmem:[#allocation4 + $0x6f8] sm:$0xff]
    %v2228 = vld [vmem:[#allocation4 + $0x700] sm:$0xff]
    %v2229 = vld [vmem:[#allocation4 + $0x708] sm:$0xff]
    %v2230 = vld [vmem:[#allocation4 + $0x710] sm:$0xff]
    %v2231 = vld [vmem:[#allocation4 + $0x718] sm:$0xff]
    %v2232 = vld [vmem:[#allocation4 + $0x720] sm:$0xff]
    %v2233 = vld [vmem:[#allocation4 + $0x728] sm:$0xff]
    %v2234 = vld [vmem:[#allocation4 + $0x730] sm:$0xff]
    %v2235 = vld [vmem:[#allocation4 + $0x738] sm:$0xff]
    %v2236 = vld [vmem:[#allocation4 + $0x740] sm:$0xff]
    %v2237 = vld [vmem:[#allocation4 + $0x748] sm:$0xff]
    %v2238 = vld [vmem:[#allocation4 + $0x750] sm:$0xff]
    %v2239 = vld [vmem:[#allocation4 + $0x758] sm:$0xff]
    %v2240 = vld [vmem:[#allocation4 + $0x760] sm:$0xff]
    %v2241 = vld [vmem:[#allocation4 + $0x768] sm:$0xff]
    %v2242 = vld [vmem:[#allocation4 + $0x770] sm:$0xff]
    %v2243 = vld [vmem:[#allocation4 + $0x778] sm:$0xff]
    %v2244 = vld [vmem:[#allocation4 + $0x780] sm:$0xff]
    %v2245 = vld [vmem:[#allocation4 + $0x788] sm:$0xff]
    %v2246 = vld [vmem:[#allocation4 + $0x790] sm:$0xff]
    %v2247 = vld [vmem:[#allocation4 + $0x798] sm:$0xff]
    %v2248 = vld [vmem:[#allocation4 + $0x7a0] sm:$0xff]
    %v2249 = vld [vmem:[#allocation4 + $0x7a8] sm:$0xff]
    %v2250 = vld [vmem:[#allocation4 + $0x7b0] sm:$0xff]
    %v2251 = vld [vmem:[#allocation4 + $0x7b8] sm:$0xff]
    %v2252 = vld [vmem:[#allocation4 + $0x7c0] sm:$0xff]
    %v2253 = vld [vmem:[#allocation4 + $0x7c8] sm:$0xff]
    %v2254 = vld [vmem:[#allocation4 + $0x7d0] sm:$0xff]
    %v2255 = vld [vmem:[#allocation4 + $0x7d8] sm:$0xff]
    %v2256 = vld [vmem:[#allocation4 + $0x7e0] sm:$0xff]
    %v2257 = vld [vmem:[#allocation4 + $0x7e8] sm:$0xff]
    %v2258 = vld [vmem:[#allocation4 + $0x7f0] sm:$0xff]
    %v2259 = vld [vmem:[#allocation4 + $0x7f8] sm:$0xff]
    %2260 = vmatpush.msra.mxu0 %v2124
    %2261 = vmatpush.msra.mxu0 %v2116
    %2262 = vmatpush.msra.mxu0 %v2108
    %2263 = vmatpush.msra.mxu0 %v2100
    %2264 = vmatpush.msra.mxu0 %v2092
    %2265 = vmatpush.msra.mxu0 %v2084
    %2266 = vmatpush.msra.mxu0 %v2076
    %2267 = vmatpush.msra.mxu0 %v2068
    %2268 = vmatpush.msra.mxu0 %v2060
    %2269 = vmatpush.msra.mxu0 %v2052
    %2270 = vmatpush.msra.mxu0 %v2044
    %2271 = vmatpush.msra.mxu0 %v2036
    %2272 = vmatpush.msra.mxu0 %v2028
    %2273 = vmatpush.msra.mxu0 %v2020
    %2274 = vmatpush.msra.mxu0 %v2012
    %2275 = vmatpush.msra.mxu0 %v2004
    %2276 = vmatmul.f32.gmra.mxu0 %v1713
    %v2277 = vpop.f32.mrf.mxu0
    %v2278 = vadd.f32 0.0, %v2277
    %2279 = vmatmul.f32.gmra.mxu0 %v1715
    %v2280 = vpop.f32.mrf.mxu0
    %v2281 = vadd.f32 0.0, %v2280
    %2282 = vmatmul.f32.gmra.mxu0 %v1717
    %v2283 = vpop.f32.mrf.mxu0
    %v2284 = vadd.f32 0.0, %v2283
    %2285 = vmatmul.f32.gmra.mxu0 %v1719
    %v2286 = vpop.f32.mrf.mxu0
    %v2287 = vadd.f32 0.0, %v2286
    %2288 = vdwg.mxu0
    %2289 = vmatpush.msra.mxu0 %v2252
    %2290 = vmatpush.msra.mxu0 %v2244
    %2291 = vmatpush.msra.mxu0 %v2236
    %2292 = vmatpush.msra.mxu0 %v2228
    %2293 = vmatpush.msra.mxu0 %v2220
    %2294 = vmatpush.msra.mxu0 %v2212
    %2295 = vmatpush.msra.mxu0 %v2204
    %2296 = vmatpush.msra.mxu0 %v2196
    %2297 = vmatpush.msra.mxu0 %v2188
    %2298 = vmatpush.msra.mxu0 %v2180
    %2299 = vmatpush.msra.mxu0 %v2172
    %2300 = vmatpush.msra.mxu0 %v2164
    %2301 = vmatpush.msra.mxu0 %v2156
    %2302 = vmatpush.msra.mxu0 %v2148
    %2303 = vmatpush.msra.mxu0 %v2140
    %2304 = vmatpush.msra.mxu0 %v2132
    %2305 = vmatmul.f32.gmra.mxu0 %v1714
    %v2306 = vpop.f32.mrf.mxu0
    %v2307 = vadd.f32 %v2278, %v2306
    %2308 = vmatmul.f32.gmra.mxu0 %v1716
    %v2309 = vpop.f32.mrf.mxu0
    %v2310 = vadd.f32 %v2281, %v2309
    %2311 = vmatmul.f32.gmra.mxu0 %v1718
    %v2312 = vpop.f32.mrf.mxu0
    %v2313 = vadd.f32 %v2284, %v2312
    %2314 = vmatmul.f32.gmra.mxu0 %v1720
    %v2315 = vpop.f32.mrf.mxu0
    %v2316 = vadd.f32 %v2287, %v2315
    %2317 = vdwg.mxu0
    %2318 = vmatpush.msra.mxu0 %v2125
    %2319 = vmatpush.msra.mxu0 %v2117
    %2320 = vmatpush.msra.mxu0 %v2109
    %2321 = vmatpush.msra.mxu0 %v2101
    %2322 = vmatpush.msra.mxu0 %v2093
    %2323 = vmatpush.msra.mxu0 %v2085
    %2324 = vmatpush.msra.mxu0 %v2077
    %2325 = vmatpush.msra.mxu0 %v2069
    %2326 = vmatpush.msra.mxu0 %v2061
    %2327 = vmatpush.msra.mxu0 %v2053
    %2328 = vmatpush.msra.mxu0 %v2045
    %2329 = vmatpush.msra.mxu0 %v2037
    %2330 = vmatpush.msra.mxu0 %v2029
    %2331 = vmatpush.msra.mxu0 %v2021
    %2332 = vmatpush.msra.mxu0 %v2013
    %2333 = vmatpush.msra.mxu0 %v2005
    %2334 = vmatmul.f32.gmra.mxu0 %v1713
    %v2335 = vpop.f32.mrf.mxu0
    %v2336 = vadd.f32 0.0, %v2335
    %2337 = vmatmul.f32.gmra.mxu0 %v1715
    %v2338 = vpop.f32.mrf.mxu0
    %v2339 = vadd.f32 0.0, %v2338
    %2340 = vmatmul.f32.gmra.mxu0 %v1717
    %v2341 = vpop.f32.mrf.mxu0
    %v2342 = vadd.f32 0.0, %v2341
    %2343 = vmatmul.f32.gmra.mxu0 %v1719
    %v2344 = vpop.f32.mrf.mxu0
    %v2345 = vadd.f32 0.0, %v2344
    %2346 = vdwg.mxu0
    %2347 = vmatpush.msra.mxu0 %v2253
    %2348 = vmatpush.msra.mxu0 %v2245
    %2349 = vmatpush.msra.mxu0 %v2237
    %2350 = vmatpush.msra.mxu0 %v2229
    %2351 = vmatpush.msra.mxu0 %v2221
    %2352 = vmatpush.msra.mxu0 %v2213
    %2353 = vmatpush.msra.mxu0 %v2205
    %2354 = vmatpush.msra.mxu0 %v2197
    %2355 = vmatpush.msra.mxu0 %v2189
    %2356 = vmatpush.msra.mxu0 %v2181
    %2357 = vmatpush.msra.mxu0 %v2173
    %2358 = vmatpush.msra.mxu0 %v2165
    %2359 = vmatpush.msra.mxu0 %v2157
    %2360 = vmatpush.msra.mxu0 %v2149
    %2361 = vmatpush.msra.mxu0 %v2141
    %2362 = vmatpush.msra.mxu0 %v2133
    %2363 = vmatmul.f32.gmra.mxu0 %v1714
    %v2364 = vpop.f32.mrf.mxu0
    %v2365 = vadd.f32 %v2336, %v2364
    %2366 = vmatmul.f32.gmra.mxu0 %v1716
    %v2367 = vpop.f32.mrf.mxu0
    %v2368 = vadd.f32 %v2339, %v2367
    %2369 = vmatmul.f32.gmra.mxu0 %v1718
    %v2370 = vpop.f32.mrf.mxu0
    %v2371 = vadd.f32 %v2342, %v2370
    %2372 = vmatmul.f32.gmra.mxu0 %v1720
    %v2373 = vpop.f32.mrf.mxu0
    %v2374 = vadd.f32 %v2345, %v2373
    %2375 = vdwg.mxu0
    %2376 = vmatpush.msra.mxu0 %v2126
    %2377 = vmatpush.msra.mxu0 %v2118
    %2378 = vmatpush.msra.mxu0 %v2110
    %2379 = vmatpush.msra.mxu0 %v2102
    %2380 = vmatpush.msra.mxu0 %v2094
    %2381 = vmatpush.msra.mxu0 %v2086
    %2382 = vmatpush.msra.mxu0 %v2078
    %2383 = vmatpush.msra.mxu0 %v2070
    %2384 = vmatpush.msra.mxu0 %v2062
    %2385 = vmatpush.msra.mxu0 %v2054
    %2386 = vmatpush.msra.mxu0 %v2046
    %2387 = vmatpush.msra.mxu0 %v2038
    %2388 = vmatpush.msra.mxu0 %v2030
    %2389 = vmatpush.msra.mxu0 %v2022
    %2390 = vmatpush.msra.mxu0 %v2014
    %2391 = vmatpush.msra.mxu0 %v2006
    %2392 = vmatmul.f32.gmra.mxu0 %v1713
    %v2393 = vpop.f32.mrf.mxu0
    %v2394 = vadd.f32 0.0, %v2393
    %2395 = vmatmul.f32.gmra.mxu0 %v1715
    %v2396 = vpop.f32.mrf.mxu0
    %v2397 = vadd.f32 0.0, %v2396
    %2398 = vmatmul.f32.gmra.mxu0 %v1717
    %v2399 = vpop.f32.mrf.mxu0
    %v2400 = vadd.f32 0.0, %v2399
    %2401 = vmatmul.f32.gmra.mxu0 %v1719
    %v2402 = vpop.f32.mrf.mxu0
    %v2403 = vadd.f32 0.0, %v2402
    %2404 = vdwg.mxu0
    %2405 = vmatpush.msra.mxu0 %v2254
    %2406 = vmatpush.msra.mxu0 %v2246
    %2407 = vmatpush.msra.mxu0 %v2238
    %2408 = vmatpush.msra.mxu0 %v2230
    %2409 = vmatpush.msra.mxu0 %v2222
    %2410 = vmatpush.msra.mxu0 %v2214
    %2411 = vmatpush.msra.mxu0 %v2206
    %2412 = vmatpush.msra.mxu0 %v2198
    %2413 = vmatpush.msra.mxu0 %v2190
    %2414 = vmatpush.msra.mxu0 %v2182
    %2415 = vmatpush.msra.mxu0 %v2174
    %2416 = vmatpush.msra.mxu0 %v2166
    %2417 = vmatpush.msra.mxu0 %v2158
    %2418 = vmatpush.msra.mxu0 %v2150
    %2419 = vmatpush.msra.mxu0 %v2142
    %2420 = vmatpush.msra.mxu0 %v2134
    %2421 = vmatmul.f32.gmra.mxu0 %v1714
    %v2422 = vpop.f32.mrf.mxu0
    %v2423 = vadd.f32 %v2394, %v2422
    %2424 = vmatmul.f32.gmra.mxu0 %v1716
    %v2425 = vpop.f32.mrf.mxu0
    %v2426 = vadd.f32 %v2397, %v2425
    %2427 = vmatmul.f32.gmra.mxu0 %v1718
    %v2428 = vpop.f32.mrf.mxu0
    %v2429 = vadd.f32 %v2400, %v2428
    %2430 = vmatmul.f32.gmra.mxu0 %v1720
    %v2431 = vpop.f32.mrf.mxu0
    %v2432 = vadd.f32 %v2403, %v2431
    %2433 = vdwg.mxu0
    %2434 = vmatpush.msra.mxu0 %v2127
    %2435 = vmatpush.msra.mxu0 %v2119
    %2436 = vmatpush.msra.mxu0 %v2111
    %2437 = vmatpush.msra.mxu0 %v2103
    %2438 = vmatpush.msra.mxu0 %v2095
    %2439 = vmatpush.msra.mxu0 %v2087
    %2440 = vmatpush.msra.mxu0 %v2079
    %2441 = vmatpush.msra.mxu0 %v2071
    %2442 = vmatpush.msra.mxu0 %v2063
    %2443 = vmatpush.msra.mxu0 %v2055
    %2444 = vmatpush.msra.mxu0 %v2047
    %2445 = vmatpush.msra.mxu0 %v2039
    %2446 = vmatpush.msra.mxu0 %v2031
    %2447 = vmatpush.msra.mxu0 %v2023
    %2448 = vmatpush.msra.mxu0 %v2015
    %2449 = vmatpush.msra.mxu0 %v2007
    %2450 = vmatmul.f32.gmra.mxu0 %v1713
    %v2451 = vpop.f32.mrf.mxu0
    %v2452 = vadd.f32 0.0, %v2451
    %2453 = vmatmul.f32.gmra.mxu0 %v1715
    %v2454 = vpop.f32.mrf.mxu0
    %v2455 = vadd.f32 0.0, %v2454
    %2456 = vmatmul.f32.gmra.mxu0 %v1717
    %v2457 = vpop.f32.mrf.mxu0
    %v2458 = vadd.f32 0.0, %v2457
    %2459 = vmatmul.f32.gmra.mxu0 %v1719
    %v2460 = vpop.f32.mrf.mxu0
    %v2461 = vadd.f32 0.0, %v2460
    %2462 = vdwg.mxu0
    %2463 = vmatpush.msra.mxu0 %v2255
    %2464 = vmatpush.msra.mxu0 %v2247
    %2465 = vmatpush.msra.mxu0 %v2239
    %2466 = vmatpush.msra.mxu0 %v2231
    %2467 = vmatpush.msra.mxu0 %v2223
    %2468 = vmatpush.msra.mxu0 %v2215
    %2469 = vmatpush.msra.mxu0 %v2207
    %2470 = vmatpush.msra.mxu0 %v2199
    %2471 = vmatpush.msra.mxu0 %v2191
    %2472 = vmatpush.msra.mxu0 %v2183
    %2473 = vmatpush.msra.mxu0 %v2175
    %2474 = vmatpush.msra.mxu0 %v2167
    %2475 = vmatpush.msra.mxu0 %v2159
    %2476 = vmatpush.msra.mxu0 %v2151
    %2477 = vmatpush.msra.mxu0 %v2143
    %2478 = vmatpush.msra.mxu0 %v2135
    %2479 = vmatmul.f32.gmra.mxu0 %v1714
    %v2480 = vpop.f32.mrf.mxu0
    %v2481 = vadd.f32 %v2452, %v2480
    %2482 = vmatmul.f32.gmra.mxu0 %v1716
    %v2483 = vpop.f32.mrf.mxu0
    %v2484 = vadd.f32 %v2455, %v2483
    %2485 = vmatmul.f32.gmra.mxu0 %v1718
    %v2486 = vpop.f32.mrf.mxu0
    %v2487 = vadd.f32 %v2458, %v2486
    %2488 = vmatmul.f32.gmra.mxu0 %v1720
    %v2489 = vpop.f32.mrf.mxu0
    %v2490 = vadd.f32 %v2461, %v2489
    %2491 = vdwg.mxu0
    %2492 = vmatpush.msra.mxu0 %v2128
    %2493 = vmatpush.msra.mxu0 %v2120
    %2494 = vmatpush.msra.mxu0 %v2112
    %2495 = vmatpush.msra.mxu0 %v2104
    %2496 = vmatpush.msra.mxu0 %v2096
    %2497 = vmatpush.msra.mxu0 %v2088
    %2498 = vmatpush.msra.mxu0 %v2080
    %2499 = vmatpush.msra.mxu0 %v2072
    %2500 = vmatpush.msra.mxu0 %v2064
    %2501 = vmatpush.msra.mxu0 %v2056
    %2502 = vmatpush.msra.mxu0 %v2048
    %2503 = vmatpush.msra.mxu0 %v2040
    %2504 = vmatpush.msra.mxu0 %v2032
    %2505 = vmatpush.msra.mxu0 %v2024
    %2506 = vmatpush.msra.mxu0 %v2016
    %2507 = vmatpush.msra.mxu0 %v2008
    %2508 = vmatmul.f32.gmra.mxu0 %v1713
    %v2509 = vpop.f32.mrf.mxu0
    %v2510 = vadd.f32 0.0, %v2509
    %2511 = vmatmul.f32.gmra.mxu0 %v1715
    %v2512 = vpop.f32.mrf.mxu0
    %v2513 = vadd.f32 0.0, %v2512
    %2514 = vmatmul.f32.gmra.mxu0 %v1717
    %v2515 = vpop.f32.mrf.mxu0
    %v2516 = vadd.f32 0.0, %v2515
    %2517 = vmatmul.f32.gmra.mxu0 %v1719
    %v2518 = vpop.f32.mrf.mxu0
    %v2519 = vadd.f32 0.0, %v2518
    %2520 = vdwg.mxu0
    %2521 = vmatpush.msra.mxu0 %v2256
    %2522 = vmatpush.msra.mxu0 %v2248
    %2523 = vmatpush.msra.mxu0 %v2240
    %2524 = vmatpush.msra.mxu0 %v2232
    %2525 = vmatpush.msra.mxu0 %v2224
    %2526 = vmatpush.msra.mxu0 %v2216
    %2527 = vmatpush.msra.mxu0 %v2208
    %2528 = vmatpush.msra.mxu0 %v2200
    %2529 = vmatpush.msra.mxu0 %v2192
    %2530 = vmatpush.msra.mxu0 %v2184
    %2531 = vmatpush.msra.mxu0 %v2176
    %2532 = vmatpush.msra.mxu0 %v2168
    %2533 = vmatpush.msra.mxu0 %v2160
    %2534 = vmatpush.msra.mxu0 %v2152
    %2535 = vmatpush.msra.mxu0 %v2144
    %2536 = vmatpush.msra.mxu0 %v2136
    %2537 = vmatmul.f32.gmra.mxu0 %v1714
    %v2538 = vpop.f32.mrf.mxu0
    %v2539 = vadd.f32 %v2510, %v2538
    %2540 = vmatmul.f32.gmra.mxu0 %v1716
    %v2541 = vpop.f32.mrf.mxu0
    %v2542 = vadd.f32 %v2513, %v2541
    %2543 = vmatmul.f32.gmra.mxu0 %v1718
    %v2544 = vpop.f32.mrf.mxu0
    %v2545 = vadd.f32 %v2516, %v2544
    %2546 = vmatmul.f32.gmra.mxu0 %v1720
    %v2547 = vpop.f32.mrf.mxu0
    %v2548 = vadd.f32 %v2519, %v2547
    %2549 = vdwg.mxu0
    %2550 = vmatpush.msra.mxu0 %v2129
    %2551 = vmatpush.msra.mxu0 %v2121
    %2552 = vmatpush.msra.mxu0 %v2113
    %2553 = vmatpush.msra.mxu0 %v2105
    %2554 = vmatpush.msra.mxu0 %v2097
    %2555 = vmatpush.msra.mxu0 %v2089
    %2556 = vmatpush.msra.mxu0 %v2081
    %2557 = vmatpush.msra.mxu0 %v2073
    %2558 = vmatpush.msra.mxu0 %v2065
    %2559 = vmatpush.msra.mxu0 %v2057
    %2560 = vmatpush.msra.mxu0 %v2049
    %2561 = vmatpush.msra.mxu0 %v2041
    %2562 = vmatpush.msra.mxu0 %v2033
    %2563 = vmatpush.msra.mxu0 %v2025
    %2564 = vmatpush.msra.mxu0 %v2017
    %2565 = vmatpush.msra.mxu0 %v2009
    %2566 = vmatmul.f32.gmra.mxu0 %v1713
    %v2567 = vpop.f32.mrf.mxu0
    %v2568 = vadd.f32 0.0, %v2567
    %2569 = vmatmul.f32.gmra.mxu0 %v1715
    %v2570 = vpop.f32.mrf.mxu0
    %v2571 = vadd.f32 0.0, %v2570
    %2572 = vmatmul.f32.gmra.mxu0 %v1717
    %v2573 = vpop.f32.mrf.mxu0
    %v2574 = vadd.f32 0.0, %v2573
    %2575 = vmatmul.f32.gmra.mxu0 %v1719
    %v2576 = vpop.f32.mrf.mxu0
    %v2577 = vadd.f32 0.0, %v2576
    %2578 = vdwg.mxu0
    %2579 = vmatpush.msra.mxu0 %v2257
    %2580 = vmatpush.msra.mxu0 %v2249
    %2581 = vmatpush.msra.mxu0 %v2241
    %2582 = vmatpush.msra.mxu0 %v2233
    %2583 = vmatpush.msra.mxu0 %v2225
    %2584 = vmatpush.msra.mxu0 %v2217
    %2585 = vmatpush.msra.mxu0 %v2209
    %2586 = vmatpush.msra.mxu0 %v2201
    %2587 = vmatpush.msra.mxu0 %v2193
    %2588 = vmatpush.msra.mxu0 %v2185
    %2589 = vmatpush.msra.mxu0 %v2177
    %2590 = vmatpush.msra.mxu0 %v2169
    %2591 = vmatpush.msra.mxu0 %v2161
    %2592 = vmatpush.msra.mxu0 %v2153
    %2593 = vmatpush.msra.mxu0 %v2145
    %2594 = vmatpush.msra.mxu0 %v2137
    %2595 = vmatmul.f32.gmra.mxu0 %v1714
    %v2596 = vpop.f32.mrf.mxu0
    %v2597 = vadd.f32 %v2568, %v2596
    %2598 = vmatmul.f32.gmra.mxu0 %v1716
    %v2599 = vpop.f32.mrf.mxu0
    %v2600 = vadd.f32 %v2571, %v2599
    %2601 = vmatmul.f32.gmra.mxu0 %v1718
    %v2602 = vpop.f32.mrf.mxu0
    %v2603 = vadd.f32 %v2574, %v2602
    %2604 = vmatmul.f32.gmra.mxu0 %v1720
    %v2605 = vpop.f32.mrf.mxu0
    %v2606 = vadd.f32 %v2577, %v2605
    %2607 = vdwg.mxu0
    %2608 = vmatpush.msra.mxu0 %v2130
    %2609 = vmatpush.msra.mxu0 %v2122
    %2610 = vmatpush.msra.mxu0 %v2114
    %2611 = vmatpush.msra.mxu0 %v2106
    %2612 = vmatpush.msra.mxu0 %v2098
    %2613 = vmatpush.msra.mxu0 %v2090
    %2614 = vmatpush.msra.mxu0 %v2082
    %2615 = vmatpush.msra.mxu0 %v2074
    %2616 = vmatpush.msra.mxu0 %v2066
    %2617 = vmatpush.msra.mxu0 %v2058
    %2618 = vmatpush.msra.mxu0 %v2050
    %2619 = vmatpush.msra.mxu0 %v2042
    %2620 = vmatpush.msra.mxu0 %v2034
    %2621 = vmatpush.msra.mxu0 %v2026
    %2622 = vmatpush.msra.mxu0 %v2018
    %2623 = vmatpush.msra.mxu0 %v2010
    %2624 = vmatmul.f32.gmra.mxu0 %v1713
    %v2625 = vpop.f32.mrf.mxu0
    %v2626 = vadd.f32 0.0, %v2625
    %2627 = vmatmul.f32.gmra.mxu0 %v1715
    %v2628 = vpop.f32.mrf.mxu0
    %v2629 = vadd.f32 0.0, %v2628
    %2630 = vmatmul.f32.gmra.mxu0 %v1717
    %v2631 = vpop.f32.mrf.mxu0
    %v2632 = vadd.f32 0.0, %v2631
    %2633 = vmatmul.f32.gmra.mxu0 %v1719
    %v2634 = vpop.f32.mrf.mxu0
    %v2635 = vadd.f32 0.0, %v2634
    %2636 = vdwg.mxu0
    %2637 = vmatpush.msra.mxu0 %v2258
    %2638 = vmatpush.msra.mxu0 %v2250
    %2639 = vmatpush.msra.mxu0 %v2242
    %2640 = vmatpush.msra.mxu0 %v2234
    %2641 = vmatpush.msra.mxu0 %v2226
    %2642 = vmatpush.msra.mxu0 %v2218
    %2643 = vmatpush.msra.mxu0 %v2210
    %2644 = vmatpush.msra.mxu0 %v2202
    %2645 = vmatpush.msra.mxu0 %v2194
    %2646 = vmatpush.msra.mxu0 %v2186
    %2647 = vmatpush.msra.mxu0 %v2178
    %2648 = vmatpush.msra.mxu0 %v2170
    %2649 = vmatpush.msra.mxu0 %v2162
    %2650 = vmatpush.msra.mxu0 %v2154
    %2651 = vmatpush.msra.mxu0 %v2146
    %2652 = vmatpush.msra.mxu0 %v2138
    %2653 = vmatmul.f32.gmra.mxu0 %v1714
    %v2654 = vpop.f32.mrf.mxu0
    %v2655 = vadd.f32 %v2626, %v2654
    %2656 = vmatmul.f32.gmra.mxu0 %v1716
    %v2657 = vpop.f32.mrf.mxu0
    %v2658 = vadd.f32 %v2629, %v2657
    %2659 = vmatmul.f32.gmra.mxu0 %v1718
    %v2660 = vpop.f32.mrf.mxu0
    %v2661 = vadd.f32 %v2632, %v2660
    %2662 = vmatmul.f32.gmra.mxu0 %v1720
    %v2663 = vpop.f32.mrf.mxu0
    %v2664 = vadd.f32 %v2635, %v2663
    %2665 = vdwg.mxu0
    %2666 = vmatpush.msra.mxu0 %v2131
    %2667 = vmatpush.msra.mxu0 %v2123
    %2668 = vmatpush.msra.mxu0 %v2115
    %2669 = vmatpush.msra.mxu0 %v2107
    %2670 = vmatpush.msra.mxu0 %v2099
    %2671 = vmatpush.msra.mxu0 %v2091
    %2672 = vmatpush.msra.mxu0 %v2083
    %2673 = vmatpush.msra.mxu0 %v2075
    %2674 = vmatpush.msra.mxu0 %v2067
    %2675 = vmatpush.msra.mxu0 %v2059
    %2676 = vmatpush.msra.mxu0 %v2051
    %2677 = vmatpush.msra.mxu0 %v2043
    %2678 = vmatpush.msra.mxu0 %v2035
    %2679 = vmatpush.msra.mxu0 %v2027
    %2680 = vmatpush.msra.mxu0 %v2019
    %2681 = vmatpush.msra.mxu0 %v2011
    %2682 = vmatmul.f32.gmra.mxu0 %v1713
    %v2683 = vpop.f32.mrf.mxu0
    %v2684 = vadd.f32 0.0, %v2683
    %2685 = vmatmul.f32.gmra.mxu0 %v1715
    %v2686 = vpop.f32.mrf.mxu0
    %v2687 = vadd.f32 0.0, %v2686
    %2688 = vmatmul.f32.gmra.mxu0 %v1717
    %v2689 = vpop.f32.mrf.mxu0
    %v2690 = vadd.f32 0.0, %v2689
    %2691 = vmatmul.f32.gmra.mxu0 %v1719
    %v2692 = vpop.f32.mrf.mxu0
    %v2693 = vadd.f32 0.0, %v2692
    %2694 = vdwg.mxu0
    %2695 = vmatpush.msra.mxu0 %v2259
    %2696 = vmatpush.msra.mxu0 %v2251
    %2697 = vmatpush.msra.mxu0 %v2243
    %2698 = vmatpush.msra.mxu0 %v2235
    %2699 = vmatpush.msra.mxu0 %v2227
    %2700 = vmatpush.msra.mxu0 %v2219
    %2701 = vmatpush.msra.mxu0 %v2211
    %2702 = vmatpush.msra.mxu0 %v2203
    %2703 = vmatpush.msra.mxu0 %v2195
    %2704 = vmatpush.msra.mxu0 %v2187
    %2705 = vmatpush.msra.mxu0 %v2179
    %2706 = vmatpush.msra.mxu0 %v2171
    %2707 = vmatpush.msra.mxu0 %v2163
    %2708 = vmatpush.msra.mxu0 %v2155
    %2709 = vmatpush.msra.mxu0 %v2147
    %2710 = vmatpush.msra.mxu0 %v2139
    %2711 = vmatmul.f32.gmra.mxu0 %v1714
    %v2712 = vpop.f32.mrf.mxu0
    %v2713 = vadd.f32 %v2684, %v2712
    %2714 = vmatmul.f32.gmra.mxu0 %v1716
    %v2715 = vpop.f32.mrf.mxu0
    %v2716 = vadd.f32 %v2687, %v2715
    %2717 = vmatmul.f32.gmra.mxu0 %v1718
    %v2718 = vpop.f32.mrf.mxu0
    %v2719 = vadd.f32 %v2690, %v2718
    %2720 = vmatmul.f32.gmra.mxu0 %v1720
    %v2721 = vpop.f32.mrf.mxu0
    %v2722 = vadd.f32 %v2693, %v2721
    %2723 = vdwg.mxu0
    %v2724 = vld [vmem:[%s10] sm:$0xf]
    %v2726 = vperm.slane %v2724, 0
    %v2727 = vperm.slane %v2724, 1
    %v2728 = vperm.slane %v2724, 2
    %v2729 = vperm.slane %v2724, 3
    %v2734 = vadd.f32 %v2307, %v2726
    %v2735 = vadd.f32 %v2365, %v2727
    %v2736 = vadd.f32 %v2423, %v2728
    %v2737 = vadd.f32 %v2481, %v2729
    %v2738 = vadd.f32 %v2310, %v2726
    %v2739 = vadd.f32 %v2368, %v2727
    %v2740 = vadd.f32 %v2426, %v2728
    %v2741 = vadd.f32 %v2484, %v2729
    %v2742 = vadd.f32 %v2313, %v2726
    %v2743 = vadd.f32 %v2371, %v2727
    %v2744 = vadd.f32 %v2429, %v2728
    %v2745 = vadd.f32 %v2487, %v2729
    %v2746 = vadd.f32 %v2316, %v2726
    %v2747 = vadd.f32 %v2374, %v2727
    %v2748 = vadd.f32 %v2432, %v2728
    %v2749 = vadd.f32 %v2490, %v2729
    %v2751 = vsel %vm237, %v1888, 0
    %v2754 = vsel %vm237, %v1889, 0
    %v2757 = vsel %vm237, %v1890, 0
    %v2760 = vsel %vm237, %v1891, 0
    %v2763 = vsel %vm237, %v1944, 0
    %v2766 = vsel %vm237, %v1945, 0
    %v2769 = vsel %vm237, %v1946, 0
    %v2772 = vsel %vm237, %v1947, 0
    %v2775 = vsel %vm237, %v2000, 0
    %v2778 = vsel %vm237, %v2001, 0
    %v2781 = vsel %vm237, %v2002, 0
    %v2784 = vsel %vm237, %v2003, 0
    %2786 = vmatpush.msra.mxu0 0.0
    %2787 = vmatpush.msra.mxu0 0.0
    %2788 = vmatpush.msra.mxu0 0.0
    %2789 = vmatpush.msra.mxu0 0.0
    %2790 = vmatpush.msra.mxu0 0.0
    %2791 = vmatpush.msra.mxu0 0.0
    %2792 = vmatpush.msra.mxu0 0.0
    %2793 = vmatpush.msra.mxu0 0.0
    %2794 = vmatpush.msra.mxu0 0.0
    %2795 = vmatpush.msra.mxu0 0.0
    %2796 = vmatpush.msra.mxu0 0.0
    %2797 = vmatpush.msra.mxu0 0.0
    %2798 = vmatpush.msra.mxu0 %v2548
    %2799 = vmatpush.msra.mxu0 %v2545
    %2800 = vmatpush.msra.mxu0 %v2542
    %2801 = vmatpush.msra.mxu0 %v2539
    %2802 = vmatmul.f32.gmra.mxu0 %v2751
    %v2803 = vpop.f32.mrf.mxu0
    %v2804 = vadd.f32 0.0, %v2803
    %2805 = vmatmul.f32.gmra.mxu0 %v2754
    %v2806 = vpop.f32.mrf.mxu0
    %v2807 = vadd.f32 0.0, %v2806
    %2808 = vmatmul.f32.gmra.mxu0 %v2757
    %v2809 = vpop.f32.mrf.mxu0
    %v2810 = vadd.f32 0.0, %v2809
    %2811 = vmatmul.f32.gmra.mxu0 %v2760
    %v2812 = vpop.f32.mrf.mxu0
    %v2813 = vadd.f32 0.0, %v2812
    %2814 = vmatmul.f32.gmra.mxu0 %v2763
    %v2815 = vpop.f32.mrf.mxu0
    %v2816 = vadd.f32 0.0, %v2815
    %2817 = vmatmul.f32.gmra.mxu0 %v2766
    %v2818 = vpop.f32.mrf.mxu0
    %v2819 = vadd.f32 0.0, %v2818
    %2820 = vmatmul.f32.gmra.mxu0 %v2769
    %v2821 = vpop.f32.mrf.mxu0
    %v2822 = vadd.f32 0.0, %v2821
    %2823 = vmatmul.f32.gmra.mxu0 %v2772
    %v2824 = vpop.f32.mrf.mxu0
    %v2825 = vadd.f32 0.0, %v2824
    %2826 = vmatmul.f32.gmra.mxu0 %v2775
    %v2827 = vpop.f32.mrf.mxu0
    %v2828 = vadd.f32 0.0, %v2827
    %2829 = vmatmul.f32.gmra.mxu0 %v2778
    %v2830 = vpop.f32.mrf.mxu0
    %v2831 = vadd.f32 0.0, %v2830
    %2832 = vmatmul.f32.gmra.mxu0 %v2781
    %v2833 = vpop.f32.mrf.mxu0
    %v2834 = vadd.f32 0.0, %v2833
    %2835 = vmatmul.f32.gmra.mxu0 %v2784
    %v2836 = vpop.f32.mrf.mxu0
    %v2837 = vadd.f32 0.0, %v2836
    %2838 = vdwg.mxu0
    %2839 = vmatpush.msra.mxu0 0.0
    %2840 = vmatpush.msra.mxu0 0.0
    %2841 = vmatpush.msra.mxu0 0.0
    %2842 = vmatpush.msra.mxu0 0.0
    %2843 = vmatpush.msra.mxu0 0.0
    %2844 = vmatpush.msra.mxu0 0.0
    %2845 = vmatpush.msra.mxu0 0.0
    %2846 = vmatpush.msra.mxu0 0.0
    %2847 = vmatpush.msra.mxu0 0.0
    %2848 = vmatpush.msra.mxu0 0.0
    %2849 = vmatpush.msra.mxu0 0.0
    %2850 = vmatpush.msra.mxu0 0.0
    %2851 = vmatpush.msra.mxu0 %v2606
    %2852 = vmatpush.msra.mxu0 %v2603
    %2853 = vmatpush.msra.mxu0 %v2600
    %2854 = vmatpush.msra.mxu0 %v2597
    %2855 = vmatmul.f32.gmra.mxu0 %v2751
    %v2856 = vpop.f32.mrf.mxu0
    %v2857 = vadd.f32 0.0, %v2856
    %2858 = vmatmul.f32.gmra.mxu0 %v2754
    %v2859 = vpop.f32.mrf.mxu0
    %v2860 = vadd.f32 0.0, %v2859
    %2861 = vmatmul.f32.gmra.mxu0 %v2757
    %v2862 = vpop.f32.mrf.mxu0
    %v2863 = vadd.f32 0.0, %v2862
    %2864 = vmatmul.f32.gmra.mxu0 %v2760
    %v2865 = vpop.f32.mrf.mxu0
    %v2866 = vadd.f32 0.0, %v2865
    %2867 = vmatmul.f32.gmra.mxu0 %v2763
    %v2868 = vpop.f32.mrf.mxu0
    %v2869 = vadd.f32 0.0, %v2868
    %2870 = vmatmul.f32.gmra.mxu0 %v2766
    %v2871 = vpop.f32.mrf.mxu0
    %v2872 = vadd.f32 0.0, %v2871
    %2873 = vmatmul.f32.gmra.mxu0 %v2769
    %v2874 = vpop.f32.mrf.mxu0
    %v2875 = vadd.f32 0.0, %v2874
    %2876 = vmatmul.f32.gmra.mxu0 %v2772
    %v2877 = vpop.f32.mrf.mxu0
    %v2878 = vadd.f32 0.0, %v2877
    %2879 = vmatmul.f32.gmra.mxu0 %v2775
    %v2880 = vpop.f32.mrf.mxu0
    %v2881 = vadd.f32 0.0, %v2880
    %2882 = vmatmul.f32.gmra.mxu0 %v2778
    %v2883 = vpop.f32.mrf.mxu0
    %v2884 = vadd.f32 0.0, %v2883
    %2885 = vmatmul.f32.gmra.mxu0 %v2781
    %v2886 = vpop.f32.mrf.mxu0
    %v2887 = vadd.f32 0.0, %v2886
    %2888 = vmatmul.f32.gmra.mxu0 %v2784
    %v2889 = vpop.f32.mrf.mxu0
    %v2890 = vadd.f32 0.0, %v2889
    %2891 = vdwg.mxu0
    %2892 = vmatpush.msra.mxu0 0.0
    %2893 = vmatpush.msra.mxu0 0.0
    %2894 = vmatpush.msra.mxu0 0.0
    %2895 = vmatpush.msra.mxu0 0.0
    %2896 = vmatpush.msra.mxu0 0.0
    %2897 = vmatpush.msra.mxu0 0.0
    %2898 = vmatpush.msra.mxu0 0.0
    %2899 = vmatpush.msra.mxu0 0.0
    %2900 = vmatpush.msra.mxu0 0.0
    %2901 = vmatpush.msra.mxu0 0.0
    %2902 = vmatpush.msra.mxu0 0.0
    %2903 = vmatpush.msra.mxu0 0.0
    %2904 = vmatpush.msra.mxu0 %v2664
    %2905 = vmatpush.msra.mxu0 %v2661
    %2906 = vmatpush.msra.mxu0 %v2658
    %2907 = vmatpush.msra.mxu0 %v2655
    %2908 = vmatmul.f32.gmra.mxu0 %v2751
    %v2909 = vpop.f32.mrf.mxu0
    %v2910 = vadd.f32 0.0, %v2909
    %2911 = vmatmul.f32.gmra.mxu0 %v2754
    %v2912 = vpop.f32.mrf.mxu0
    %v2913 = vadd.f32 0.0, %v2912
    %2914 = vmatmul.f32.gmra.mxu0 %v2757
    %v2915 = vpop.f32.mrf.mxu0
    %v2916 = vadd.f32 0.0, %v2915
    %2917 = vmatmul.f32.gmra.mxu0 %v2760
    %v2918 = vpop.f32.mrf.mxu0
    %v2919 = vadd.f32 0.0, %v2918
    %2920 = vmatmul.f32.gmra.mxu0 %v2763
    %v2921 = vpop.f32.mrf.mxu0
    %v2922 = vadd.f32 0.0, %v2921
    %2923 = vmatmul.f32.gmra.mxu0 %v2766
    %v2924 = vpop.f32.mrf.mxu0
    %v2925 = vadd.f32 0.0, %v2924
    %2926 = vmatmul.f32.gmra.mxu0 %v2769
    %v2927 = vpop.f32.mrf.mxu0
    %v2928 = vadd.f32 0.0, %v2927
    %2929 = vmatmul.f32.gmra.mxu0 %v2772
    %v2930 = vpop.f32.mrf.mxu0
    %v2931 = vadd.f32 0.0, %v2930
    %2932 = vmatmul.f32.gmra.mxu0 %v2775
    %v2933 = vpop.f32.mrf.mxu0
    %v2934 = vadd.f32 0.0, %v2933
    %2935 = vmatmul.f32.gmra.mxu0 %v2778
    %v2936 = vpop.f32.mrf.mxu0
    %v2937 = vadd.f32 0.0, %v2936
    %2938 = vmatmul.f32.gmra.mxu0 %v2781
    %v2939 = vpop.f32.mrf.mxu0
    %v2940 = vadd.f32 0.0, %v2939
    %2941 = vmatmul.f32.gmra.mxu0 %v2784
    %v2942 = vpop.f32.mrf.mxu0
    %v2943 = vadd.f32 0.0, %v2942
    %2944 = vdwg.mxu0
    %2945 = vmatpush.msra.mxu0 0.0
    %2946 = vmatpush.msra.mxu0 0.0
    %2947 = vmatpush.msra.mxu0 0.0
    %2948 = vmatpush.msra.mxu0 0.0
    %2949 = vmatpush.msra.mxu0 0.0
    %2950 = vmatpush.msra.mxu0 0.0
    %2951 = vmatpush.msra.mxu0 0.0
    %2952 = vmatpush.msra.mxu0 0.0
    %2953 = vmatpush.msra.mxu0 0.0
    %2954 = vmatpush.msra.mxu0 0.0
    %2955 = vmatpush.msra.mxu0 0.0
    %2956 = vmatpush.msra.mxu0 0.0
    %2957 = vmatpush.msra.mxu0 %v2722
    %2958 = vmatpush.msra.mxu0 %v2719
    %2959 = vmatpush.msra.mxu0 %v2716
    %2960 = vmatpush.msra.mxu0 %v2713
    %2961 = vmatmul.f32.gmra.mxu0 %v2751
    %v2962 = vpop.f32.mrf.mxu0
    %v2963 = vadd.f32 0.0, %v2962
    %2964 = vmatmul.f32.gmra.mxu0 %v2754
    %v2965 = vpop.f32.mrf.mxu0
    %v2966 = vadd.f32 0.0, %v2965
    %2967 = vmatmul.f32.gmra.mxu0 %v2757
    %v2968 = vpop.f32.mrf.mxu0
    %v2969 = vadd.f32 0.0, %v2968
    %2970 = vmatmul.f32.gmra.mxu0 %v2760
    %v2971 = vpop.f32.mrf.mxu0
    %v2972 = vadd.f32 0.0, %v2971
    %2973 = vmatmul.f32.gmra.mxu0 %v2763
    %v2974 = vpop.f32.mrf.mxu0
    %v2975 = vadd.f32 0.0, %v2974
    %2976 = vmatmul.f32.gmra.mxu0 %v2766
    %v2977 = vpop.f32.mrf.mxu0
    %v2978 = vadd.f32 0.0, %v2977
    %2979 = vmatmul.f32.gmra.mxu0 %v2769
    %v2980 = vpop.f32.mrf.mxu0
    %v2981 = vadd.f32 0.0, %v2980
    %2982 = vmatmul.f32.gmra.mxu0 %v2772
    %v2983 = vpop.f32.mrf.mxu0
    %v2984 = vadd.f32 0.0, %v2983
    %2985 = vmatmul.f32.gmra.mxu0 %v2775
    %v2986 = vpop.f32.mrf.mxu0
    %v2987 = vadd.f32 0.0, %v2986
    %2988 = vmatmul.f32.gmra.mxu0 %v2778
    %v2989 = vpop.f32.mrf.mxu0
    %v2990 = vadd.f32 0.0, %v2989
    %2991 = vmatmul.f32.gmra.mxu0 %v2781
    %v2992 = vpop.f32.mrf.mxu0
    %v2993 = vadd.f32 0.0, %v2992
    %2994 = vmatmul.f32.gmra.mxu0 %v2784
    %v2995 = vpop.f32.mrf.mxu0
    %v2996 = vadd.f32 0.0, %v2995
    %2997 = vdwg.mxu0
    %v2998 = vmax.f32 %v2539, %v2804
    %v2999 = vmax.f32 %v2597, %v2857
    %v3000 = vmax.f32 %v2655, %v2910
    %v3001 = vmax.f32 %v2713, %v2963
    %v3002 = vmax.f32 %v2542, %v2807
    %v3003 = vmax.f32 %v2600, %v2860
    %v3004 = vmax.f32 %v2658, %v2913
    %v3005 = vmax.f32 %v2716, %v2966
    %v3006 = vmax.f32 %v2545, %v2810
    %v3007 = vmax.f32 %v2603, %v2863
    %v3008 = vmax.f32 %v2661, %v2916
    %v3009 = vmax.f32 %v2719, %v2969
    %v3010 = vmax.f32 %v2548, %v2813
    %v3011 = vmax.f32 %v2606, %v2866
    %v3012 = vmax.f32 %v2664, %v2919
    %v3013 = vmax.f32 %v2722, %v2972
    %v3014 = vmax.f32 %v2998, %v2816
    %v3015 = vmax.f32 %v2999, %v2869
    %v3016 = vmax.f32 %v3000, %v2922
    %v3017 = vmax.f32 %v3001, %v2975
    %v3018 = vmax.f32 %v3002, %v2819
    %v3019 = vmax.f32 %v3003, %v2872
    %v3020 = vmax.f32 %v3004, %v2925
    %v3021 = vmax.f32 %v3005, %v2978
    %v3022 = vmax.f32 %v3006, %v2822
    %v3023 = vmax.f32 %v3007, %v2875
    %v3024 = vmax.f32 %v3008, %v2928
    %v3025 = vmax.f32 %v3009, %v2981
    %v3026 = vmax.f32 %v3010, %v2825
    %v3027 = vmax.f32 %v3011, %v2878
    %v3028 = vmax.f32 %v3012, %v2931
    %v3029 = vmax.f32 %v3013, %v2984
    %v3030 = vmax.f32 %v3014, %v2828
    %v3031 = vmax.f32 %v3015, %v2881
    %v3032 = vmax.f32 %v3016, %v2934
    %v3033 = vmax.f32 %v3017, %v2987
    %v3034 = vmax.f32 %v3018, %v2831
    %v3035 = vmax.f32 %v3019, %v2884
    %v3036 = vmax.f32 %v3020, %v2937
    %v3037 = vmax.f32 %v3021, %v2990
    %v3038 = vmax.f32 %v3022, %v2834
    %v3039 = vmax.f32 %v3023, %v2887
    %v3040 = vmax.f32 %v3024, %v2940
    %v3041 = vmax.f32 %v3025, %v2993
    %v3042 = vmax.f32 %v3026, %v2837
    %v3043 = vmax.f32 %v3027, %v2890
    %v3044 = vmax.f32 %v3028, %v2943
    %v3045 = vmax.f32 %v3029, %v2996
    %v3046 = vadd.f32 %v3030, %v2734
    %v3047 = vadd.f32 %v3031, %v2735
    %v3048 = vadd.f32 %v3032, %v2736
    %v3049 = vadd.f32 %v3033, %v2737
    %v3050 = vadd.f32 %v3034, %v2738
    %v3051 = vadd.f32 %v3035, %v2739
    %v3052 = vadd.f32 %v3036, %v2740
    %v3053 = vadd.f32 %v3037, %v2741
    %v3054 = vadd.f32 %v3038, %v2742
    %v3055 = vadd.f32 %v3039, %v2743
    %v3056 = vadd.f32 %v3040, %v2744
    %v3057 = vadd.f32 %v3041, %v2745
    %v3058 = vadd.f32 %v3042, %v2746
    %v3059 = vadd.f32 %v3043, %v2747
    %v3060 = vadd.f32 %v3044, %v2748
    %v3061 = vadd.f32 %v3045, %v2749
    %v3062 = vmax.f32 %v3046, 0.0
    %v3063 = vmax.f32 %v3047, 0.0
    %v3064 = vmax.f32 %v3048, 0.0
    %v3065 = vmax.f32 %v3049, 0.0
    %v3066 = vmax.f32 %v3050, 0.0
    %v3067 = vmax.f32 %v3051, 0.0
    %v3068 = vmax.f32 %v3052, 0.0
    %v3069 = vmax.f32 %v3053, 0.0
    %v3070 = vmax.f32 %v3054, 0.0
    %v3071 = vmax.f32 %v3055, 0.0
    %v3072 = vmax.f32 %v3056, 0.0
    %v3073 = vmax.f32 %v3057, 0.0
    %v3074 = vmax.f32 %v3058, 0.0
    %v3075 = vmax.f32 %v3059, 0.0
    %v3076 = vmax.f32 %v3060, 0.0
    %v3077 = vmax.f32 %v3061, 0.0
    %v3078 = vld [vmem:[%s2] sm:$0x3]
    %v3080 = vsel %vm237, %v3078, 0
    %3082 = vmatpush.msra.mxu0 0.0
    %3083 = vmatpush.msra.mxu0 0.0
    %3084 = vmatpush.msra.mxu0 0.0
    %3085 = vmatpush.msra.mxu0 0.0
    %3086 = vmatpush.msra.mxu0 0.0
    %3087 = vmatpush.msra.mxu0 0.0
    %3088 = vmatpush.msra.mxu0 0.0
    %3089 = vmatpush.msra.mxu0 0.0
    %3090 = vmatpush.msra.mxu0 0.0
    %3091 = vmatpush.msra.mxu0 0.0
    %3092 = vmatpush.msra.mxu0 0.0
    %3093 = vmatpush.msra.mxu0 0.0
    %3094 = vmatpush.msra.mxu0 %v3074
    %3095 = vmatpush.msra.mxu0 %v3070
    %3096 = vmatpush.msra.mxu0 %v3066
    %3097 = vmatpush.msra.mxu0 %v3062
    %3098 = vmatmul.f32.gmra.mxu0 %v3080
    %v3099 = vpop.f32.mrf.mxu0
    %v3100 = vadd.f32 0.0, %v3099
    %3101 = vdwg.mxu0
    %3102 = vmatpush.msra.mxu0 0.0
    %3103 = vmatpush.msra.mxu0 0.0
    %3104 = vmatpush.msra.mxu0 0.0
    %3105 = vmatpush.msra.mxu0 0.0
    %3106 = vmatpush.msra.mxu0 0.0
    %3107 = vmatpush.msra.mxu0 0.0
    %3108 = vmatpush.msra.mxu0 0.0
    %3109 = vmatpush.msra.mxu0 0.0
    %3110 = vmatpush.msra.mxu0 0.0
    %3111 = vmatpush.msra.mxu0 0.0
    %3112 = vmatpush.msra.mxu0 0.0
    %3113 = vmatpush.msra.mxu0 0.0
    %3114 = vmatpush.msra.mxu0 %v3075
    %3115 = vmatpush.msra.mxu0 %v3071
    %3116 = vmatpush.msra.mxu0 %v3067
    %3117 = vmatpush.msra.mxu0 %v3063
    %3118 = vmatmul.f32.gmra.mxu0 %v3080
    %v3119 = vpop.f32.mrf.mxu0
    %v3120 = vadd.f32 0.0, %v3119
    %3121 = vdwg.mxu0
    %3122 = vmatpush.msra.mxu0 0.0
    %3123 = vmatpush.msra.mxu0 0.0
    %3124 = vmatpush.msra.mxu0 0.0
    %3125 = vmatpush.msra.mxu0 0.0
    %3126 = vmatpush.msra.mxu0 0.0
    %3127 = vmatpush.msra.mxu0 0.0
    %3128 = vmatpush.msra.mxu0 0.0
    %3129 = vmatpush.msra.mxu0 0.0
    %3130 = vmatpush.msra.mxu0 0.0
    %3131 = vmatpush.msra.mxu0 0.0
    %3132 = vmatpush.msra.mxu0 0.0
    %3133 = vmatpush.msra.mxu0 0.0
    %3134 = vmatpush.msra.mxu0 %v3076
    %3135 = vmatpush.msra.mxu0 %v3072
    %3136 = vmatpush.msra.mxu0 %v3068
    %3137 = vmatpush.msra.mxu0 %v3064
    %3138 = vmatmul.f32.gmra.mxu0 %v3080
    %v3139 = vpop.f32.mrf.mxu0
    %v3140 = vadd.f32 0.0, %v3139
    %3141 = vdwg.mxu0
    %3142 = vmatpush.msra.mxu0 0.0
    %3143 = vmatpush.msra.mxu0 0.0
    %3144 = vmatpush.msra.mxu0 0.0
    %3145 = vmatpush.msra.mxu0 0.0
    %3146 = vmatpush.msra.mxu0 0.0
    %3147 = vmatpush.msra.mxu0 0.0
    %3148 = vmatpush.msra.mxu0 0.0
    %3149 = vmatpush.msra.mxu0 0.0
    %3150 = vmatpush.msra.mxu0 0.0
    %3151 = vmatpush.msra.mxu0 0.0
    %3152 = vmatpush.msra.mxu0 0.0
    %3153 = vmatpush.msra.mxu0 0.0
    %3154 = vmatpush.msra.mxu0 %v3077
    %3155 = vmatpush.msra.mxu0 %v3073
    %3156 = vmatpush.msra.mxu0 %v3069
    %3157 = vmatpush.msra.mxu0 %v3065
    %3158 = vmatmul.f32.gmra.mxu0 %v3080
    %v3159 = vpop.f32.mrf.mxu0
    %v3160 = vadd.f32 0.0, %v3159
    %3161 = vdwg.mxu0
    %v3162 = vld [vmem:[#allocation6] sm:$0xff]
    %v3163 = vld [vmem:[#allocation6 + $0x8] sm:$0xff]
    %v3164 = vld [vmem:[#allocation6 + $0x10] sm:$0xff]
    %v3165 = vld [vmem:[#allocation6 + $0x18] sm:$0xff]
    %v3166 = vld [vmem:[#allocation6 + $0x20] sm:$0xff]
    %v3167 = vld [vmem:[#allocation6 + $0x28] sm:$0xff]
    %v3168 = vld [vmem:[#allocation6 + $0x30] sm:$0xff]
    %v3169 = vld [vmem:[#allocation6 + $0x38] sm:$0xff]
    %v3170 = vld [vmem:[#allocation6 + $0x40] sm:$0xff]
    %v3171 = vld [vmem:[#allocation6 + $0x48] sm:$0xff]
    %v3172 = vld [vmem:[#allocation6 + $0x50] sm:$0xff]
    %v3173 = vld [vmem:[#allocation6 + $0x58] sm:$0xff]
    %v3174 = vld [vmem:[#allocation6 + $0x60] sm:$0xff]
    %v3175 = vld [vmem:[#allocation6 + $0x68] sm:$0xff]
    %v3176 = vld [vmem:[#allocation6 + $0x70] sm:$0xff]
    %v3177 = vld [vmem:[#allocation6 + $0x78] sm:$0xff]
    %v3178 = vld [vmem:[#allocation6 + $0x80] sm:$0xff]
    %v3179 = vld [vmem:[#allocation6 + $0x88] sm:$0xff]
    %v3180 = vld [vmem:[#allocation6 + $0x90] sm:$0xff]
    %v3181 = vld [vmem:[#allocation6 + $0x98] sm:$0xff]
    %v3182 = vld [vmem:[#allocation6 + $0xa0] sm:$0xff]
    %v3183 = vld [vmem:[#allocation6 + $0xa8] sm:$0xff]
    %v3184 = vld [vmem:[#allocation6 + $0xb0] sm:$0xff]
    %v3185 = vld [vmem:[#allocation6 + $0xb8] sm:$0xff]
    %v3186 = vld [vmem:[#allocation6 + $0xc0] sm:$0xff]
    %v3187 = vld [vmem:[#allocation6 + $0xc8] sm:$0xff]
    %v3188 = vld [vmem:[#allocation6 + $0xd0] sm:$0xff]
    %v3189 = vld [vmem:[#allocation6 + $0xd8] sm:$0xff]
    %v3190 = vld [vmem:[#allocation6 + $0xe0] sm:$0xff]
    %v3191 = vld [vmem:[#allocation6 + $0xe8] sm:$0xff]
    %v3192 = vld [vmem:[#allocation6 + $0xf0] sm:$0xff]
    %v3193 = vld [vmem:[#allocation6 + $0xf8] sm:$0xff]
    %v3194 = vld [vmem:[#allocation6 + $0x100] sm:$0xff]
    %v3195 = vld [vmem:[#allocation6 + $0x108] sm:$0xff]
    %v3196 = vld [vmem:[#allocation6 + $0x110] sm:$0xff]
    %v3197 = vld [vmem:[#allocation6 + $0x118] sm:$0xff]
    %v3198 = vld [vmem:[#allocation6 + $0x120] sm:$0xff]
    %v3199 = vld [vmem:[#allocation6 + $0x128] sm:$0xff]
    %v3200 = vld [vmem:[#allocation6 + $0x130] sm:$0xff]
    %v3201 = vld [vmem:[#allocation6 + $0x138] sm:$0xff]
    %v3202 = vld [vmem:[#allocation6 + $0x140] sm:$0xff]
    %v3203 = vld [vmem:[#allocation6 + $0x148] sm:$0xff]
    %v3204 = vld [vmem:[#allocation6 + $0x150] sm:$0xff]
    %v3205 = vld [vmem:[#allocation6 + $0x158] sm:$0xff]
    %v3206 = vld [vmem:[#allocation6 + $0x160] sm:$0xff]
    %v3207 = vld [vmem:[#allocation6 + $0x168] sm:$0xff]
    %v3208 = vld [vmem:[#allocation6 + $0x170] sm:$0xff]
    %v3209 = vld [vmem:[#allocation6 + $0x178] sm:$0xff]
    %v3210 = vld [vmem:[#allocation6 + $0x180] sm:$0xff]
    %v3211 = vld [vmem:[#allocation6 + $0x188] sm:$0xff]
    %v3212 = vld [vmem:[#allocation6 + $0x190] sm:$0xff]
    %v3213 = vld [vmem:[#allocation6 + $0x198] sm:$0xff]
    %v3214 = vld [vmem:[#allocation6 + $0x1a0] sm:$0xff]
    %v3215 = vld [vmem:[#allocation6 + $0x1a8] sm:$0xff]
    %v3216 = vld [vmem:[#allocation6 + $0x1b0] sm:$0xff]
    %v3217 = vld [vmem:[#allocation6 + $0x1b8] sm:$0xff]
    %v3218 = vld [vmem:[#allocation6 + $0x1c0] sm:$0xff]
    %v3219 = vld [vmem:[#allocation6 + $0x1c8] sm:$0xff]
    %v3220 = vld [vmem:[#allocation6 + $0x1d0] sm:$0xff]
    %v3221 = vld [vmem:[#allocation6 + $0x1d8] sm:$0xff]
    %v3222 = vld [vmem:[#allocation6 + $0x1e0] sm:$0xff]
    %v3223 = vld [vmem:[#allocation6 + $0x1e8] sm:$0xff]
    %v3224 = vld [vmem:[#allocation6 + $0x1f0] sm:$0xff]
    %v3225 = vld [vmem:[#allocation6 + $0x1f8] sm:$0xff]
    %v3226 = vld [vmem:[#allocation6 + $0x200] sm:$0xff]
    %v3227 = vld [vmem:[#allocation6 + $0x208] sm:$0xff]
    %v3228 = vld [vmem:[#allocation6 + $0x210] sm:$0xff]
    %v3229 = vld [vmem:[#allocation6 + $0x218] sm:$0xff]
    %v3230 = vld [vmem:[#allocation6 + $0x220] sm:$0xff]
    %v3231 = vld [vmem:[#allocation6 + $0x228] sm:$0xff]
    %v3232 = vld [vmem:[#allocation6 + $0x230] sm:$0xff]
    %v3233 = vld [vmem:[#allocation6 + $0x238] sm:$0xff]
    %v3234 = vld [vmem:[#allocation6 + $0x240] sm:$0xff]
    %v3235 = vld [vmem:[#allocation6 + $0x248] sm:$0xff]
    %v3236 = vld [vmem:[#allocation6 + $0x250] sm:$0xff]
    %v3237 = vld [vmem:[#allocation6 + $0x258] sm:$0xff]
    %v3238 = vld [vmem:[#allocation6 + $0x260] sm:$0xff]
    %v3239 = vld [vmem:[#allocation6 + $0x268] sm:$0xff]
    %v3240 = vld [vmem:[#allocation6 + $0x270] sm:$0xff]
    %v3241 = vld [vmem:[#allocation6 + $0x278] sm:$0xff]
    %v3242 = vld [vmem:[#allocation6 + $0x280] sm:$0xff]
    %v3243 = vld [vmem:[#allocation6 + $0x288] sm:$0xff]
    %v3244 = vld [vmem:[#allocation6 + $0x290] sm:$0xff]
    %v3245 = vld [vmem:[#allocation6 + $0x298] sm:$0xff]
    %v3246 = vld [vmem:[#allocation6 + $0x2a0] sm:$0xff]
    %v3247 = vld [vmem:[#allocation6 + $0x2a8] sm:$0xff]
    %v3248 = vld [vmem:[#allocation6 + $0x2b0] sm:$0xff]
    %v3249 = vld [vmem:[#allocation6 + $0x2b8] sm:$0xff]
    %v3250 = vld [vmem:[#allocation6 + $0x2c0] sm:$0xff]
    %v3251 = vld [vmem:[#allocation6 + $0x2c8] sm:$0xff]
    %v3252 = vld [vmem:[#allocation6 + $0x2d0] sm:$0xff]
    %v3253 = vld [vmem:[#allocation6 + $0x2d8] sm:$0xff]
    %v3254 = vld [vmem:[#allocation6 + $0x2e0] sm:$0xff]
    %v3255 = vld [vmem:[#allocation6 + $0x2e8] sm:$0xff]
    %v3256 = vld [vmem:[#allocation6 + $0x2f0] sm:$0xff]
    %v3257 = vld [vmem:[#allocation6 + $0x2f8] sm:$0xff]
    %v3258 = vld [vmem:[#allocation6 + $0x300] sm:$0xff]
    %v3259 = vld [vmem:[#allocation6 + $0x308] sm:$0xff]
    %v3260 = vld [vmem:[#allocation6 + $0x310] sm:$0xff]
    %v3261 = vld [vmem:[#allocation6 + $0x318] sm:$0xff]
    %v3262 = vld [vmem:[#allocation6 + $0x320] sm:$0xff]
    %v3263 = vld [vmem:[#allocation6 + $0x328] sm:$0xff]
    %v3264 = vld [vmem:[#allocation6 + $0x330] sm:$0xff]
    %v3265 = vld [vmem:[#allocation6 + $0x338] sm:$0xff]
    %v3266 = vld [vmem:[#allocation6 + $0x340] sm:$0xff]
    %v3267 = vld [vmem:[#allocation6 + $0x348] sm:$0xff]
    %v3268 = vld [vmem:[#allocation6 + $0x350] sm:$0xff]
    %v3269 = vld [vmem:[#allocation6 + $0x358] sm:$0xff]
    %v3270 = vld [vmem:[#allocation6 + $0x360] sm:$0xff]
    %v3271 = vld [vmem:[#allocation6 + $0x368] sm:$0xff]
    %v3272 = vld [vmem:[#allocation6 + $0x370] sm:$0xff]
    %v3273 = vld [vmem:[#allocation6 + $0x378] sm:$0xff]
    %v3274 = vld [vmem:[#allocation6 + $0x380] sm:$0xff]
    %v3275 = vld [vmem:[#allocation6 + $0x388] sm:$0xff]
    %v3276 = vld [vmem:[#allocation6 + $0x390] sm:$0xff]
    %v3277 = vld [vmem:[#allocation6 + $0x398] sm:$0xff]
    %v3278 = vld [vmem:[#allocation6 + $0x3a0] sm:$0xff]
    %v3279 = vld [vmem:[#allocation6 + $0x3a8] sm:$0xff]
    %v3280 = vld [vmem:[#allocation6 + $0x3b0] sm:$0xff]
    %v3281 = vld [vmem:[#allocation6 + $0x3b8] sm:$0xff]
    %v3282 = vld [vmem:[#allocation6 + $0x3c0] sm:$0xff]
    %v3283 = vld [vmem:[#allocation6 + $0x3c8] sm:$0xff]
    %v3284 = vld [vmem:[#allocation6 + $0x3d0] sm:$0xff]
    %v3285 = vld [vmem:[#allocation6 + $0x3d8] sm:$0xff]
    %v3286 = vld [vmem:[#allocation6 + $0x3e0] sm:$0xff]
    %v3287 = vld [vmem:[#allocation6 + $0x3e8] sm:$0xff]
    %v3288 = vld [vmem:[#allocation6 + $0x3f0] sm:$0xff]
    %v3289 = vld [vmem:[#allocation6 + $0x3f8] sm:$0xff]
    %v3290 = vld [vmem:[%s12] sm:$0x3]
    %v3292 = vperm.slane %v3290, 0
    %v3293 = vperm.slane %v3290, 1
    %3296 = vmatpush.msra.mxu0 %v3192
    %3297 = vmatpush.msra.mxu0 %v3190
    %3298 = vmatpush.msra.mxu0 %v3188
    %3299 = vmatpush.msra.mxu0 %v3186
    %3300 = vmatpush.msra.mxu0 %v3184
    %3301 = vmatpush.msra.mxu0 %v3182
    %3302 = vmatpush.msra.mxu0 %v3180
    %3303 = vmatpush.msra.mxu0 %v3178
    %3304 = vmatpush.msra.mxu0 %v3176
    %3305 = vmatpush.msra.mxu0 %v3174
    %3306 = vmatpush.msra.mxu0 %v3172
    %3307 = vmatpush.msra.mxu0 %v3170
    %3308 = vmatpush.msra.mxu0 %v3168
    %3309 = vmatpush.msra.mxu0 %v3166
    %3310 = vmatpush.msra.mxu0 %v3164
    %3311 = vmatpush.msra.mxu0 %v3162
    %3312 = vmatmul.f32.gmra.mxu0 %v3100
    %v3313 = vpop.f32.mrf.mxu0
    %v3314 = vadd.f32 %v3292, %v3313
    %3315 = vdwg.mxu0
    %3316 = vmatpush.msra.mxu0 %v3224
    %3317 = vmatpush.msra.mxu0 %v3222
    %3318 = vmatpush.msra.mxu0 %v3220
    %3319 = vmatpush.msra.mxu0 %v3218
    %3320 = vmatpush.msra.mxu0 %v3216
    %3321 = vmatpush.msra.mxu0 %v3214
    %3322 = vmatpush.msra.mxu0 %v3212
    %3323 = vmatpush.msra.mxu0 %v3210
    %3324 = vmatpush.msra.mxu0 %v3208
    %3325 = vmatpush.msra.mxu0 %v3206
    %3326 = vmatpush.msra.mxu0 %v3204
    %3327 = vmatpush.msra.mxu0 %v3202
    %3328 = vmatpush.msra.mxu0 %v3200
    %3329 = vmatpush.msra.mxu0 %v3198
    %3330 = vmatpush.msra.mxu0 %v3196
    %3331 = vmatpush.msra.mxu0 %v3194
    %3332 = vmatmul.f32.gmra.mxu0 %v3120
    %v3333 = vpop.f32.mrf.mxu0
    %v3334 = vadd.f32 %v3314, %v3333
    %3335 = vdwg.mxu0
    %3336 = vmatpush.msra.mxu0 %v3256
    %3337 = vmatpush.msra.mxu0 %v3254
    %3338 = vmatpush.msra.mxu0 %v3252
    %3339 = vmatpush.msra.mxu0 %v3250
    %3340 = vmatpush.msra.mxu0 %v3248
    %3341 = vmatpush.msra.mxu0 %v3246
    %3342 = vmatpush.msra.mxu0 %v3244
    %3343 = vmatpush.msra.mxu0 %v3242
    %3344 = vmatpush.msra.mxu0 %v3240
    %3345 = vmatpush.msra.mxu0 %v3238
    %3346 = vmatpush.msra.mxu0 %v3236
    %3347 = vmatpush.msra.mxu0 %v3234
    %3348 = vmatpush.msra.mxu0 %v3232
    %3349 = vmatpush.msra.mxu0 %v3230
    %3350 = vmatpush.msra.mxu0 %v3228
    %3351 = vmatpush.msra.mxu0 %v3226
    %3352 = vmatmul.f32.gmra.mxu0 %v3140
    %v3353 = vpop.f32.mrf.mxu0
    %v3354 = vadd.f32 %v3334, %v3353
    %3355 = vdwg.mxu0
    %3356 = vmatpush.msra.mxu0 %v3288
    %3357 = vmatpush.msra.mxu0 %v3286
    %3358 = vmatpush.msra.mxu0 %v3284
    %3359 = vmatpush.msra.mxu0 %v3282
    %3360 = vmatpush.msra.mxu0 %v3280
    %3361 = vmatpush.msra.mxu0 %v3278
    %3362 = vmatpush.msra.mxu0 %v3276
    %3363 = vmatpush.msra.mxu0 %v3274
    %3364 = vmatpush.msra.mxu0 %v3272
    %3365 = vmatpush.msra.mxu0 %v3270
    %3366 = vmatpush.msra.mxu0 %v3268
    %3367 = vmatpush.msra.mxu0 %v3266
    %3368 = vmatpush.msra.mxu0 %v3264
    %3369 = vmatpush.msra.mxu0 %v3262
    %3370 = vmatpush.msra.mxu0 %v3260
    %3371 = vmatpush.msra.mxu0 %v3258
    %3372 = vmatmul.f32.gmra.mxu0 %v3160
    %v3373 = vpop.f32.mrf.mxu0
    %v3374 = vadd.f32 %v3354, %v3373
    %3375 = vdwg.mxu0
    %3376 = vmatpush.msra.mxu0 %v3193
    %3377 = vmatpush.msra.mxu0 %v3191
    %3378 = vmatpush.msra.mxu0 %v3189
    %3379 = vmatpush.msra.mxu0 %v3187
    %3380 = vmatpush.msra.mxu0 %v3185
    %3381 = vmatpush.msra.mxu0 %v3183
    %3382 = vmatpush.msra.mxu0 %v3181
    %3383 = vmatpush.msra.mxu0 %v3179
    %3384 = vmatpush.msra.mxu0 %v3177
    %3385 = vmatpush.msra.mxu0 %v3175
    %3386 = vmatpush.msra.mxu0 %v3173
    %3387 = vmatpush.msra.mxu0 %v3171
    %3388 = vmatpush.msra.mxu0 %v3169
    %3389 = vmatpush.msra.mxu0 %v3167
    %3390 = vmatpush.msra.mxu0 %v3165
    %3391 = vmatpush.msra.mxu0 %v3163
    %3392 = vmatmul.f32.gmra.mxu0 %v3100
    %v3393 = vpop.f32.mrf.mxu0
    %v3394 = vadd.f32 %v3293, %v3393
    %3395 = vdwg.mxu0
    %3396 = vmatpush.msra.mxu0 %v3225
    %3397 = vmatpush.msra.mxu0 %v3223
    %3398 = vmatpush.msra.mxu0 %v3221
    %3399 = vmatpush.msra.mxu0 %v3219
    %3400 = vmatpush.msra.mxu0 %v3217
    %3401 = vmatpush.msra.mxu0 %v3215
    %3402 = vmatpush.msra.mxu0 %v3213
    %3403 = vmatpush.msra.mxu0 %v3211
    %3404 = vmatpush.msra.mxu0 %v3209
    %3405 = vmatpush.msra.mxu0 %v3207
    %3406 = vmatpush.msra.mxu0 %v3205
    %3407 = vmatpush.msra.mxu0 %v3203
    %3408 = vmatpush.msra.mxu0 %v3201
    %3409 = vmatpush.msra.mxu0 %v3199
    %3410 = vmatpush.msra.mxu0 %v3197
    %3411 = vmatpush.msra.mxu0 %v3195
    %3412 = vmatmul.f32.gmra.mxu0 %v3120
    %v3413 = vpop.f32.mrf.mxu0
    %v3414 = vadd.f32 %v3394, %v3413
    %3415 = vdwg.mxu0
    %3416 = vmatpush.msra.mxu0 %v3257
    %3417 = vmatpush.msra.mxu0 %v3255
    %3418 = vmatpush.msra.mxu0 %v3253
    %3419 = vmatpush.msra.mxu0 %v3251
    %3420 = vmatpush.msra.mxu0 %v3249
    %3421 = vmatpush.msra.mxu0 %v3247
    %3422 = vmatpush.msra.mxu0 %v3245
    %3423 = vmatpush.msra.mxu0 %v3243
    %3424 = vmatpush.msra.mxu0 %v3241
    %3425 = vmatpush.msra.mxu0 %v3239
    %3426 = vmatpush.msra.mxu0 %v3237
    %3427 = vmatpush.msra.mxu0 %v3235
    %3428 = vmatpush.msra.mxu0 %v3233
    %3429 = vmatpush.msra.mxu0 %v3231
    %3430 = vmatpush.msra.mxu0 %v3229
    %3431 = vmatpush.msra.mxu0 %v3227
    %3432 = vmatmul.f32.gmra.mxu0 %v3140
    %v3433 = vpop.f32.mrf.mxu0
    %v3434 = vadd.f32 %v3414, %v3433
    %3435 = vdwg.mxu0
    %3436 = vmatpush.msra.mxu0 %v3289
    %3437 = vmatpush.msra.mxu0 %v3287
    %3438 = vmatpush.msra.mxu0 %v3285
    %3439 = vmatpush.msra.mxu0 %v3283
    %3440 = vmatpush.msra.mxu0 %v3281
    %3441 = vmatpush.msra.mxu0 %v3279
    %3442 = vmatpush.msra.mxu0 %v3277
    %3443 = vmatpush.msra.mxu0 %v3275
    %3444 = vmatpush.msra.mxu0 %v3273
    %3445 = vmatpush.msra.mxu0 %v3271
    %3446 = vmatpush.msra.mxu0 %v3269
    %3447 = vmatpush.msra.mxu0 %v3267
    %3448 = vmatpush.msra.mxu0 %v3265
    %3449 = vmatpush.msra.mxu0 %v3263
    %3450 = vmatpush.msra.mxu0 %v3261
    %3451 = vmatpush.msra.mxu0 %v3259
    %3452 = vmatmul.f32.gmra.mxu0 %v3160
    %v3453 = vpop.f32.mrf.mxu0
    %v3454 = vadd.f32 %v3434, %v3453
    %3455 = vdwg.mxu0
    %v3456 = vmax.f32 %v3374, 0.0
    %v3457 = vmax.f32 %v3454, 0.0
    %v3458 = vld [vmem:[#allocation7] sm:$0xff]
    %v3459 = vld [vmem:[#allocation7 + $0x8] sm:$0xff]
    %v3460 = vld [vmem:[#allocation7 + $0x10] sm:$0xff]
    %v3461 = vld [vmem:[#allocation7 + $0x18] sm:$0xff]
    %v3462 = vld [vmem:[#allocation7 + $0x20] sm:$0xff]
    %v3463 = vld [vmem:[#allocation7 + $0x28] sm:$0xff]
    %v3464 = vld [vmem:[#allocation7 + $0x30] sm:$0xff]
    %v3465 = vld [vmem:[#allocation7 + $0x38] sm:$0xff]
    %v3466 = vld [vmem:[#allocation7 + $0x40] sm:$0xff]
    %v3467 = vld [vmem:[#allocation7 + $0x48] sm:$0xff]
    %v3468 = vld [vmem:[#allocation7 + $0x50] sm:$0xff]
    %v3469 = vld [vmem:[#allocation7 + $0x58] sm:$0xff]
    %v3470 = vld [vmem:[#allocation7 + $0x60] sm:$0xff]
    %v3471 = vld [vmem:[#allocation7 + $0x68] sm:$0xff]
    %v3472 = vld [vmem:[#allocation7 + $0x70] sm:$0xff]
    %v3473 = vld [vmem:[#allocation7 + $0x78] sm:$0xff]
    %v3474 = vld [vmem:[#allocation7 + $0x80] sm:$0xff]
    %v3475 = vld [vmem:[#allocation7 + $0x88] sm:$0xff]
    %v3476 = vld [vmem:[#allocation7 + $0x90] sm:$0xff]
    %v3477 = vld [vmem:[#allocation7 + $0x98] sm:$0xff]
    %v3478 = vld [vmem:[#allocation7 + $0xa0] sm:$0xff]
    %v3479 = vld [vmem:[#allocation7 + $0xa8] sm:$0xff]
    %v3480 = vld [vmem:[#allocation7 + $0xb0] sm:$0xff]
    %v3481 = vld [vmem:[#allocation7 + $0xb8] sm:$0xff]
    %v3482 = vld [vmem:[#allocation7 + $0xc0] sm:$0xff]
    %v3483 = vld [vmem:[#allocation7 + $0xc8] sm:$0xff]
    %v3484 = vld [vmem:[#allocation7 + $0xd0] sm:$0xff]
    %v3485 = vld [vmem:[#allocation7 + $0xd8] sm:$0xff]
    %v3486 = vld [vmem:[#allocation7 + $0xe0] sm:$0xff]
    %v3487 = vld [vmem:[#allocation7 + $0xe8] sm:$0xff]
    %v3488 = vld [vmem:[#allocation7 + $0xf0] sm:$0xff]
    %v3489 = vld [vmem:[#allocation7 + $0xf8] sm:$0xff]
    %v3490 = vld [vmem:[%s14] sm:$0x1]
    %v3492 = vperm.slane %v3490, 0
    %3494 = vmatpush.msra.mxu0 %v3473
    %3495 = vmatpush.msra.mxu0 %v3472
    %3496 = vmatpush.msra.mxu0 %v3471
    %3497 = vmatpush.msra.mxu0 %v3470
    %3498 = vmatpush.msra.mxu0 %v3469
    %3499 = vmatpush.msra.mxu0 %v3468
    %3500 = vmatpush.msra.mxu0 %v3467
    %3501 = vmatpush.msra.mxu0 %v3466
    %3502 = vmatpush.msra.mxu0 %v3465
    %3503 = vmatpush.msra.mxu0 %v3464
    %3504 = vmatpush.msra.mxu0 %v3463
    %3505 = vmatpush.msra.mxu0 %v3462
    %3506 = vmatpush.msra.mxu0 %v3461
    %3507 = vmatpush.msra.mxu0 %v3460
    %3508 = vmatpush.msra.mxu0 %v3459
    %3509 = vmatpush.msra.mxu0 %v3458
    %3510 = vmatmul.f32.gmra.mxu0 %v3456
    %v3511 = vpop.f32.mrf.mxu0
    %v3512 = vadd.f32 %v3492, %v3511
    %3513 = vdwg.mxu0
    %3514 = vmatpush.msra.mxu0 %v3489
    %3515 = vmatpush.msra.mxu0 %v3488
    %3516 = vmatpush.msra.mxu0 %v3487
    %3517 = vmatpush.msra.mxu0 %v3486
    %3518 = vmatpush.msra.mxu0 %v3485
    %3519 = vmatpush.msra.mxu0 %v3484
    %3520 = vmatpush.msra.mxu0 %v3483
    %3521 = vmatpush.msra.mxu0 %v3482
    %3522 = vmatpush.msra.mxu0 %v3481
    %3523 = vmatpush.msra.mxu0 %v3480
    %3524 = vmatpush.msra.mxu0 %v3479
    %3525 = vmatpush.msra.mxu0 %v3478
    %3526 = vmatpush.msra.mxu0 %v3477
    %3527 = vmatpush.msra.mxu0 %v3476
    %3528 = vmatpush.msra.mxu0 %v3475
    %3529 = vmatpush.msra.mxu0 %v3474
    %3530 = vmatmul.f32.gmra.mxu0 %v3457
    %v3531 = vpop.f32.mrf.mxu0
    %v3532 = vadd.f32 %v3512, %v3531
    %3533 = vdwg.mxu0
    %v3534 = vmax.f32 %v3532, 0.0
    %v3535 = vld [vmem:[%s15] sm:$0xff]
    %v3536 = vld [vmem:[%s15 + $0x8] sm:$0xff]
    %v3537 = vld [vmem:[%s15 + $0x10] sm:$0xff]
    %v3538 = vld [vmem:[%s15 + $0x18] sm:$0xff]
    %v3539 = vld [vmem:[%s15 + $0x20] sm:$0xff]
    %v3540 = vld [vmem:[%s15 + $0x28] sm:$0xff]
    %v3541 = vld [vmem:[%s15 + $0x30] sm:$0xff]
    %v3542 = vld [vmem:[%s15 + $0x38] sm:$0xff]
    %v3543 = vld [vmem:[%s15 + $0x40] sm:$0xff]
    %v3544 = vld [vmem:[%s15 + $0x48] sm:$0xff]
    %v3545 = vld [vmem:[%s15 + $0x50] sm:$0xff]
    %v3546 = vld [vmem:[%s15 + $0x58] sm:$0xff]
    %v3547 = vld [vmem:[%s15 + $0x60] sm:$0xff]
    %v3548 = vld [vmem:[%s15 + $0x68] sm:$0xff]
    %v3549 = vld [vmem:[%s15 + $0x70] sm:$0xff]
    %v3550 = vld [vmem:[%s15 + $0x78] sm:$0xff]
    %v3551 = vld [vmem:[%s16] sm:$0x1]
    %v3553 = vperm.slane %v3551, 0
    %3555 = vmatpush.msra.mxu0 %v3550
    %3556 = vmatpush.msra.mxu0 %v3549
    %3557 = vmatpush.msra.mxu0 %v3548
    %3558 = vmatpush.msra.mxu0 %v3547
    %3559 = vmatpush.msra.mxu0 %v3546
    %3560 = vmatpush.msra.mxu0 %v3545
    %3561 = vmatpush.msra.mxu0 %v3544
    %3562 = vmatpush.msra.mxu0 %v3543
    %3563 = vmatpush.msra.mxu0 %v3542
    %3564 = vmatpush.msra.mxu0 %v3541
    %3565 = vmatpush.msra.mxu0 %v3540
    %3566 = vmatpush.msra.mxu0 %v3539
    %3567 = vmatpush.msra.mxu0 %v3538
    %3568 = vmatpush.msra.mxu0 %v3537
    %3569 = vmatpush.msra.mxu0 %v3536
    %3570 = vmatpush.msra.mxu0 %v3535
    %3571 = vmatmul.f32.gmra.mxu0 %v3534
    %v3572 = vpop.f32.mrf.mxu0
    %v3573 = vadd.f32 %v3553, %v3572
    %3574 = vdwg.mxu0
    %vm3575 = vcmask 386048
    %3576 = vst.msk [vmem:[%s17] sm:$0x3] %vm3575, %v3573
    // Predicated region
    $region86: #{dgcnn_forward.1} parent=1 // pred_check
      _
    $region87: #{dgcnn_forward.1} parent=1 // pred_check_branch
      %3578 = sbr.rel (0) target = $region89
    $region88: #{dgcnn_forward.1} parent=1 // pred_region
      _
    $region89: #{dgcnn_forward.1} parent=1 // pred_fallthru
      _
    // Predicated region
    $region90: #{dgcnn_forward.1} parent=1 // pred_check
      _
    $region91: #{dgcnn_forward.1} parent=1 // pred_check_branch
      %3580 = sbr.rel (0) target = $region93
    $region92: #{dgcnn_forward.1} parent=1 // pred_region
      _
    $region93: #{dgcnn_forward.1} parent=1 // pred_fallthru
      _
    %3581 = vsyncpa [#allocation3], 1
    %3582 = vsyncpa [#allocation5], 1
    %3583 = vsyncpa [#allocation8], 1

</llo_original>
